<compile_context>
chip_gen: v7x
topology: tpu7x:2x2x1
jax: 0.10.0
libtpu: 0.0.40
codegen_flags: <defaults>
</compile_context>

<pallas_src>
import functools

import jax
import jax.numpy as jnp
from jax import lax
from jax.experimental import pallas as pl
from jax.experimental.pallas import tpu as pltpu

CONV_CHANNELS = 32
CONV_KERNEL = 3
DATA_CHANNELS = 1
LATENT_SIZE = 25
SEQ_LEN = 100
BN_EPS = 1e-5


def _encoder_kernel(xt_ref, p_ref, w2_ref, wl_ref, bl_ref, out_ref,
                    *, N, L, NL, NLp, LAT, OUT_PAD):
    """Whole encoder forward, single invocation, fully VMEM-resident.

    xt_ref : (3, NLp)      input taps (x[l-1], x[l], x[l+1]) on the merged,
                           zero-padded batch*length lane axis
    p_ref  : (C, 16)       packed params: [w1_k0,w1_k1,w1_k2,b1,g1,be1,b2,g2,be2,0...]
    w2_ref : (C, 3*C)      conv2 weights, [o, k*C + i] = torch_w2[o, i, k]
    wl_ref : (L, LAT)      Linear weight, transposed (wl.T)
    bl_ref : (1, LAT)      Linear bias
    out_ref: (C, OUT_PAD)  out[c, n*LAT + j] in the first N*LAT lanes, zero pad
    """
    f32 = jnp.float32
    C = p_ref.shape[0]
    inv_count = f32(1.0 / NL)                       # true element count = N * L

    # ---- in-kernel lane masks (no mask DMAs) --------------------------------
    lane = lax.broadcasted_iota(jnp.int32, (1, NLp), 1)
    valid_b = lane < NL
    nl_ok = valid_b                                  # l-1 tap valid (l != 0)
    nr_ok = valid_b                                  # l+1 tap valid (l != L-1)
    for n in range(N):                               # N is small & static here
        nl_ok = nl_ok & (lane != n * L)
        nr_ok = nr_ok & (lane != n * L + (L - 1))
    valid = valid_b.astype(f32)
    lmask = nl_ok.astype(f32)
    rmask = nr_ok.astype(f32)

    # ---- unpack the single packed parameter tile -----------------------------
    w1m, w1c, w1p = p_ref[:, 0:1], p_ref[:, 1:2], p_ref[:, 2:3]
    b1, g1, be1 = p_ref[:, 3:4], p_ref[:, 4:5], p_ref[:, 5:6]
    b2, g2, be2 = p_ref[:, 6:7], p_ref[:, 7:8], p_ref[:, 8:9]

    # ---- Conv1 (C_in = 1) on the VPU: three broadcast FMAs, full f32 ---------
    xm = xt_ref[0:1, :]                              # x[l-1] (already edge-zeroed)
    x0 = xt_ref[1:2, :]
    xp = xt_ref[2:3, :]
    h1 = w1m * xm + w1c * x0 + w1p * xp + b1         # (C, NLp)
    h1 = jnp.maximum(h1, 0.0) * valid                # pad lanes -> 0

    # ---- BatchNorm (training-mode batch stats, biased var, two-pass) --------
    def batch_norm(h, g, be):                        # h has pad lanes zeroed
        mean = jnp.sum(h, axis=1, keepdims=True) * inv_count        # (C, 1)
        cen = (h - mean) * valid                     # keep pads out of the var
        var = jnp.sum(cen * cen, axis=1, keepdims=True) * inv_count
        scale = g * lax.rsqrt(var + BN_EPS)
        return h * scale + (be - mean * scale)

    y1 = batch_norm(h1, g1, be1)                     # (C, NLp)

    # ---- Conv2: ONE fused (C, 3C) @ (3C, NLp) matmul -------------------------
    # Shifted taps via XLU rolls; sequence-edge / pad columns zeroed by masks.
    tap_m = pltpu.roll(y1, shift=1, axis=1) * lmask          # y1[:, l-1]
    tap_p = pltpu.roll(y1, shift=NLp - 1, axis=1) * rmask    # y1[:, l+1]
    band = jnp.concatenate([tap_m, y1, tap_p], axis=0)       # (3C, NLp)

    h2 = jnp.dot(w2_ref[...], band,
                 preferred_element_type=jnp.float32,
                 precision=lax.Precision.HIGHEST) + b2
    h2 = jnp.maximum(h2, 0.0) * valid
    y2 = batch_norm(h2, g2, be2)                     # (C, NLp)

    # ---- Linear over length: per-sequence (C, L) @ (L, LAT) ------------------
    wl = wl_ref[...]
    bl = bl_ref[...]
    outs = []
    for n in range(N):                               # static, small batch
        y2n = y2[:, n * L:(n + 1) * L]               # (C, L)
        outs.append(jnp.dot(y2n, wl,
                            preferred_element_type=jnp.float32,
                            precision=lax.Precision.HIGHEST) + bl)
    if OUT_PAD > N * LAT:                            # lane-dense output write
        outs.append(jnp.zeros((C, OUT_PAD - N * LAT), f32))
    out_ref[...] = jnp.concatenate(outs, axis=1)


def encoder_forward(x, params):
    """x: (N, 1, SEQ_LEN) float32; returns (N, CONV_CHANNELS, LATENT_SIZE)."""
    w1, b1, g1, be1, w2, b2, g2, be2, wl, bl = params
    N, Cin, L = x.shape
    assert Cin == DATA_CHANNELS and L == SEQ_LEN
    C, K, LAT = CONV_CHANNELS, CONV_KERNEL, LATENT_SIZE
    NL = N * L
    NLp = ((NL + 127) // 128) * 128                  # lane-padded merged axis
    OUT_PAD = max(128, ((N * LAT + 127) // 128) * 128)
    f32 = jnp.float32

    # ---- layout plumbing in plain JAX (cheap, one-time) ----------------------
    x2 = x[:, 0, :].astype(f32)                                       # (N, L)
    x_m = jnp.pad(x2[:, :L - 1], ((0, 0), (1, 0)))                    # x[l-1]
    x_p = jnp.pad(x2[:, 1:], ((0, 0), (0, 1)))                        # x[l+1]
    xtaps = jnp.stack([x_m, x2, x_p], axis=0).reshape(K, NL)
    xtaps = jnp.pad(xtaps, ((0, 0), (0, NLp - NL)))                   # (K, NLp)

    w1_mat = w1[:, 0, :].astype(f32)                                  # (C, 3)
    colv = lambda v: v.astype(f32).reshape(C, 1)
    pvec = jnp.concatenate(
        [w1_mat, colv(b1), colv(g1), colv(be1), colv(b2), colv(g2), colv(be2),
         jnp.zeros((C, 16 - (K + 6)), f32)], axis=1)                  # (C, 16)
    w2_cat = jnp.transpose(w2, (0, 2, 1)).reshape(C, K * C).astype(f32)
    wl_T = wl.T.astype(f32)                                           # (L, LAT)
    bl_row = bl.astype(f32).reshape(1, LAT)

    flops = 2 * C * K * NL + 2 * C * (K * C) * NL + 2 * N * C * L * LAT
    bytes_accessed = 4 * (xtaps.size + pvec.size + w2_cat.size
                          + wl_T.size + bl_row.size + C * OUT_PAD)

    vmem = pl.BlockSpec(memory_space=pltpu.MemorySpace.VMEM)
    kernel = pl.pallas_call(
        functools.partial(_encoder_kernel,
                          N=N, L=L, NL=NL, NLp=NLp, LAT=LAT, OUT_PAD=OUT_PAD),
        out_shape=jax.ShapeDtypeStruct((C, OUT_PAD), f32),
        in_specs=[vmem] * 5,
        out_specs=vmem,
        compiler_params=pltpu.CompilerParams(vmem_limit_bytes=32 * 1024 * 1024),
        cost_estimate=pl.CostEstimate(flops=flops, transcendentals=2 * C,
                                      bytes_accessed=bytes_accessed),
    )
    out = kernel(xtaps, pvec, w2_cat, wl_T, bl_row)                   # (C, OUT_PAD)
    out = out[:, :N * LAT]
    # (C, N*LAT) -> (N, C, LAT)
    return jnp.transpose(out.reshape(C, N, LAT), (1, 0, 2))


# ---------------- pure-JAX reference (for correctness check) -----------------
def ref_forward(x, params):
    w1, b1, g1, be1, w2, b2, g2, be2, wl, bl = params

    def conv1d(h, w, b):
        out = lax.conv_general_dilated(
            h, w, window_strides=(1,), padding=[(1, 1)],
            dimension_numbers=("NCH", "OIH", "NCH"),
            precision=lax.Precision.HIGHEST)
        return out + b[None, :, None]

    def bn(h, g, be):
        mean = jnp.mean(h, axis=(0, 2), keepdims=True)
        var = jnp.mean((h - mean) ** 2, axis=(0, 2), keepdims=True)
        return (h - mean) * lax.rsqrt(var + BN_EPS) * g[None, :, None] + be[None, :, None]

    h = bn(jnp.maximum(conv1d(x, w1, b1), 0.0), g1, be1)
    h = bn(jnp.maximum(conv1d(h, w2, b2), 0.0), g2, be2)
    return jnp.einsum("ncl,jl->ncj", h, wl,
                      precision=lax.Precision.HIGHEST) + bl[None, None, :]


def init_params(key):
    ks = jax.random.split(key, 8)
    u = lambda k, shp, bound: jax.random.uniform(k, shp, jnp.float32, -bound, bound)
    w1 = u(ks[0], (CONV_CHANNELS, DATA_CHANNELS, CONV_KERNEL), (DATA_CHANNELS * CONV_KERNEL) ** -0.5)
    b1 = u(ks[1], (CONV_CHANNELS,), (DATA_CHANNELS * CONV_KERNEL) ** -0.5)
    w2 = u(ks[2], (CONV_CHANNELS, CONV_CHANNELS, CONV_KERNEL), (CONV_CHANNELS * CONV_KERNEL) ** -0.5)
    b2 = u(ks[3], (CONV_CHANNELS,), (CONV_CHANNELS * CONV_KERNEL) ** -0.5)
    wl = u(ks[4], (LATENT_SIZE, SEQ_LEN), SEQ_LEN ** -0.5)
    bl = u(ks[5], (LATENT_SIZE,), SEQ_LEN ** -0.5)
    # BatchNorm affine params (PyTorch default is ones/zeros; randomized here
    # deterministically to exercise the scale/shift path).
    g1 = 1.0 + 0.1 * jax.random.normal(ks[6], (CONV_CHANNELS,), jnp.float32)
    be1 = 0.1 * jax.random.normal(ks[7], (CONV_CHANNELS,), jnp.float32)
    g2 = jnp.ones((CONV_CHANNELS,), jnp.float32)
    be2 = jnp.zeros((CONV_CHANNELS,), jnp.float32)
    return (w1, b1, g1, be1, w2, b2, g2, be2, wl, bl)


if __name__ == "__main__":
    key = jax.random.PRNGKey(0)
    pkey, xkey = jax.random.split(key)
    params = init_params(pkey)

    N = 2
    x = jax.random.normal(xkey, (N, DATA_CHANNELS, SEQ_LEN), jnp.float32)

    out = jax.block_until_ready(jax.jit(encoder_forward)(x, params))
    ref = jax.block_until_ready(ref_forward(x, params))

    assert out.shape == (N, CONV_CHANNELS, LATENT_SIZE), out.shape
    # Conv1 runs in full f32 on the VPU; conv2 / Linear matmuls use
    # Precision.HIGHEST, so agreement with the f32 reference is ~1e-6.
    assert jnp.allclose(out, ref, rtol=2e-4, atol=2e-4), (
        float(jnp.max(jnp.abs(out - ref))))
    print("KERNEL_OK")
</pallas_src>

<mosaic_0001>
module attributes {stable_mosaic.version = 11 : i64} {
  func.func @_encoder_kernel(%arg0: memref<3x256xf32, #tpu.memory_space<vmem>>, %arg1: memref<32x16xf32, #tpu.memory_space<vmem>>, %arg2: memref<32x96xf32, #tpu.memory_space<vmem>>, %arg3: memref<100x25xf32, #tpu.memory_space<vmem>>, %arg4: memref<1x25xf32, #tpu.memory_space<vmem>>, %arg5: memref<32x128xf32, #tpu.memory_space<vmem>>) attributes {dimension_semantics = [], scalar_prefetch = 0 : i64, scratch_operands = 0 : i64, tpu.core_type = #tpu.core_type<tc>} {
    %0 = tpu.iota {dimensions = array<i32: 1>} : vector<1x256xi32>
    %c200_i32 = arith.constant 200 : i32
    %1 = vector.broadcast %c200_i32 : i32 to vector<1x256xi32>
    %2 = arith.cmpi slt, %0, %1 : vector<1x256xi32>
    %c0_i32 = arith.constant 0 : i32
    %3 = vector.broadcast %c0_i32 : i32 to vector<1x256xi32>
    %4 = arith.cmpi ne, %0, %3 : vector<1x256xi32>
    %5 = arith.andi %2, %4 : vector<1x256xi1>
    %c99_i32 = arith.constant 99 : i32
    %6 = vector.broadcast %c99_i32 : i32 to vector<1x256xi32>
    %7 = arith.cmpi ne, %0, %6 : vector<1x256xi32>
    %8 = arith.andi %2, %7 : vector<1x256xi1>
    %c100_i32 = arith.constant 100 : i32
    %9 = vector.broadcast %c100_i32 : i32 to vector<1x256xi32>
    %10 = arith.cmpi ne, %0, %9 : vector<1x256xi32>
    %11 = arith.andi %5, %10 : vector<1x256xi1>
    %c199_i32 = arith.constant 199 : i32
    %12 = vector.broadcast %c199_i32 : i32 to vector<1x256xi32>
    %13 = arith.cmpi ne, %0, %12 : vector<1x256xi32>
    %14 = arith.andi %8, %13 : vector<1x256xi1>
    %15 = arith.extui %2 : vector<1x256xi1> to vector<1x256xi32>
    %16 = arith.sitofp %15 : vector<1x256xi32> to vector<1x256xf32>
    %17 = arith.extui %11 : vector<1x256xi1> to vector<1x256xi32>
    %18 = arith.sitofp %17 : vector<1x256xi32> to vector<1x256xf32>
    %19 = arith.extui %14 : vector<1x256xi1> to vector<1x256xi32>
    %20 = arith.sitofp %19 : vector<1x256xi32> to vector<1x256xf32>
    %c0 = arith.constant 0 : index
    %c0_0 = arith.constant 0 : index
    %21 = vector.load %arg1[%c0, %c0_0] : memref<32x16xf32, #tpu.memory_space<vmem>>, vector<32x1xf32>
    %c0_1 = arith.constant 0 : index
    %c1 = arith.constant 1 : index
    %22 = vector.load %arg1[%c0_1, %c1] : memref<32x16xf32, #tpu.memory_space<vmem>>, vector<32x1xf32>
    %c0_2 = arith.constant 0 : index
    %c2 = arith.constant 2 : index
    %23 = vector.load %arg1[%c0_2, %c2] : memref<32x16xf32, #tpu.memory_space<vmem>>, vector<32x1xf32>
    %c0_3 = arith.constant 0 : index
    %c3 = arith.constant 3 : index
    %24 = vector.load %arg1[%c0_3, %c3] : memref<32x16xf32, #tpu.memory_space<vmem>>, vector<32x1xf32>
    %c0_4 = arith.constant 0 : index
    %c4 = arith.constant 4 : index
    %25 = vector.load %arg1[%c0_4, %c4] : memref<32x16xf32, #tpu.memory_space<vmem>>, vector<32x1xf32>
    %c0_5 = arith.constant 0 : index
    %c5 = arith.constant 5 : index
    %26 = vector.load %arg1[%c0_5, %c5] : memref<32x16xf32, #tpu.memory_space<vmem>>, vector<32x1xf32>
    %c0_6 = arith.constant 0 : index
    %c6 = arith.constant 6 : index
    %27 = vector.load %arg1[%c0_6, %c6] : memref<32x16xf32, #tpu.memory_space<vmem>>, vector<32x1xf32>
    %c0_7 = arith.constant 0 : index
    %c7 = arith.constant 7 : index
    %28 = vector.load %arg1[%c0_7, %c7] : memref<32x16xf32, #tpu.memory_space<vmem>>, vector<32x1xf32>
    %c0_8 = arith.constant 0 : index
    %c8 = arith.constant 8 : index
    %29 = vector.load %arg1[%c0_8, %c8] : memref<32x16xf32, #tpu.memory_space<vmem>>, vector<32x1xf32>
    %c0_9 = arith.constant 0 : index
    %c0_10 = arith.constant 0 : index
    %30 = vector.load %arg0[%c0_9, %c0_10] : memref<3x256xf32, #tpu.memory_space<vmem>>, vector<1x256xf32>
    %c1_11 = arith.constant 1 : index
    %c0_12 = arith.constant 0 : index
    %31 = vector.load %arg0[%c1_11, %c0_12] : memref<3x256xf32, #tpu.memory_space<vmem>>, vector<1x256xf32>
    %c2_13 = arith.constant 2 : index
    %c0_14 = arith.constant 0 : index
    %32 = vector.load %arg0[%c2_13, %c0_14] : memref<3x256xf32, #tpu.memory_space<vmem>>, vector<1x256xf32>
    %33 = vector.broadcast %21 : vector<32x1xf32> to vector<32x256xf32>
    %34 = vector.broadcast %30 : vector<1x256xf32> to vector<32x256xf32>
    %35 = arith.mulf %33, %34 : vector<32x256xf32>
    %36 = vector.broadcast %22 : vector<32x1xf32> to vector<32x256xf32>
    %37 = vector.broadcast %31 : vector<1x256xf32> to vector<32x256xf32>
    %38 = arith.mulf %36, %37 : vector<32x256xf32>
    %39 = arith.addf %35, %38 : vector<32x256xf32>
    %40 = vector.broadcast %23 : vector<32x1xf32> to vector<32x256xf32>
    %41 = vector.broadcast %32 : vector<1x256xf32> to vector<32x256xf32>
    %42 = arith.mulf %40, %41 : vector<32x256xf32>
    %43 = arith.addf %39, %42 : vector<32x256xf32>
    %44 = vector.broadcast %24 : vector<32x1xf32> to vector<32x256xf32>
    %45 = arith.addf %43, %44 : vector<32x256xf32>
    %cst = arith.constant 0.000000e+00 : f32
    %46 = vector.broadcast %cst : f32 to vector<32x256xf32>
    %47 = arith.maximumf %45, %46 : vector<32x256xf32>
    %48 = vector.broadcast %16 : vector<1x256xf32> to vector<32x256xf32>
    %49 = arith.mulf %47, %48 : vector<32x256xf32>
    %cst_15 = arith.constant dense<0.000000e+00> : vector<32xf32>
    %50 = vector.multi_reduction <add>, %49, %cst_15 [1] : vector<32x256xf32> to vector<32xf32>
    %51 = vector.shape_cast %50 : vector<32xf32> to vector<32x1xf32>
    %cst_16 = arith.constant 5.000000e-03 : f32
    %52 = vector.broadcast %cst_16 : f32 to vector<32x1xf32>
    %53 = arith.mulf %51, %52 : vector<32x1xf32>
    %54 = vector.broadcast %53 : vector<32x1xf32> to vector<32x256xf32>
    %55 = arith.subf %49, %54 : vector<32x256xf32>
    %56 = vector.broadcast %16 : vector<1x256xf32> to vector<32x256xf32>
    %57 = arith.mulf %55, %56 : vector<32x256xf32>
    %58 = arith.mulf %57, %57 : vector<32x256xf32>
    %cst_17 = arith.constant dense<0.000000e+00> : vector<32xf32>
    %59 = vector.multi_reduction <add>, %58, %cst_17 [1] : vector<32x256xf32> to vector<32xf32>
    %60 = vector.shape_cast %59 : vector<32xf32> to vector<32x1xf32>
    %cst_18 = arith.constant 5.000000e-03 : f32
    %61 = vector.broadcast %cst_18 : f32 to vector<32x1xf32>
    %62 = arith.mulf %60, %61 : vector<32x1xf32>
    %cst_19 = arith.constant 9.99999974E-6 : f32
    %63 = vector.broadcast %cst_19 : f32 to vector<32x1xf32>
    %64 = arith.addf %62, %63 : vector<32x1xf32>
    %65 = math.rsqrt %64 : vector<32x1xf32>
    %66 = arith.mulf %25, %65 : vector<32x1xf32>
    %67 = vector.broadcast %66 : vector<32x1xf32> to vector<32x256xf32>
    %68 = arith.mulf %49, %67 : vector<32x256xf32>
    %69 = arith.mulf %53, %66 : vector<32x1xf32>
    %70 = arith.subf %26, %69 : vector<32x1xf32>
    %71 = vector.broadcast %70 : vector<32x1xf32> to vector<32x256xf32>
    %72 = arith.addf %68, %71 : vector<32x256xf32>
    %c1_i32 = arith.constant 1 : i32
    %73 = tpu.dynamic_rotate %72 by %c1_i32 dim 1 : vector<32x256xf32>, i32 -> vector<32x256xf32>
    %74 = vector.broadcast %18 : vector<1x256xf32> to vector<32x256xf32>
    %75 = arith.mulf %73, %74 : vector<32x256xf32>
    %c255_i32 = arith.constant 255 : i32
    %76 = tpu.dynamic_rotate %72 by %c255_i32 dim 1 : vector<32x256xf32>, i32 -> vector<32x256xf32>
    %77 = vector.broadcast %20 : vector<1x256xf32> to vector<32x256xf32>
    %78 = arith.mulf %76, %77 : vector<32x256xf32>
    %79 = tpu.concatenate %75, %72, %78 in 0 : vector<32x256xf32>, vector<32x256xf32>, vector<32x256xf32> -> vector<96x256xf32>
    %c0_20 = arith.constant 0 : index
    %c0_21 = arith.constant 0 : index
    %80 = vector.load %arg2[%c0_20, %c0_21] : memref<32x96xf32, #tpu.memory_space<vmem>>, vector<32x96xf32>
    %cst_22 = arith.constant dense<0.000000e+00> : vector<32x256xf32>
    %81 = tpu.matmul %80, %79, %cst_22 {dimension_numbers = #tpu.dot_dimension_numbers<[1], [0], [0], [1], [0, 0, 1, 1], [], []>, precision = #tpu.contract_precision<fp32>} : vector<32x96xf32>, vector<96x256xf32>, vector<32x256xf32> -> vector<32x256xf32>
    %82 = vector.broadcast %27 : vector<32x1xf32> to vector<32x256xf32>
    %83 = arith.addf %81, %82 : vector<32x256xf32>
    %cst_23 = arith.constant 0.000000e+00 : f32
    %84 = vector.broadcast %cst_23 : f32 to vector<32x256xf32>
    %85 = arith.maximumf %83, %84 : vector<32x256xf32>
    %86 = vector.broadcast %16 : vector<1x256xf32> to vector<32x256xf32>
    %87 = arith.mulf %85, %86 : vector<32x256xf32>
    %cst_24 = arith.constant dense<0.000000e+00> : vector<32xf32>
    %88 = vector.multi_reduction <add>, %87, %cst_24 [1] : vector<32x256xf32> to vector<32xf32>
    %89 = vector.shape_cast %88 : vector<32xf32> to vector<32x1xf32>
    %cst_25 = arith.constant 5.000000e-03 : f32
    %90 = vector.broadcast %cst_25 : f32 to vector<32x1xf32>
    %91 = arith.mulf %89, %90 : vector<32x1xf32>
    %92 = vector.broadcast %91 : vector<32x1xf32> to vector<32x256xf32>
    %93 = arith.subf %87, %92 : vector<32x256xf32>
    %94 = vector.broadcast %16 : vector<1x256xf32> to vector<32x256xf32>
    %95 = arith.mulf %93, %94 : vector<32x256xf32>
    %96 = arith.mulf %95, %95 : vector<32x256xf32>
    %cst_26 = arith.constant dense<0.000000e+00> : vector<32xf32>
    %97 = vector.multi_reduction <add>, %96, %cst_26 [1] : vector<32x256xf32> to vector<32xf32>
    %98 = vector.shape_cast %97 : vector<32xf32> to vector<32x1xf32>
    %cst_27 = arith.constant 5.000000e-03 : f32
    %99 = vector.broadcast %cst_27 : f32 to vector<32x1xf32>
    %100 = arith.mulf %98, %99 : vector<32x1xf32>
    %cst_28 = arith.constant 9.99999974E-6 : f32
    %101 = vector.broadcast %cst_28 : f32 to vector<32x1xf32>
    %102 = arith.addf %100, %101 : vector<32x1xf32>
    %103 = math.rsqrt %102 : vector<32x1xf32>
    %104 = arith.mulf %28, %103 : vector<32x1xf32>
    %105 = vector.broadcast %104 : vector<32x1xf32> to vector<32x256xf32>
    %106 = arith.mulf %87, %105 : vector<32x256xf32>
    %107 = arith.mulf %91, %104 : vector<32x1xf32>
    %108 = arith.subf %29, %107 : vector<32x1xf32>
    %109 = vector.broadcast %108 : vector<32x1xf32> to vector<32x256xf32>
    %110 = arith.addf %106, %109 : vector<32x256xf32>
    %c0_29 = arith.constant 0 : index
    %c0_30 = arith.constant 0 : index
    %111 = vector.load %arg3[%c0_29, %c0_30] : memref<100x25xf32, #tpu.memory_space<vmem>>, vector<100x25xf32>
    %c0_31 = arith.constant 0 : index
    %c0_32 = arith.constant 0 : index
    %112 = vector.load %arg4[%c0_31, %c0_32] : memref<1x25xf32, #tpu.memory_space<vmem>>, vector<1x25xf32>
    %113 = vector.extract_strided_slice %110 {offsets = [0, 0], sizes = [32, 100], strides = [1, 1]} : vector<32x256xf32> to vector<32x100xf32>
    %cst_33 = arith.constant dense<0.000000e+00> : vector<32x25xf32>
    %114 = tpu.matmul %113, %111, %cst_33 {dimension_numbers = #tpu.dot_dimension_numbers<[1], [0], [0], [1], [0, 0, 1, 1], [], []>, precision = #tpu.contract_precision<fp32>} : vector<32x100xf32>, vector<100x25xf32>, vector<32x25xf32> -> vector<32x25xf32>
    %115 = vector.broadcast %112 : vector<1x25xf32> to vector<32x25xf32>
    %116 = arith.addf %114, %115 : vector<32x25xf32>
    %117 = vector.extract_strided_slice %110 {offsets = [0, 100], sizes = [32, 100], strides = [1, 1]} : vector<32x256xf32> to vector<32x100xf32>
    %cst_34 = arith.constant dense<0.000000e+00> : vector<32x25xf32>
    %118 = tpu.matmul %117, %111, %cst_34 {dimension_numbers = #tpu.dot_dimension_numbers<[1], [0], [0], [1], [0, 0, 1, 1], [], []>, precision = #tpu.contract_precision<fp32>} : vector<32x100xf32>, vector<100x25xf32>, vector<32x25xf32> -> vector<32x25xf32>
    %119 = vector.broadcast %112 : vector<1x25xf32> to vector<32x25xf32>
    %120 = arith.addf %118, %119 : vector<32x25xf32>
    %cst_35 = arith.constant 0.000000e+00 : f32
    %121 = vector.broadcast %cst_35 : f32 to vector<32x78xf32>
    %122 = tpu.concatenate %116, %120, %121 in 1 : vector<32x25xf32>, vector<32x25xf32>, vector<32x78xf32> -> vector<32x128xf32>
    %c0_36 = arith.constant 0 : index
    %c0_37 = arith.constant 0 : index
    %123 = vector.load %arg5[%c0_36, %c0_37] : memref<32x128xf32, #tpu.memory_space<vmem>>, vector<32x128xf32>
    tpu.vector_store %arg5[%c0_36, %c0_37], %122 {strides = array<i32>} : memref<32x128xf32, #tpu.memory_space<vmem>>, vector<32x128xf32>,
    return
  }
}

</mosaic_0001>

<llo_original>
// kernel: encoder_forward.1
$region0: #{encoder_forward.1}
  #allocation0 [shape = 'u32[]', space=smem, size = 0x4, offset = 0x4, fixed_abs, tag = 'smem constant byte address 0x4 - core index']
  #allocation1 [shape = 'u32[144,128]{1,0:T(1,128)}', space=vmem, size = 0x12000, scoped, tag = 'internal scratch']
  %s0 = inlined_call_operand.vmem [shape: f32[3,256], index: 0, kind: input, shape index: {}]
  %s1 = inlined_call_operand.vmem [shape: f32[32,16], index: 1, kind: input, shape index: {}]
  %s2 = inlined_call_operand.vmem [shape: f32[32,96], index: 2, kind: input, shape index: {}]
  %s3 = inlined_call_operand.vmem [shape: f32[100,25], index: 3, kind: input, shape index: {}]
  %s4 = inlined_call_operand.vmem [shape: f32[1,25], index: 4, kind: input, shape index: {}]
  %s5 = inlined_call_operand.vmem [shape: f32[32,128], index: 5, kind: output, shape index: {}]
  %s6 = sld [smem:[#allocation0]]
  $region30: #{encoder_forward.1} parent=0
    _
  %s8 = ssub.s32 1, %s6
  %s9 = scalar_select 0, %s8, %s6
  // Predicated region
  $region2: #{encoder_forward.1} parent=0 // pred_check
    _
  $region3: #{encoder_forward.1} parent=0 // pred_check_branch
    %11 = sbr.rel (0) target = $region5
  $region4: #{encoder_forward.1} parent=0 // pred_region
    _
  $region5: #{encoder_forward.1} parent=0 // pred_fallthru
    _
  // Predicated region
  $region6: #{encoder_forward.1} parent=0 // pred_check
    _
  $region7: #{encoder_forward.1} parent=0 // pred_check_branch
    %13 = sbr.rel (0) target = $region9
  $region8: #{encoder_forward.1} parent=0 // pred_region
    _
  $region9: #{encoder_forward.1} parent=0 // pred_fallthru
    _
  // Predicated region
  $region10: #{encoder_forward.1} parent=0 // pred_check
    _
  $region11: #{encoder_forward.1} parent=0 // pred_check_branch
    %15 = sbr.rel (0) target = $region13
  $region12: #{encoder_forward.1} parent=0 // pred_region
    _
  $region13: #{encoder_forward.1} parent=0 // pred_fallthru
    _
  // Predicated region
  $region14: #{encoder_forward.1} parent=0 // pred_check
    _
  $region15: #{encoder_forward.1} parent=0 // pred_check_branch
    %17 = sbr.rel (0) target = $region17
  $region16: #{encoder_forward.1} parent=0 // pred_region
    _
  $region17: #{encoder_forward.1} parent=0 // pred_fallthru
    _
  // Predicated region
  $region18: #{encoder_forward.1} parent=0 // pred_check
    _
  $region19: #{encoder_forward.1} parent=0 // pred_check_branch
    %19 = sbr.rel (0) target = $region21
  $region20: #{encoder_forward.1} parent=0 // pred_region
    _
  $region21: #{encoder_forward.1} parent=0 // pred_fallthru
    _
  %v20 = vlaneseq
  %v21 = vand.u32 %v20, 127
  %v22 = vadd.s32 %v21, 128
  %vm23 = vcmp.lt.s32.totalorder %v21, 200
  %vm24 = vcmp.lt.s32.totalorder %v22, 200
  %vm25 = vcmp.ne.s32.totalorder %v21, 0
  %vm26 = vcmp.ne.s32.totalorder %v22, 0
  %vm27 = vmand %vm23, %vm25
  %vm28 = vmand %vm24, %vm26
  %vm29 = vcmp.ne.s32.totalorder %v21, 99
  %vm30 = vcmp.ne.s32.totalorder %v22, 99
  %vm31 = vmand %vm23, %vm29
  %vm32 = vmand %vm24, %vm30
  %vm33 = vcmp.ne.s32.totalorder %v21, 100
  %vm34 = vcmp.ne.s32.totalorder %v22, 100
  %vm35 = vmand %vm27, %vm33
  %vm36 = vmand %vm28, %vm34
  %vm37 = vcmp.ne.s32.totalorder %v21, 199
  %vm38 = vcmp.ne.s32.totalorder %v22, 199
  %vm39 = vmand %vm31, %vm37
  %vm40 = vmand %vm32, %vm38
  %v41 = vsel %vm23, 1, 0
  %v42 = vsel %vm24, 1, 0
  %v43 = vcvt.s32.f32 %v41
  %v44 = vcvt.s32.f32 %v42
  %v45 = vsel %vm35, 1, 0
  %v46 = vsel %vm36, 1, 0
  %v47 = vcvt.s32.f32 %v45
  %v48 = vcvt.s32.f32 %v46
  %v49 = vsel %vm39, 1, 0
  %v50 = vsel %vm40, 1, 0
  %v51 = vcvt.s32.f32 %v49
  %v52 = vcvt.s32.f32 %v50
  %v53 = vld [vmem:[%s1] sm:$0xff]
  %v54 = vld [vmem:[%s1 + $0x8] sm:$0xff]
  %v55 = vld [vmem:[%s1 + $0x10] sm:$0xff]
  %v56 = vld [vmem:[%s1 + $0x18] sm:$0xff]
  %v57 = vld [vmem:[%s0] ss:$4 sm:$0x3]
  %s58 = scalar_lea.vmem %s0, 1
  %v59 = vld [vmem:[%s58] ss:$4 sm:$0x3]
  %s60 = scalar_lea.vmem %s0, 2
  %v61 = vld [vmem:[%s60] ss:$4 sm:$0x3]
  %63 = vset.pattern.permute.xlu0 0
  %64 = vperm.xlu0 %63, %v53
  %v65 = vpop.permute.xlu0 %64
  %68 = vset.pattern.permute.xlu0 0
  %69 = vperm.xlu0 %68, %v54
  %v70 = vpop.permute.xlu0 %69
  %73 = vset.pattern.permute.xlu0 0
  %74 = vperm.xlu0 %73, %v55
  %v75 = vpop.permute.xlu0 %74
  %78 = vset.pattern.permute.xlu0 0
  %79 = vperm.xlu0 %78, %v56
  %v80 = vpop.permute.xlu0 %79
  %v83 = vlaneseq
  %v84 = vshrl.u32 %v83, 7
  %v85 = vsub.s32 0, %v84
  %v86 = vrot.slane %v57, %v85
  %v87 = vlaneseq
  %v88 = vshrl.u32 %v87, 7
  %v89 = vsub.s32 1, %v88
  %v90 = vrot.slane %v57, %v89
  %v93 = vmul.f32 %v65, %v86
  %v94 = vmul.f32 %v65, %v90
  %v95 = vmul.f32 %v70, %v86
  %v96 = vmul.f32 %v70, %v90
  %v97 = vmul.f32 %v75, %v86
  %v98 = vmul.f32 %v75, %v90
  %v99 = vmul.f32 %v80, %v86
  %v100 = vmul.f32 %v80, %v90
  %101 = vset.pattern.permute.xlu0 1
  %102 = vperm.xlu0 %101, %v53
  %v103 = vpop.permute.xlu0 %102
  %105 = vset.pattern.permute.xlu0 1
  %106 = vperm.xlu0 %105, %v54
  %v107 = vpop.permute.xlu0 %106
  %109 = vset.pattern.permute.xlu0 1
  %110 = vperm.xlu0 %109, %v55
  %v111 = vpop.permute.xlu0 %110
  %113 = vset.pattern.permute.xlu0 1
  %114 = vperm.xlu0 %113, %v56
  %v115 = vpop.permute.xlu0 %114
  %v118 = vlaneseq
  %v119 = vshrl.u32 %v118, 7
  %v120 = vsub.s32 0, %v119
  %v121 = vrot.slane %v59, %v120
  %v122 = vlaneseq
  %v123 = vshrl.u32 %v122, 7
  %v124 = vsub.s32 1, %v123
  %v125 = vrot.slane %v59, %v124
  %v128 = vmul.f32 %v103, %v121
  %v129 = vmul.f32 %v103, %v125
  %v130 = vmul.f32 %v107, %v121
  %v131 = vmul.f32 %v107, %v125
  %v132 = vmul.f32 %v111, %v121
  %v133 = vmul.f32 %v111, %v125
  %v134 = vmul.f32 %v115, %v121
  %v135 = vmul.f32 %v115, %v125
  %v136 = vadd.f32 %v93, %v128
  %v137 = vadd.f32 %v94, %v129
  %v138 = vadd.f32 %v95, %v130
  %v139 = vadd.f32 %v96, %v131
  %v140 = vadd.f32 %v97, %v132
  %v141 = vadd.f32 %v98, %v133
  %v142 = vadd.f32 %v99, %v134
  %v143 = vadd.f32 %v100, %v135
  %144 = vset.pattern.permute.xlu0 2
  %145 = vperm.xlu0 %144, %v53
  %v146 = vpop.permute.xlu0 %145
  %148 = vset.pattern.permute.xlu0 2
  %149 = vperm.xlu0 %148, %v54
  %v150 = vpop.permute.xlu0 %149
  %152 = vset.pattern.permute.xlu0 2
  %153 = vperm.xlu0 %152, %v55
  %v154 = vpop.permute.xlu0 %153
  %156 = vset.pattern.permute.xlu0 2
  %157 = vperm.xlu0 %156, %v56
  %v158 = vpop.permute.xlu0 %157
  %v161 = vlaneseq
  %v162 = vshrl.u32 %v161, 7
  %v163 = vsub.s32 0, %v162
  %v164 = vrot.slane %v61, %v163
  %v165 = vlaneseq
  %v166 = vshrl.u32 %v165, 7
  %v167 = vsub.s32 1, %v166
  %v168 = vrot.slane %v61, %v167
  %v171 = vmul.f32 %v146, %v164
  %v172 = vmul.f32 %v146, %v168
  %v173 = vmul.f32 %v150, %v164
  %v174 = vmul.f32 %v150, %v168
  %v175 = vmul.f32 %v154, %v164
  %v176 = vmul.f32 %v154, %v168
  %v177 = vmul.f32 %v158, %v164
  %v178 = vmul.f32 %v158, %v168
  %v179 = vadd.f32 %v136, %v171
  %v180 = vadd.f32 %v137, %v172
  %v181 = vadd.f32 %v138, %v173
  %v182 = vadd.f32 %v139, %v174
  %v183 = vadd.f32 %v140, %v175
  %v184 = vadd.f32 %v141, %v176
  %v185 = vadd.f32 %v142, %v177
  %v186 = vadd.f32 %v143, %v178
  %187 = vset.pattern.permute.xlu0 3
  %188 = vperm.xlu0 %187, %v53
  %v189 = vpop.permute.xlu0 %188
  %191 = vset.pattern.permute.xlu0 3
  %192 = vperm.xlu0 %191, %v54
  %v193 = vpop.permute.xlu0 %192
  %195 = vset.pattern.permute.xlu0 3
  %196 = vperm.xlu0 %195, %v55
  %v197 = vpop.permute.xlu0 %196
  %199 = vset.pattern.permute.xlu0 3
  %200 = vperm.xlu0 %199, %v56
  %v201 = vpop.permute.xlu0 %200
  %v203 = vadd.f32 %v179, %v189
  %v204 = vadd.f32 %v180, %v189
  %v205 = vadd.f32 %v181, %v193
  %v206 = vadd.f32 %v182, %v193
  %v207 = vadd.f32 %v183, %v197
  %v208 = vadd.f32 %v184, %v197
  %v209 = vadd.f32 %v185, %v201
  %v210 = vadd.f32 %v186, %v201
  %v211 = vmax.f32 %v203, 0.0
  %v212 = vmax.f32 %v204, 0.0
  %v213 = vmax.f32 %v205, 0.0
  %v214 = vmax.f32 %v206, 0.0
  %v215 = vmax.f32 %v207, 0.0
  %v216 = vmax.f32 %v208, 0.0
  %v217 = vmax.f32 %v209, 0.0
  %v218 = vmax.f32 %v210, 0.0
  %v219 = vmul.f32 %v211, %v43
  %v220 = vmul.f32 %v212, %v44
  %v221 = vmul.f32 %v213, %v43
  %v222 = vmul.f32 %v214, %v44
  %v223 = vmul.f32 %v215, %v43
  %v224 = vmul.f32 %v216, %v44
  %v225 = vmul.f32 %v217, %v43
  %v226 = vmul.f32 %v218, %v44
  %v227 = vadd.f32 %v219, %v220
  %228 = vadd.xlane.f32.xlu0 %v227
  %v229 = vpop.xlane.xlu0 %228
  %v230 = vadd.f32 %v221, %v222
  %231 = vadd.xlane.f32.xlu0 %v230
  %v232 = vpop.xlane.xlu0 %231
  %v233 = vadd.f32 %v223, %v224
  %234 = vadd.xlane.f32.xlu0 %v233
  %v235 = vpop.xlane.xlu0 %234
  %v236 = vadd.f32 %v225, %v226
  %237 = vadd.xlane.f32.xlu0 %v236
  %v238 = vpop.xlane.xlu0 %237
  %v239 = vmul.f32 %v229, 0.005
  %v240 = vmul.f32 %v232, 0.005
  %v241 = vmul.f32 %v235, 0.005
  %v242 = vmul.f32 %v238, 0.005
  %v243 = vsub.f32 %v219, %v239
  %v244 = vsub.f32 %v220, %v239
  %v245 = vsub.f32 %v221, %v240
  %v246 = vsub.f32 %v222, %v240
  %v247 = vsub.f32 %v223, %v241
  %v248 = vsub.f32 %v224, %v241
  %v249 = vsub.f32 %v225, %v242
  %v250 = vsub.f32 %v226, %v242
  %v251 = vmul.f32 %v243, %v43
  %v252 = vmul.f32 %v244, %v44
  %v253 = vmul.f32 %v245, %v43
  %v254 = vmul.f32 %v246, %v44
  %v255 = vmul.f32 %v247, %v43
  %v256 = vmul.f32 %v248, %v44
  %v257 = vmul.f32 %v249, %v43
  %v258 = vmul.f32 %v250, %v44
  %v259 = vmul.f32 %v251, %v251
  %v260 = vmul.f32 %v252, %v252
  %v261 = vmul.f32 %v253, %v253
  %v262 = vmul.f32 %v254, %v254
  %v263 = vmul.f32 %v255, %v255
  %v264 = vmul.f32 %v256, %v256
  %v265 = vmul.f32 %v257, %v257
  %v266 = vmul.f32 %v258, %v258
  %v267 = vadd.f32 %v259, %v260
  %268 = vadd.xlane.f32.xlu0 %v267
  %v269 = vpop.xlane.xlu0 %268
  %v270 = vadd.f32 %v261, %v262
  %271 = vadd.xlane.f32.xlu0 %v270
  %v272 = vpop.xlane.xlu0 %271
  %v273 = vadd.f32 %v263, %v264
  %274 = vadd.xlane.f32.xlu0 %v273
  %v275 = vpop.xlane.xlu0 %274
  %v276 = vadd.f32 %v265, %v266
  %277 = vadd.xlane.f32.xlu0 %v276
  %v278 = vpop.xlane.xlu0 %277
  %v279 = vmul.f32 %v269, 0.005
  %v280 = vmul.f32 %v272, 0.005
  %v281 = vmul.f32 %v275, 0.005
  %v282 = vmul.f32 %v278, 0.005
  %v283 = vadd.f32 %v279, 1e-05
  %v284 = vadd.f32 %v280, 1e-05
  %v285 = vadd.f32 %v281, 1e-05
  %v286 = vadd.f32 %v282, 1e-05
  %v287 = vrsqrt.pop %v283
  %v288 = vrsqrt.pop %v284
  %v289 = vrsqrt.pop %v285
  %v290 = vrsqrt.pop %v286
  %v291 = vmul.f32 %v53, %v287
  %v292 = vmul.f32 %v54, %v288
  %v293 = vmul.f32 %v55, %v289
  %v294 = vmul.f32 %v56, %v290
  %296 = vset.pattern.permute.xlu0 4
  %297 = vperm.xlu0 %296, %v291
  %v298 = vpop.permute.xlu0 %297
  %301 = vset.pattern.permute.xlu0 4
  %302 = vperm.xlu0 %301, %v292
  %v303 = vpop.permute.xlu0 %302
  %306 = vset.pattern.permute.xlu0 4
  %307 = vperm.xlu0 %306, %v293
  %v308 = vpop.permute.xlu0 %307
  %311 = vset.pattern.permute.xlu0 4
  %312 = vperm.xlu0 %311, %v294
  %v313 = vpop.permute.xlu0 %312
  %v315 = vmul.f32 %v219, %v298
  %v316 = vmul.f32 %v220, %v298
  %v317 = vmul.f32 %v221, %v303
  %v318 = vmul.f32 %v222, %v303
  %v319 = vmul.f32 %v223, %v308
  %v320 = vmul.f32 %v224, %v308
  %v321 = vmul.f32 %v225, %v313
  %v322 = vmul.f32 %v226, %v313
  %v323 = vmul.f32 %v239, %v291
  %v324 = vmul.f32 %v240, %v292
  %v325 = vmul.f32 %v241, %v293
  %v326 = vmul.f32 %v242, %v294
  %331 = vrot.lane.b32.xlu0 %v323, 1
  %v332 = vpop.permute.xlu0 %331
  %333 = vrot.lane.b32.xlu0 %v324, 1
  %v334 = vpop.permute.xlu0 %333
  %335 = vrot.lane.b32.xlu0 %v325, 1
  %v336 = vpop.permute.xlu0 %335
  %337 = vrot.lane.b32.xlu0 %v326, 1
  %v338 = vpop.permute.xlu0 %337
  %v343 = vsub.f32 %v53, %v332
  %v344 = vsub.f32 %v54, %v334
  %v345 = vsub.f32 %v55, %v336
  %v346 = vsub.f32 %v56, %v338
  %348 = vset.pattern.permute.xlu0 5
  %349 = vperm.xlu0 %348, %v343
  %v350 = vpop.permute.xlu0 %349
  %353 = vset.pattern.permute.xlu0 5
  %354 = vperm.xlu0 %353, %v344
  %v355 = vpop.permute.xlu0 %354
  %358 = vset.pattern.permute.xlu0 5
  %359 = vperm.xlu0 %358, %v345
  %v360 = vpop.permute.xlu0 %359
  %363 = vset.pattern.permute.xlu0 5
  %364 = vperm.xlu0 %363, %v346
  %v365 = vpop.permute.xlu0 %364
  %v367 = vadd.f32 %v315, %v350
  %v368 = vadd.f32 %v316, %v350
  %v369 = vadd.f32 %v317, %v355
  %v370 = vadd.f32 %v318, %v355
  %v371 = vadd.f32 %v319, %v360
  %v372 = vadd.f32 %v320, %v360
  %v373 = vadd.f32 %v321, %v365
  %v374 = vadd.f32 %v322, %v365
  %375 = vrot.lane.b32.xlu0 %v367, 1
  %v376 = vpop.permute.xlu0 %375
  %377 = vrot.lane.b32.xlu0 %v369, 1
  %v378 = vpop.permute.xlu0 %377
  %379 = vrot.lane.b32.xlu0 %v371, 1
  %v380 = vpop.permute.xlu0 %379
  %381 = vrot.lane.b32.xlu0 %v373, 1
  %v382 = vpop.permute.xlu0 %381
  %383 = vrot.lane.b32.xlu0 %v368, 1
  %v384 = vpop.permute.xlu0 %383
  %385 = vrot.lane.b32.xlu0 %v370, 1
  %v386 = vpop.permute.xlu0 %385
  %387 = vrot.lane.b32.xlu0 %v372, 1
  %v388 = vpop.permute.xlu0 %387
  %389 = vrot.lane.b32.xlu0 %v374, 1
  %v390 = vpop.permute.xlu0 %389
  %vm391 = vcmp.lt.s32.totalorder %v21, 1
  %v392 = vsel %vm391, %v376, %v384
  %v393 = vsel %vm391, %v378, %v386
  %v394 = vsel %vm391, %v380, %v388
  %v395 = vsel %vm391, %v382, %v390
  %v396 = vsel %vm391, %v384, %v376
  %v397 = vsel %vm391, %v386, %v378
  %v398 = vsel %vm391, %v388, %v380
  %v399 = vsel %vm391, %v390, %v382
  %v400 = vmul.f32 %v396, %v47
  %v401 = vmul.f32 %v392, %v48
  %v402 = vmul.f32 %v397, %v47
  %v403 = vmul.f32 %v393, %v48
  %v404 = vmul.f32 %v398, %v47
  %v405 = vmul.f32 %v394, %v48
  %v406 = vmul.f32 %v399, %v47
  %v407 = vmul.f32 %v395, %v48
  %408 = vrot.lane.b32.xlu0 %v367, 127
  %v409 = vpop.permute.xlu0 %408
  %410 = vrot.lane.b32.xlu0 %v369, 127
  %v411 = vpop.permute.xlu0 %410
  %412 = vrot.lane.b32.xlu0 %v371, 127
  %v413 = vpop.permute.xlu0 %412
  %414 = vrot.lane.b32.xlu0 %v373, 127
  %v415 = vpop.permute.xlu0 %414
  %416 = vrot.lane.b32.xlu0 %v368, 127
  %v417 = vpop.permute.xlu0 %416
  %418 = vrot.lane.b32.xlu0 %v370, 127
  %v419 = vpop.permute.xlu0 %418
  %420 = vrot.lane.b32.xlu0 %v372, 127
  %v421 = vpop.permute.xlu0 %420
  %422 = vrot.lane.b32.xlu0 %v374, 127
  %v423 = vpop.permute.xlu0 %422
  %vm424 = vcmp.lt.s32.totalorder %v21, 127
  %v425 = vsel %vm424, %v409, %v417
  %v426 = vsel %vm424, %v411, %v419
  %v427 = vsel %vm424, %v413, %v421
  %v428 = vsel %vm424, %v415, %v423
  %v429 = vsel %vm424, %v417, %v409
  %v430 = vsel %vm424, %v419, %v411
  %v431 = vsel %vm424, %v421, %v413
  %v432 = vsel %vm424, %v423, %v415
  %v433 = vmul.f32 %v425, %v51
  %v434 = vmul.f32 %v429, %v52
  %v435 = vmul.f32 %v426, %v51
  %v436 = vmul.f32 %v430, %v52
  %v437 = vmul.f32 %v427, %v51
  %v438 = vmul.f32 %v431, %v52
  %v439 = vmul.f32 %v428, %v51
  %v440 = vmul.f32 %v432, %v52
  %v441 = vld [vmem:[%s2] sm:$0xff]
  %v442 = vld [vmem:[%s2 + $0x8] sm:$0xff]
  %v443 = vld [vmem:[%s2 + $0x10] sm:$0xff]
  %v444 = vld [vmem:[%s2 + $0x18] sm:$0xff]
  %445 = vset.pattern.permute.xlu0 6
  %446 = vperm.xlu0 %445, %v53
  %v447 = vpop.permute.xlu0 %446
  %449 = vset.pattern.permute.xlu0 6
  %450 = vperm.xlu0 %449, %v54
  %v451 = vpop.permute.xlu0 %450
  %453 = vset.pattern.permute.xlu0 6
  %454 = vperm.xlu0 %453, %v55
  %v455 = vpop.permute.xlu0 %454
  %457 = vset.pattern.permute.xlu0 6
  %458 = vperm.xlu0 %457, %v56
  %v459 = vpop.permute.xlu0 %458
  %vm461 = vcmask 785408
  %v463 = vsel %vm461, %v441, 0
  %v466 = vsel %vm461, %v442, 0
  %v469 = vsel %vm461, %v443, 0
  %v472 = vsel %vm461, %v444, 0
  %v474 = vand.u32 %v401, 4294901760
  %475 = vmatprep.subr.mxu0 %v474
  %v476 = vand.u32 %v400, 4294901760
  %477 = vmatpush1.msra.mxu0 %v476
  %v478 = vand.u32 %v403, 4294901760
  %479 = vmatprep.subr.mxu0 %v478
  %v480 = vand.u32 %v402, 4294901760
  %481 = vmatpush1.msra.mxu0 %v480
  %v482 = vand.u32 %v405, 4294901760
  %483 = vmatprep.subr.mxu0 %v482
  %v484 = vand.u32 %v404, 4294901760
  %485 = vmatpush1.msra.mxu0 %v484
  %v486 = vand.u32 %v407, 4294901760
  %487 = vmatprep.subr.mxu0 %v486
  %v488 = vand.u32 %v406, 4294901760
  %489 = vmatpush1.msra.mxu0 %v488
  %v490 = vand.u32 %v368, 4294901760
  %491 = vmatprep.subr.mxu0 %v490
  %v492 = vand.u32 %v367, 4294901760
  %493 = vmatpush1.msra.mxu0 %v492
  %v494 = vand.u32 %v370, 4294901760
  %495 = vmatprep.subr.mxu0 %v494
  %v496 = vand.u32 %v369, 4294901760
  %497 = vmatpush1.msra.mxu0 %v496
  %v498 = vand.u32 %v372, 4294901760
  %499 = vmatprep.subr.mxu0 %v498
  %v500 = vand.u32 %v371, 4294901760
  %501 = vmatpush1.msra.mxu0 %v500
  %v502 = vand.u32 %v374, 4294901760
  %503 = vmatprep.subr.mxu0 %v502
  %v504 = vand.u32 %v373, 4294901760
  %505 = vmatpush1.msra.mxu0 %v504
  %v506 = vand.u32 %v434, 4294901760
  %507 = vmatprep.subr.mxu0 %v506
  %v508 = vand.u32 %v433, 4294901760
  %509 = vmatpush1.msra.mxu0 %v508
  %v510 = vand.u32 %v436, 4294901760
  %511 = vmatprep.subr.mxu0 %v510
  %v512 = vand.u32 %v435, 4294901760
  %513 = vmatpush1.msra.mxu0 %v512
  %v514 = vand.u32 %v438, 4294901760
  %515 = vmatprep.subr.mxu0 %v514
  %v516 = vand.u32 %v437, 4294901760
  %517 = vmatpush1.msra.mxu0 %v516
  %v518 = vand.u32 %v440, 4294901760
  %519 = vmatprep.subr.mxu0 %v518
  %v520 = vand.u32 %v439, 4294901760
  %521 = vmatpush1.msra.mxu0 %v520
  %522 = vmatprep.subr.mxu0 0.0
  %523 = vmatpush1.msra.mxu0 0.0
  %524 = vmatprep.subr.mxu0 0.0
  %525 = vmatpush1.msra.mxu0 0.0
  %526 = vmatprep.subr.mxu0 0.0
  %527 = vmatpush1.msra.mxu0 0.0
  %528 = vmatprep.subr.mxu0 0.0
  %529 = vmatpush1.msra.mxu0 0.0
  %530 = vmatprep.subr.mxu0 0.0
  %531 = vmatpush1.msra.mxu0 0.0
  %532 = vmatprep.subr.mxu0 0.0
  %533 = vmatpush1.msra.mxu0 0.0
  %534 = vmatprep.subr.mxu0 0.0
  %535 = vmatpush1.msra.mxu0 0.0
  %536 = vmatprep.subr.mxu0 0.0
  %537 = vmatpush1.msra.mxu0 0.0
  %538 = vmatprep.subr.mxu0 0.0
  %539 = vmatpush1.msra.mxu0 0.0
  %540 = vmatprep.subr.mxu0 0.0
  %541 = vmatpush1.msra.mxu0 0.0
  %542 = vmatprep.subr.mxu0 0.0
  %543 = vmatpush1.msra.mxu0 0.0
  %544 = vmatprep.subr.mxu0 0.0
  %545 = vmatpush1.msra.mxu0 0.0
  %546 = vmatprep.subr.mxu0 0.0
  %547 = vmatpush1.msra.mxu0 0.0
  %548 = vmatprep.subr.mxu0 0.0
  %549 = vmatpush1.msra.mxu0 0.0
  %550 = vmatprep.subr.mxu0 0.0
  %551 = vmatpush1.msra.mxu0 0.0
  %552 = vmatprep.subr.mxu0 0.0
  %553 = vmatpush1.msra.mxu0 0.0
  %554 = vmatprep.subr.mxu0 0.0
  %555 = vmatpush1.msra.mxu0 0.0
  %556 = vmatprep.subr.mxu0 0.0
  %557 = vmatpush1.msra.mxu0 0.0
  %558 = vmatprep.subr.mxu0 0.0
  %559 = vmatpush1.msra.mxu0 0.0
  %560 = vmatprep.subr.mxu0 0.0
  %561 = vmatpush1.msra.mxu0 0.0
  %562 = vmatprep.mubr.f32.mxu0 0.0
  %v563 = vand.u32 %v463, 4294901760
  %v564 = vsub.f32 %v463, %v563
  %v565 = vand.u32 %v564, 4294901760
  %v566 = vsub.f32 %v564, %v565
  %v567 = vand.u32 %v566, 4294901760
  %568 = vmatmul.mubr.f32.gmra.mrb[0].mxu0 %v567
  %v569 = vpop.f32.mrb[0].mxu0
  %v570 = vadd.f32 %v447, %v569
  %v571 = vpop.f32.mrb[0].mxu0
  %v572 = vadd.f32 %v447, %v571
  %573 = vmatprep.mubr.f32.mxu0 0.0
  %v574 = vand.u32 %v466, 4294901760
  %v575 = vsub.f32 %v466, %v574
  %v576 = vand.u32 %v575, 4294901760
  %v577 = vsub.f32 %v575, %v576
  %v578 = vand.u32 %v577, 4294901760
  %579 = vmatmul.mubr.f32.gmra.mrb[0].mxu0 %v578
  %v580 = vpop.f32.mrb[0].mxu0
  %v581 = vadd.f32 %v451, %v580
  %v582 = vpop.f32.mrb[0].mxu0
  %v583 = vadd.f32 %v451, %v582
  %584 = vmatprep.mubr.f32.mxu0 0.0
  %v585 = vand.u32 %v469, 4294901760
  %v586 = vsub.f32 %v469, %v585
  %v587 = vand.u32 %v586, 4294901760
  %v588 = vsub.f32 %v586, %v587
  %v589 = vand.u32 %v588, 4294901760
  %590 = vmatmul.mubr.f32.gmra.mrb[0].mxu0 %v589
  %v591 = vpop.f32.mrb[0].mxu0
  %v592 = vadd.f32 %v455, %v591
  %v593 = vpop.f32.mrb[0].mxu0
  %v594 = vadd.f32 %v455, %v593
  %595 = vmatprep.mubr.f32.mxu0 0.0
  %v596 = vand.u32 %v472, 4294901760
  %v597 = vsub.f32 %v472, %v596
  %v598 = vand.u32 %v597, 4294901760
  %v599 = vsub.f32 %v597, %v598
  %v600 = vand.u32 %v599, 4294901760
  %601 = vmatmul.mubr.f32.gmra.mrb[0].mxu0 %v600
  %v602 = vpop.f32.mrb[0].mxu0
  %v603 = vadd.f32 %v459, %v602
  %v604 = vpop.f32.mrb[0].mxu0
  %v605 = vadd.f32 %v459, %v604
  %606 = vdwg.mxu0
  %v607 = vand.u32 %v401, 4294901760
  %v608 = vsub.f32 %v401, %v607
  %v609 = vand.u32 %v608, 4294901760
  %v610 = vsub.f32 %v608, %v609
  %v611 = vand.u32 %v610, 4294901760
  %612 = vmatprep.subr.mxu0 %v611
  %v613 = vand.u32 %v400, 4294901760
  %v614 = vsub.f32 %v400, %v613
  %v615 = vand.u32 %v614, 4294901760
  %v616 = vsub.f32 %v614, %v615
  %v617 = vand.u32 %v616, 4294901760
  %618 = vmatpush1.msra.mxu0 %v617
  %v619 = vand.u32 %v403, 4294901760
  %v620 = vsub.f32 %v403, %v619
  %v621 = vand.u32 %v620, 4294901760
  %v622 = vsub.f32 %v620, %v621
  %v623 = vand.u32 %v622, 4294901760
  %624 = vmatprep.subr.mxu0 %v623
  %v625 = vand.u32 %v402, 4294901760
  %v626 = vsub.f32 %v402, %v625
  %v627 = vand.u32 %v626, 4294901760
  %v628 = vsub.f32 %v626, %v627
  %v629 = vand.u32 %v628, 4294901760
  %630 = vmatpush1.msra.mxu0 %v629
  %v631 = vand.u32 %v405, 4294901760
  %v632 = vsub.f32 %v405, %v631
  %v633 = vand.u32 %v632, 4294901760
  %v634 = vsub.f32 %v632, %v633
  %v635 = vand.u32 %v634, 4294901760
  %636 = vmatprep.subr.mxu0 %v635
  %v637 = vand.u32 %v404, 4294901760
  %v638 = vsub.f32 %v404, %v637
  %v639 = vand.u32 %v638, 4294901760
  %v640 = vsub.f32 %v638, %v639
  %v641 = vand.u32 %v640, 4294901760
  %642 = vmatpush1.msra.mxu0 %v641
  %v643 = vand.u32 %v407, 4294901760
  %v644 = vsub.f32 %v407, %v643
  %v645 = vand.u32 %v644, 4294901760
  %v646 = vsub.f32 %v644, %v645
  %v647 = vand.u32 %v646, 4294901760
  %648 = vmatprep.subr.mxu0 %v647
  %v649 = vand.u32 %v406, 4294901760
  %v650 = vsub.f32 %v406, %v649
  %v651 = vand.u32 %v650, 4294901760
  %v652 = vsub.f32 %v650, %v651
  %v653 = vand.u32 %v652, 4294901760
  %654 = vmatpush1.msra.mxu0 %v653
  %v655 = vand.u32 %v368, 4294901760
  %v656 = vsub.f32 %v368, %v655
  %v657 = vand.u32 %v656, 4294901760
  %v658 = vsub.f32 %v656, %v657
  %v659 = vand.u32 %v658, 4294901760
  %660 = vmatprep.subr.mxu0 %v659
  %v661 = vand.u32 %v367, 4294901760
  %v662 = vsub.f32 %v367, %v661
  %v663 = vand.u32 %v662, 4294901760
  %v664 = vsub.f32 %v662, %v663
  %v665 = vand.u32 %v664, 4294901760
  %666 = vmatpush1.msra.mxu0 %v665
  %v667 = vand.u32 %v370, 4294901760
  %v668 = vsub.f32 %v370, %v667
  %v669 = vand.u32 %v668, 4294901760
  %v670 = vsub.f32 %v668, %v669
  %v671 = vand.u32 %v670, 4294901760
  %672 = vmatprep.subr.mxu0 %v671
  %v673 = vand.u32 %v369, 4294901760
  %v674 = vsub.f32 %v369, %v673
  %v675 = vand.u32 %v674, 4294901760
  %v676 = vsub.f32 %v674, %v675
  %v677 = vand.u32 %v676, 4294901760
  %678 = vmatpush1.msra.mxu0 %v677
  %v679 = vand.u32 %v372, 4294901760
  %v680 = vsub.f32 %v372, %v679
  %v681 = vand.u32 %v680, 4294901760
  %v682 = vsub.f32 %v680, %v681
  %v683 = vand.u32 %v682, 4294901760
  %684 = vmatprep.subr.mxu0 %v683
  %v685 = vand.u32 %v371, 4294901760
  %v686 = vsub.f32 %v371, %v685
  %v687 = vand.u32 %v686, 4294901760
  %v688 = vsub.f32 %v686, %v687
  %v689 = vand.u32 %v688, 4294901760
  %690 = vmatpush1.msra.mxu0 %v689
  %v691 = vand.u32 %v374, 4294901760
  %v692 = vsub.f32 %v374, %v691
  %v693 = vand.u32 %v692, 4294901760
  %v694 = vsub.f32 %v692, %v693
  %v695 = vand.u32 %v694, 4294901760
  %696 = vmatprep.subr.mxu0 %v695
  %v697 = vand.u32 %v373, 4294901760
  %v698 = vsub.f32 %v373, %v697
  %v699 = vand.u32 %v698, 4294901760
  %v700 = vsub.f32 %v698, %v699
  %v701 = vand.u32 %v700, 4294901760
  %702 = vmatpush1.msra.mxu0 %v701
  %v703 = vand.u32 %v434, 4294901760
  %v704 = vsub.f32 %v434, %v703
  %v705 = vand.u32 %v704, 4294901760
  %v706 = vsub.f32 %v704, %v705
  %v707 = vand.u32 %v706, 4294901760
  %708 = vmatprep.subr.mxu0 %v707
  %v709 = vand.u32 %v433, 4294901760
  %v710 = vsub.f32 %v433, %v709
  %v711 = vand.u32 %v710, 4294901760
  %v712 = vsub.f32 %v710, %v711
  %v713 = vand.u32 %v712, 4294901760
  %714 = vmatpush1.msra.mxu0 %v713
  %v715 = vand.u32 %v436, 4294901760
  %v716 = vsub.f32 %v436, %v715
  %v717 = vand.u32 %v716, 4294901760
  %v718 = vsub.f32 %v716, %v717
  %v719 = vand.u32 %v718, 4294901760
  %720 = vmatprep.subr.mxu0 %v719
  %v721 = vand.u32 %v435, 4294901760
  %v722 = vsub.f32 %v435, %v721
  %v723 = vand.u32 %v722, 4294901760
  %v724 = vsub.f32 %v722, %v723
  %v725 = vand.u32 %v724, 4294901760
  %726 = vmatpush1.msra.mxu0 %v725
  %v727 = vand.u32 %v438, 4294901760
  %v728 = vsub.f32 %v438, %v727
  %v729 = vand.u32 %v728, 4294901760
  %v730 = vsub.f32 %v728, %v729
  %v731 = vand.u32 %v730, 4294901760
  %732 = vmatprep.subr.mxu0 %v731
  %v733 = vand.u32 %v437, 4294901760
  %v734 = vsub.f32 %v437, %v733
  %v735 = vand.u32 %v734, 4294901760
  %v736 = vsub.f32 %v734, %v735
  %v737 = vand.u32 %v736, 4294901760
  %738 = vmatpush1.msra.mxu0 %v737
  %v739 = vand.u32 %v440, 4294901760
  %v740 = vsub.f32 %v440, %v739
  %v741 = vand.u32 %v740, 4294901760
  %v742 = vsub.f32 %v740, %v741
  %v743 = vand.u32 %v742, 4294901760
  %744 = vmatprep.subr.mxu0 %v743
  %v745 = vand.u32 %v439, 4294901760
  %v746 = vsub.f32 %v439, %v745
  %v747 = vand.u32 %v746, 4294901760
  %v748 = vsub.f32 %v746, %v747
  %v749 = vand.u32 %v748, 4294901760
  %750 = vmatpush1.msra.mxu0 %v749
  %751 = vmatprep.subr.mxu0 0.0
  %752 = vmatpush1.msra.mxu0 0.0
  %753 = vmatprep.subr.mxu0 0.0
  %754 = vmatpush1.msra.mxu0 0.0
  %755 = vmatprep.subr.mxu0 0.0
  %756 = vmatpush1.msra.mxu0 0.0
  %757 = vmatprep.subr.mxu0 0.0
  %758 = vmatpush1.msra.mxu0 0.0
  %759 = vmatprep.subr.mxu0 0.0
  %760 = vmatpush1.msra.mxu0 0.0
  %761 = vmatprep.subr.mxu0 0.0
  %762 = vmatpush1.msra.mxu0 0.0
  %763 = vmatprep.subr.mxu0 0.0
  %764 = vmatpush1.msra.mxu0 0.0
  %765 = vmatprep.subr.mxu0 0.0
  %766 = vmatpush1.msra.mxu0 0.0
  %767 = vmatprep.subr.mxu0 0.0
  %768 = vmatpush1.msra.mxu0 0.0
  %769 = vmatprep.subr.mxu0 0.0
  %770 = vmatpush1.msra.mxu0 0.0
  %771 = vmatprep.subr.mxu0 0.0
  %772 = vmatpush1.msra.mxu0 0.0
  %773 = vmatprep.subr.mxu0 0.0
  %774 = vmatpush1.msra.mxu0 0.0
  %775 = vmatprep.subr.mxu0 0.0
  %776 = vmatpush1.msra.mxu0 0.0
  %777 = vmatprep.subr.mxu0 0.0
  %778 = vmatpush1.msra.mxu0 0.0
  %779 = vmatprep.subr.mxu0 0.0
  %780 = vmatpush1.msra.mxu0 0.0
  %781 = vmatprep.subr.mxu0 0.0
  %782 = vmatpush1.msra.mxu0 0.0
  %783 = vmatprep.subr.mxu0 0.0
  %784 = vmatpush1.msra.mxu0 0.0
  %785 = vmatprep.subr.mxu0 0.0
  %786 = vmatpush1.msra.mxu0 0.0
  %787 = vmatprep.subr.mxu0 0.0
  %788 = vmatpush1.msra.mxu0 0.0
  %789 = vmatprep.subr.mxu0 0.0
  %790 = vmatpush1.msra.mxu0 0.0
  %791 = vmatprep.mubr.f32.mxu0 0.0
  %v792 = vand.u32 %v463, 4294901760
  %793 = vmatmul.mubr.f32.gmra.mrb[0].mxu0 %v792
  %v794 = vpop.f32.mrb[0].mxu0
  %v795 = vadd.f32 %v570, %v794
  %v796 = vpop.f32.mrb[0].mxu0
  %v797 = vadd.f32 %v572, %v796
  %798 = vmatprep.mubr.f32.mxu0 0.0
  %v799 = vand.u32 %v466, 4294901760
  %800 = vmatmul.mubr.f32.gmra.mrb[0].mxu0 %v799
  %v801 = vpop.f32.mrb[0].mxu0
  %v802 = vadd.f32 %v581, %v801
  %v803 = vpop.f32.mrb[0].mxu0
  %v804 = vadd.f32 %v583, %v803
  %805 = vmatprep.mubr.f32.mxu0 0.0
  %v806 = vand.u32 %v469, 4294901760
  %807 = vmatmul.mubr.f32.gmra.mrb[0].mxu0 %v806
  %v808 = vpop.f32.mrb[0].mxu0
  %v809 = vadd.f32 %v592, %v808
  %v810 = vpop.f32.mrb[0].mxu0
  %v811 = vadd.f32 %v594, %v810
  %812 = vmatprep.mubr.f32.mxu0 0.0
  %v813 = vand.u32 %v472, 4294901760
  %814 = vmatmul.mubr.f32.gmra.mrb[0].mxu0 %v813
  %v815 = vpop.f32.mrb[0].mxu0
  %v816 = vadd.f32 %v603, %v815
  %v817 = vpop.f32.mrb[0].mxu0
  %v818 = vadd.f32 %v605, %v817
  %819 = vdwg.mxu0
  %v820 = vand.u32 %v401, 4294901760
  %v821 = vsub.f32 %v401, %v820
  %822 = vmatprep.subr.mxu0 %v821
  %v823 = vand.u32 %v400, 4294901760
  %v824 = vsub.f32 %v400, %v823
  %825 = vmatpush1.msra.mxu0 %v824
  %v826 = vand.u32 %v403, 4294901760
  %v827 = vsub.f32 %v403, %v826
  %828 = vmatprep.subr.mxu0 %v827
  %v829 = vand.u32 %v402, 4294901760
  %v830 = vsub.f32 %v402, %v829
  %831 = vmatpush1.msra.mxu0 %v830
  %v832 = vand.u32 %v405, 4294901760
  %v833 = vsub.f32 %v405, %v832
  %834 = vmatprep.subr.mxu0 %v833
  %v835 = vand.u32 %v404, 4294901760
  %v836 = vsub.f32 %v404, %v835
  %837 = vmatpush1.msra.mxu0 %v836
  %v838 = vand.u32 %v407, 4294901760
  %v839 = vsub.f32 %v407, %v838
  %840 = vmatprep.subr.mxu0 %v839
  %v841 = vand.u32 %v406, 4294901760
  %v842 = vsub.f32 %v406, %v841
  %843 = vmatpush1.msra.mxu0 %v842
  %v844 = vand.u32 %v368, 4294901760
  %v845 = vsub.f32 %v368, %v844
  %846 = vmatprep.subr.mxu0 %v845
  %v847 = vand.u32 %v367, 4294901760
  %v848 = vsub.f32 %v367, %v847
  %849 = vmatpush1.msra.mxu0 %v848
  %v850 = vand.u32 %v370, 4294901760
  %v851 = vsub.f32 %v370, %v850
  %852 = vmatprep.subr.mxu0 %v851
  %v853 = vand.u32 %v369, 4294901760
  %v854 = vsub.f32 %v369, %v853
  %855 = vmatpush1.msra.mxu0 %v854
  %v856 = vand.u32 %v372, 4294901760
  %v857 = vsub.f32 %v372, %v856
  %858 = vmatprep.subr.mxu0 %v857
  %v859 = vand.u32 %v371, 4294901760
  %v860 = vsub.f32 %v371, %v859
  %861 = vmatpush1.msra.mxu0 %v860
  %v862 = vand.u32 %v374, 4294901760
  %v863 = vsub.f32 %v374, %v862
  %864 = vmatprep.subr.mxu0 %v863
  %v865 = vand.u32 %v373, 4294901760
  %v866 = vsub.f32 %v373, %v865
  %867 = vmatpush1.msra.mxu0 %v866
  %v868 = vand.u32 %v434, 4294901760
  %v869 = vsub.f32 %v434, %v868
  %870 = vmatprep.subr.mxu0 %v869
  %v871 = vand.u32 %v433, 4294901760
  %v872 = vsub.f32 %v433, %v871
  %873 = vmatpush1.msra.mxu0 %v872
  %v874 = vand.u32 %v436, 4294901760
  %v875 = vsub.f32 %v436, %v874
  %876 = vmatprep.subr.mxu0 %v875
  %v877 = vand.u32 %v435, 4294901760
  %v878 = vsub.f32 %v435, %v877
  %879 = vmatpush1.msra.mxu0 %v878
  %v880 = vand.u32 %v438, 4294901760
  %v881 = vsub.f32 %v438, %v880
  %882 = vmatprep.subr.mxu0 %v881
  %v883 = vand.u32 %v437, 4294901760
  %v884 = vsub.f32 %v437, %v883
  %885 = vmatpush1.msra.mxu0 %v884
  %v886 = vand.u32 %v440, 4294901760
  %v887 = vsub.f32 %v440, %v886
  %888 = vmatprep.subr.mxu0 %v887
  %v889 = vand.u32 %v439, 4294901760
  %v890 = vsub.f32 %v439, %v889
  %891 = vmatpush1.msra.mxu0 %v890
  %892 = vmatprep.subr.mxu0 0.0
  %893 = vmatpush1.msra.mxu0 0.0
  %894 = vmatprep.subr.mxu0 0.0
  %895 = vmatpush1.msra.mxu0 0.0
  %896 = vmatprep.subr.mxu0 0.0
  %897 = vmatpush1.msra.mxu0 0.0
  %898 = vmatprep.subr.mxu0 0.0
  %899 = vmatpush1.msra.mxu0 0.0
  %900 = vmatprep.subr.mxu0 0.0
  %901 = vmatpush1.msra.mxu0 0.0
  %902 = vmatprep.subr.mxu0 0.0
  %903 = vmatpush1.msra.mxu0 0.0
  %904 = vmatprep.subr.mxu0 0.0
  %905 = vmatpush1.msra.mxu0 0.0
  %906 = vmatprep.subr.mxu0 0.0
  %907 = vmatpush1.msra.mxu0 0.0
  %908 = vmatprep.subr.mxu0 0.0
  %909 = vmatpush1.msra.mxu0 0.0
  %910 = vmatprep.subr.mxu0 0.0
  %911 = vmatpush1.msra.mxu0 0.0
  %912 = vmatprep.subr.mxu0 0.0
  %913 = vmatpush1.msra.mxu0 0.0
  %914 = vmatprep.subr.mxu0 0.0
  %915 = vmatpush1.msra.mxu0 0.0
  %916 = vmatprep.subr.mxu0 0.0
  %917 = vmatpush1.msra.mxu0 0.0
  %918 = vmatprep.subr.mxu0 0.0
  %919 = vmatpush1.msra.mxu0 0.0
  %920 = vmatprep.subr.mxu0 0.0
  %921 = vmatpush1.msra.mxu0 0.0
  %922 = vmatprep.subr.mxu0 0.0
  %923 = vmatpush1.msra.mxu0 0.0
  %924 = vmatprep.subr.mxu0 0.0
  %925 = vmatpush1.msra.mxu0 0.0
  %926 = vmatprep.subr.mxu0 0.0
  %927 = vmatpush1.msra.mxu0 0.0
  %928 = vmatprep.subr.mxu0 0.0
  %929 = vmatpush1.msra.mxu0 0.0
  %930 = vmatprep.subr.mxu0 0.0
  %931 = vmatpush1.msra.mxu0 0.0
  %932 = vmatprep.mubr.f32.mxu0 0.0
  %v933 = vand.u32 %v463, 4294901760
  %v934 = vsub.f32 %v463, %v933
  %935 = vmatmul.mubr.f32.gmra.mrb[0].mxu0 %v934
  %v936 = vpop.f32.mrb[0].mxu0
  %v937 = vadd.f32 %v795, %v936
  %v938 = vpop.f32.mrb[0].mxu0
  %v939 = vadd.f32 %v797, %v938
  %940 = vmatprep.mubr.f32.mxu0 0.0
  %v941 = vand.u32 %v466, 4294901760
  %v942 = vsub.f32 %v466, %v941
  %943 = vmatmul.mubr.f32.gmra.mrb[0].mxu0 %v942
  %v944 = vpop.f32.mrb[0].mxu0
  %v945 = vadd.f32 %v802, %v944
  %v946 = vpop.f32.mrb[0].mxu0
  %v947 = vadd.f32 %v804, %v946
  %948 = vmatprep.mubr.f32.mxu0 0.0
  %v949 = vand.u32 %v469, 4294901760
  %v950 = vsub.f32 %v469, %v949
  %951 = vmatmul.mubr.f32.gmra.mrb[0].mxu0 %v950
  %v952 = vpop.f32.mrb[0].mxu0
  %v953 = vadd.f32 %v809, %v952
  %v954 = vpop.f32.mrb[0].mxu0
  %v955 = vadd.f32 %v811, %v954
  %956 = vmatprep.mubr.f32.mxu0 0.0
  %v957 = vand.u32 %v472, 4294901760
  %v958 = vsub.f32 %v472, %v957
  %959 = vmatmul.mubr.f32.gmra.mrb[0].mxu0 %v958
  %v960 = vpop.f32.mrb[0].mxu0
  %v961 = vadd.f32 %v816, %v960
  %v962 = vpop.f32.mrb[0].mxu0
  %v963 = vadd.f32 %v818, %v962
  %964 = vdwg.mxu0
  %v965 = vand.u32 %v401, 4294901760
  %966 = vmatprep.subr.mxu0 %v965
  %v967 = vand.u32 %v400, 4294901760
  %968 = vmatpush1.msra.mxu0 %v967
  %v969 = vand.u32 %v403, 4294901760
  %970 = vmatprep.subr.mxu0 %v969
  %v971 = vand.u32 %v402, 4294901760
  %972 = vmatpush1.msra.mxu0 %v971
  %v973 = vand.u32 %v405, 4294901760
  %974 = vmatprep.subr.mxu0 %v973
  %v975 = vand.u32 %v404, 4294901760
  %976 = vmatpush1.msra.mxu0 %v975
  %v977 = vand.u32 %v407, 4294901760
  %978 = vmatprep.subr.mxu0 %v977
  %v979 = vand.u32 %v406, 4294901760
  %980 = vmatpush1.msra.mxu0 %v979
  %v981 = vand.u32 %v368, 4294901760
  %982 = vmatprep.subr.mxu0 %v981
  %v983 = vand.u32 %v367, 4294901760
  %984 = vmatpush1.msra.mxu0 %v983
  %v985 = vand.u32 %v370, 4294901760
  %986 = vmatprep.subr.mxu0 %v985
  %v987 = vand.u32 %v369, 4294901760
  %988 = vmatpush1.msra.mxu0 %v987
  %v989 = vand.u32 %v372, 4294901760
  %990 = vmatprep.subr.mxu0 %v989
  %v991 = vand.u32 %v371, 4294901760
  %992 = vmatpush1.msra.mxu0 %v991
  %v993 = vand.u32 %v374, 4294901760
  %994 = vmatprep.subr.mxu0 %v993
  %v995 = vand.u32 %v373, 4294901760
  %996 = vmatpush1.msra.mxu0 %v995
  %v997 = vand.u32 %v434, 4294901760
  %998 = vmatprep.subr.mxu0 %v997
  %v999 = vand.u32 %v433, 4294901760
  %1000 = vmatpush1.msra.mxu0 %v999
  %v1001 = vand.u32 %v436, 4294901760
  %1002 = vmatprep.subr.mxu0 %v1001
  %v1003 = vand.u32 %v435, 4294901760
  %1004 = vmatpush1.msra.mxu0 %v1003
  %v1005 = vand.u32 %v438, 4294901760
  %1006 = vmatprep.subr.mxu0 %v1005
  %v1007 = vand.u32 %v437, 4294901760
  %1008 = vmatpush1.msra.mxu0 %v1007
  %v1009 = vand.u32 %v440, 4294901760
  %1010 = vmatprep.subr.mxu0 %v1009
  %v1011 = vand.u32 %v439, 4294901760
  %1012 = vmatpush1.msra.mxu0 %v1011
  %1013 = vmatprep.subr.mxu0 0.0
  %1014 = vmatpush1.msra.mxu0 0.0
  %1015 = vmatprep.subr.mxu0 0.0
  %1016 = vmatpush1.msra.mxu0 0.0
  %1017 = vmatprep.subr.mxu0 0.0
  %1018 = vmatpush1.msra.mxu0 0.0
  %1019 = vmatprep.subr.mxu0 0.0
  %1020 = vmatpush1.msra.mxu0 0.0
  %1021 = vmatprep.subr.mxu0 0.0
  %1022 = vmatpush1.msra.mxu0 0.0
  %1023 = vmatprep.subr.mxu0 0.0
  %1024 = vmatpush1.msra.mxu0 0.0
  %1025 = vmatprep.subr.mxu0 0.0
  %1026 = vmatpush1.msra.mxu0 0.0
  %1027 = vmatprep.subr.mxu0 0.0
  %1028 = vmatpush1.msra.mxu0 0.0
  %1029 = vmatprep.subr.mxu0 0.0
  %1030 = vmatpush1.msra.mxu0 0.0
  %1031 = vmatprep.subr.mxu0 0.0
  %1032 = vmatpush1.msra.mxu0 0.0
  %1033 = vmatprep.subr.mxu0 0.0
  %1034 = vmatpush1.msra.mxu0 0.0
  %1035 = vmatprep.subr.mxu0 0.0
  %1036 = vmatpush1.msra.mxu0 0.0
  %1037 = vmatprep.subr.mxu0 0.0
  %1038 = vmatpush1.msra.mxu0 0.0
  %1039 = vmatprep.subr.mxu0 0.0
  %1040 = vmatpush1.msra.mxu0 0.0
  %1041 = vmatprep.subr.mxu0 0.0
  %1042 = vmatpush1.msra.mxu0 0.0
  %1043 = vmatprep.subr.mxu0 0.0
  %1044 = vmatpush1.msra.mxu0 0.0
  %1045 = vmatprep.subr.mxu0 0.0
  %1046 = vmatpush1.msra.mxu0 0.0
  %1047 = vmatprep.subr.mxu0 0.0
  %1048 = vmatpush1.msra.mxu0 0.0
  %1049 = vmatprep.subr.mxu0 0.0
  %1050 = vmatpush1.msra.mxu0 0.0
  %1051 = vmatprep.subr.mxu0 0.0
  %1052 = vmatpush1.msra.mxu0 0.0
  %1053 = vmatprep.mubr.f32.mxu0 0.0
  %v1054 = vand.u32 %v463, 4294901760
  %v1055 = vsub.f32 %v463, %v1054
  %v1056 = vand.u32 %v1055, 4294901760
  %1057 = vmatmul.mubr.f32.gmra.mrb[0].mxu0 %v1056
  %v1058 = vpop.f32.mrb[0].mxu0
  %v1059 = vadd.f32 %v937, %v1058
  %v1060 = vpop.f32.mrb[0].mxu0
  %v1061 = vadd.f32 %v939, %v1060
  %1062 = vmatprep.mubr.f32.mxu0 0.0
  %v1063 = vand.u32 %v466, 4294901760
  %v1064 = vsub.f32 %v466, %v1063
  %v1065 = vand.u32 %v1064, 4294901760
  %1066 = vmatmul.mubr.f32.gmra.mrb[0].mxu0 %v1065
  %v1067 = vpop.f32.mrb[0].mxu0
  %v1068 = vadd.f32 %v945, %v1067
  %v1069 = vpop.f32.mrb[0].mxu0
  %v1070 = vadd.f32 %v947, %v1069
  %1071 = vmatprep.mubr.f32.mxu0 0.0
  %v1072 = vand.u32 %v469, 4294901760
  %v1073 = vsub.f32 %v469, %v1072
  %v1074 = vand.u32 %v1073, 4294901760
  %1075 = vmatmul.mubr.f32.gmra.mrb[0].mxu0 %v1074
  %v1076 = vpop.f32.mrb[0].mxu0
  %v1077 = vadd.f32 %v953, %v1076
  %v1078 = vpop.f32.mrb[0].mxu0
  %v1079 = vadd.f32 %v955, %v1078
  %1080 = vmatprep.mubr.f32.mxu0 0.0
  %v1081 = vand.u32 %v472, 4294901760
  %v1082 = vsub.f32 %v472, %v1081
  %v1083 = vand.u32 %v1082, 4294901760
  %1084 = vmatmul.mubr.f32.gmra.mrb[0].mxu0 %v1083
  %v1085 = vpop.f32.mrb[0].mxu0
  %v1086 = vadd.f32 %v961, %v1085
  %v1087 = vpop.f32.mrb[0].mxu0
  %v1088 = vadd.f32 %v963, %v1087
  %1089 = vdwg.mxu0
  %v1090 = vand.u32 %v401, 4294901760
  %v1091 = vsub.f32 %v401, %v1090
  %v1092 = vand.u32 %v1091, 4294901760
  %1093 = vmatprep.subr.mxu0 %v1092
  %v1094 = vand.u32 %v400, 4294901760
  %v1095 = vsub.f32 %v400, %v1094
  %v1096 = vand.u32 %v1095, 4294901760
  %1097 = vmatpush1.msra.mxu0 %v1096
  %v1098 = vand.u32 %v403, 4294901760
  %v1099 = vsub.f32 %v403, %v1098
  %v1100 = vand.u32 %v1099, 4294901760
  %1101 = vmatprep.subr.mxu0 %v1100
  %v1102 = vand.u32 %v402, 4294901760
  %v1103 = vsub.f32 %v402, %v1102
  %v1104 = vand.u32 %v1103, 4294901760
  %1105 = vmatpush1.msra.mxu0 %v1104
  %v1106 = vand.u32 %v405, 4294901760
  %v1107 = vsub.f32 %v405, %v1106
  %v1108 = vand.u32 %v1107, 4294901760
  %1109 = vmatprep.subr.mxu0 %v1108
  %v1110 = vand.u32 %v404, 4294901760
  %v1111 = vsub.f32 %v404, %v1110
  %v1112 = vand.u32 %v1111, 4294901760
  %1113 = vmatpush1.msra.mxu0 %v1112
  %v1114 = vand.u32 %v407, 4294901760
  %v1115 = vsub.f32 %v407, %v1114
  %v1116 = vand.u32 %v1115, 4294901760
  %1117 = vmatprep.subr.mxu0 %v1116
  %v1118 = vand.u32 %v406, 4294901760
  %v1119 = vsub.f32 %v406, %v1118
  %v1120 = vand.u32 %v1119, 4294901760
  %1121 = vmatpush1.msra.mxu0 %v1120
  %v1122 = vand.u32 %v368, 4294901760
  %v1123 = vsub.f32 %v368, %v1122
  %v1124 = vand.u32 %v1123, 4294901760
  %1125 = vmatprep.subr.mxu0 %v1124
  %v1126 = vand.u32 %v367, 4294901760
  %v1127 = vsub.f32 %v367, %v1126
  %v1128 = vand.u32 %v1127, 4294901760
  %1129 = vmatpush1.msra.mxu0 %v1128
  %v1130 = vand.u32 %v370, 4294901760
  %v1131 = vsub.f32 %v370, %v1130
  %v1132 = vand.u32 %v1131, 4294901760
  %1133 = vmatprep.subr.mxu0 %v1132
  %v1134 = vand.u32 %v369, 4294901760
  %v1135 = vsub.f32 %v369, %v1134
  %v1136 = vand.u32 %v1135, 4294901760
  %1137 = vmatpush1.msra.mxu0 %v1136
  %v1138 = vand.u32 %v372, 4294901760
  %v1139 = vsub.f32 %v372, %v1138
  %v1140 = vand.u32 %v1139, 4294901760
  %1141 = vmatprep.subr.mxu0 %v1140
  %v1142 = vand.u32 %v371, 4294901760
  %v1143 = vsub.f32 %v371, %v1142
  %v1144 = vand.u32 %v1143, 4294901760
  %1145 = vmatpush1.msra.mxu0 %v1144
  %v1146 = vand.u32 %v374, 4294901760
  %v1147 = vsub.f32 %v374, %v1146
  %v1148 = vand.u32 %v1147, 4294901760
  %1149 = vmatprep.subr.mxu0 %v1148
  %v1150 = vand.u32 %v373, 4294901760
  %v1151 = vsub.f32 %v373, %v1150
  %v1152 = vand.u32 %v1151, 4294901760
  %1153 = vmatpush1.msra.mxu0 %v1152
  %v1154 = vand.u32 %v434, 4294901760
  %v1155 = vsub.f32 %v434, %v1154
  %v1156 = vand.u32 %v1155, 4294901760
  %1157 = vmatprep.subr.mxu0 %v1156
  %v1158 = vand.u32 %v433, 4294901760
  %v1159 = vsub.f32 %v433, %v1158
  %v1160 = vand.u32 %v1159, 4294901760
  %1161 = vmatpush1.msra.mxu0 %v1160
  %v1162 = vand.u32 %v436, 4294901760
  %v1163 = vsub.f32 %v436, %v1162
  %v1164 = vand.u32 %v1163, 4294901760
  %1165 = vmatprep.subr.mxu0 %v1164
  %v1166 = vand.u32 %v435, 4294901760
  %v1167 = vsub.f32 %v435, %v1166
  %v1168 = vand.u32 %v1167, 4294901760
  %1169 = vmatpush1.msra.mxu0 %v1168
  %v1170 = vand.u32 %v438, 4294901760
  %v1171 = vsub.f32 %v438, %v1170
  %v1172 = vand.u32 %v1171, 4294901760
  %1173 = vmatprep.subr.mxu0 %v1172
  %v1174 = vand.u32 %v437, 4294901760
  %v1175 = vsub.f32 %v437, %v1174
  %v1176 = vand.u32 %v1175, 4294901760
  %1177 = vmatpush1.msra.mxu0 %v1176
  %v1178 = vand.u32 %v440, 4294901760
  %v1179 = vsub.f32 %v440, %v1178
  %v1180 = vand.u32 %v1179, 4294901760
  %1181 = vmatprep.subr.mxu0 %v1180
  %v1182 = vand.u32 %v439, 4294901760
  %v1183 = vsub.f32 %v439, %v1182
  %v1184 = vand.u32 %v1183, 4294901760
  %1185 = vmatpush1.msra.mxu0 %v1184
  %1186 = vmatprep.subr.mxu0 0.0
  %1187 = vmatpush1.msra.mxu0 0.0
  %1188 = vmatprep.subr.mxu0 0.0
  %1189 = vmatpush1.msra.mxu0 0.0
  %1190 = vmatprep.subr.mxu0 0.0
  %1191 = vmatpush1.msra.mxu0 0.0
  %1192 = vmatprep.subr.mxu0 0.0
  %1193 = vmatpush1.msra.mxu0 0.0
  %1194 = vmatprep.subr.mxu0 0.0
  %1195 = vmatpush1.msra.mxu0 0.0
  %1196 = vmatprep.subr.mxu0 0.0
  %1197 = vmatpush1.msra.mxu0 0.0
  %1198 = vmatprep.subr.mxu0 0.0
  %1199 = vmatpush1.msra.mxu0 0.0
  %1200 = vmatprep.subr.mxu0 0.0
  %1201 = vmatpush1.msra.mxu0 0.0
  %1202 = vmatprep.subr.mxu0 0.0
  %1203 = vmatpush1.msra.mxu0 0.0
  %1204 = vmatprep.subr.mxu0 0.0
  %1205 = vmatpush1.msra.mxu0 0.0
  %1206 = vmatprep.subr.mxu0 0.0
  %1207 = vmatpush1.msra.mxu0 0.0
  %1208 = vmatprep.subr.mxu0 0.0
  %1209 = vmatpush1.msra.mxu0 0.0
  %1210 = vmatprep.subr.mxu0 0.0
  %1211 = vmatpush1.msra.mxu0 0.0
  %1212 = vmatprep.subr.mxu0 0.0
  %1213 = vmatpush1.msra.mxu0 0.0
  %1214 = vmatprep.subr.mxu0 0.0
  %1215 = vmatpush1.msra.mxu0 0.0
  %1216 = vmatprep.subr.mxu0 0.0
  %1217 = vmatpush1.msra.mxu0 0.0
  %1218 = vmatprep.subr.mxu0 0.0
  %1219 = vmatpush1.msra.mxu0 0.0
  %1220 = vmatprep.subr.mxu0 0.0
  %1221 = vmatpush1.msra.mxu0 0.0
  %1222 = vmatprep.subr.mxu0 0.0
  %1223 = vmatpush1.msra.mxu0 0.0
  %1224 = vmatprep.subr.mxu0 0.0
  %1225 = vmatpush1.msra.mxu0 0.0
  %1226 = vmatprep.mubr.f32.mxu0 0.0
  %v1227 = vand.u32 %v463, 4294901760
  %1228 = vmatmul.mubr.f32.gmra.mrb[0].mxu0 %v1227
  %v1229 = vpop.f32.mrb[0].mxu0
  %v1230 = vadd.f32 %v1059, %v1229
  %v1231 = vpop.f32.mrb[0].mxu0
  %v1232 = vadd.f32 %v1061, %v1231
  %1233 = vmatprep.mubr.f32.mxu0 0.0
  %v1234 = vand.u32 %v466, 4294901760
  %1235 = vmatmul.mubr.f32.gmra.mrb[0].mxu0 %v1234
  %v1236 = vpop.f32.mrb[0].mxu0
  %v1237 = vadd.f32 %v1068, %v1236
  %v1238 = vpop.f32.mrb[0].mxu0
  %v1239 = vadd.f32 %v1070, %v1238
  %1240 = vmatprep.mubr.f32.mxu0 0.0
  %v1241 = vand.u32 %v469, 4294901760
  %1242 = vmatmul.mubr.f32.gmra.mrb[0].mxu0 %v1241
  %v1243 = vpop.f32.mrb[0].mxu0
  %v1244 = vadd.f32 %v1077, %v1243
  %v1245 = vpop.f32.mrb[0].mxu0
  %v1246 = vadd.f32 %v1079, %v1245
  %1247 = vmatprep.mubr.f32.mxu0 0.0
  %v1248 = vand.u32 %v472, 4294901760
  %1249 = vmatmul.mubr.f32.gmra.mrb[0].mxu0 %v1248
  %v1250 = vpop.f32.mrb[0].mxu0
  %v1251 = vadd.f32 %v1086, %v1250
  %v1252 = vpop.f32.mrb[0].mxu0
  %v1253 = vadd.f32 %v1088, %v1252
  %1254 = vdwg.mxu0
  %v1255 = vand.u32 %v401, 4294901760
  %1256 = vmatprep.subr.mxu0 %v1255
  %v1257 = vand.u32 %v400, 4294901760
  %1258 = vmatpush1.msra.mxu0 %v1257
  %v1259 = vand.u32 %v403, 4294901760
  %1260 = vmatprep.subr.mxu0 %v1259
  %v1261 = vand.u32 %v402, 4294901760
  %1262 = vmatpush1.msra.mxu0 %v1261
  %v1263 = vand.u32 %v405, 4294901760
  %1264 = vmatprep.subr.mxu0 %v1263
  %v1265 = vand.u32 %v404, 4294901760
  %1266 = vmatpush1.msra.mxu0 %v1265
  %v1267 = vand.u32 %v407, 4294901760
  %1268 = vmatprep.subr.mxu0 %v1267
  %v1269 = vand.u32 %v406, 4294901760
  %1270 = vmatpush1.msra.mxu0 %v1269
  %v1271 = vand.u32 %v368, 4294901760
  %1272 = vmatprep.subr.mxu0 %v1271
  %v1273 = vand.u32 %v367, 4294901760
  %1274 = vmatpush1.msra.mxu0 %v1273
  %v1275 = vand.u32 %v370, 4294901760
  %1276 = vmatprep.subr.mxu0 %v1275
  %v1277 = vand.u32 %v369, 4294901760
  %1278 = vmatpush1.msra.mxu0 %v1277
  %v1279 = vand.u32 %v372, 4294901760
  %1280 = vmatprep.subr.mxu0 %v1279
  %v1281 = vand.u32 %v371, 4294901760
  %1282 = vmatpush1.msra.mxu0 %v1281
  %v1283 = vand.u32 %v374, 4294901760
  %1284 = vmatprep.subr.mxu0 %v1283
  %v1285 = vand.u32 %v373, 4294901760
  %1286 = vmatpush1.msra.mxu0 %v1285
  %v1287 = vand.u32 %v434, 4294901760
  %1288 = vmatprep.subr.mxu0 %v1287
  %v1289 = vand.u32 %v433, 4294901760
  %1290 = vmatpush1.msra.mxu0 %v1289
  %v1291 = vand.u32 %v436, 4294901760
  %1292 = vmatprep.subr.mxu0 %v1291
  %v1293 = vand.u32 %v435, 4294901760
  %1294 = vmatpush1.msra.mxu0 %v1293
  %v1295 = vand.u32 %v438, 4294901760
  %1296 = vmatprep.subr.mxu0 %v1295
  %v1297 = vand.u32 %v437, 4294901760
  %1298 = vmatpush1.msra.mxu0 %v1297
  %v1299 = vand.u32 %v440, 4294901760
  %1300 = vmatprep.subr.mxu0 %v1299
  %v1301 = vand.u32 %v439, 4294901760
  %1302 = vmatpush1.msra.mxu0 %v1301
  %1303 = vmatprep.subr.mxu0 0.0
  %1304 = vmatpush1.msra.mxu0 0.0
  %1305 = vmatprep.subr.mxu0 0.0
  %1306 = vmatpush1.msra.mxu0 0.0
  %1307 = vmatprep.subr.mxu0 0.0
  %1308 = vmatpush1.msra.mxu0 0.0
  %1309 = vmatprep.subr.mxu0 0.0
  %1310 = vmatpush1.msra.mxu0 0.0
  %1311 = vmatprep.subr.mxu0 0.0
  %1312 = vmatpush1.msra.mxu0 0.0
  %1313 = vmatprep.subr.mxu0 0.0
  %1314 = vmatpush1.msra.mxu0 0.0
  %1315 = vmatprep.subr.mxu0 0.0
  %1316 = vmatpush1.msra.mxu0 0.0
  %1317 = vmatprep.subr.mxu0 0.0
  %1318 = vmatpush1.msra.mxu0 0.0
  %1319 = vmatprep.subr.mxu0 0.0
  %1320 = vmatpush1.msra.mxu0 0.0
  %1321 = vmatprep.subr.mxu0 0.0
  %1322 = vmatpush1.msra.mxu0 0.0
  %1323 = vmatprep.subr.mxu0 0.0
  %1324 = vmatpush1.msra.mxu0 0.0
  %1325 = vmatprep.subr.mxu0 0.0
  %1326 = vmatpush1.msra.mxu0 0.0
  %1327 = vmatprep.subr.mxu0 0.0
  %1328 = vmatpush1.msra.mxu0 0.0
  %1329 = vmatprep.subr.mxu0 0.0
  %1330 = vmatpush1.msra.mxu0 0.0
  %1331 = vmatprep.subr.mxu0 0.0
  %1332 = vmatpush1.msra.mxu0 0.0
  %1333 = vmatprep.subr.mxu0 0.0
  %1334 = vmatpush1.msra.mxu0 0.0
  %1335 = vmatprep.subr.mxu0 0.0
  %1336 = vmatpush1.msra.mxu0 0.0
  %1337 = vmatprep.subr.mxu0 0.0
  %1338 = vmatpush1.msra.mxu0 0.0
  %1339 = vmatprep.subr.mxu0 0.0
  %1340 = vmatpush1.msra.mxu0 0.0
  %1341 = vmatprep.subr.mxu0 0.0
  %1342 = vmatpush1.msra.mxu0 0.0
  %1343 = vmatprep.mubr.f32.mxu0 0.0
  %v1344 = vand.u32 %v463, 4294901760
  %1345 = vmatmul.mubr.f32.gmra.mrb[0].mxu0 %v1344
  %v1346 = vpop.f32.mrb[0].mxu0
  %v1347 = vadd.f32 %v1230, %v1346
  %v1348 = vpop.f32.mrb[0].mxu0
  %v1349 = vadd.f32 %v1232, %v1348
  %1350 = vmatprep.mubr.f32.mxu0 0.0
  %v1351 = vand.u32 %v466, 4294901760
  %1352 = vmatmul.mubr.f32.gmra.mrb[0].mxu0 %v1351
  %v1353 = vpop.f32.mrb[0].mxu0
  %v1354 = vadd.f32 %v1237, %v1353
  %v1355 = vpop.f32.mrb[0].mxu0
  %v1356 = vadd.f32 %v1239, %v1355
  %1357 = vmatprep.mubr.f32.mxu0 0.0
  %v1358 = vand.u32 %v469, 4294901760
  %1359 = vmatmul.mubr.f32.gmra.mrb[0].mxu0 %v1358
  %v1360 = vpop.f32.mrb[0].mxu0
  %v1361 = vadd.f32 %v1244, %v1360
  %v1362 = vpop.f32.mrb[0].mxu0
  %v1363 = vadd.f32 %v1246, %v1362
  %1364 = vmatprep.mubr.f32.mxu0 0.0
  %v1365 = vand.u32 %v472, 4294901760
  %1366 = vmatmul.mubr.f32.gmra.mrb[0].mxu0 %v1365
  %v1367 = vpop.f32.mrb[0].mxu0
  %v1368 = vadd.f32 %v1251, %v1367
  %v1369 = vpop.f32.mrb[0].mxu0
  %v1370 = vadd.f32 %v1253, %v1369
  %1371 = vdwg.mxu0
  %v1372 = vmax.f32 %v1347, 0.0
  %v1373 = vmax.f32 %v1349, 0.0
  %v1374 = vmax.f32 %v1354, 0.0
  %v1375 = vmax.f32 %v1356, 0.0
  %v1376 = vmax.f32 %v1361, 0.0
  %v1377 = vmax.f32 %v1363, 0.0
  %v1378 = vmax.f32 %v1368, 0.0
  %v1379 = vmax.f32 %v1370, 0.0
  %v1380 = vmul.f32 %v1372, %v43
  %v1381 = vmul.f32 %v1373, %v44
  %v1382 = vmul.f32 %v1374, %v43
  %v1383 = vmul.f32 %v1375, %v44
  %v1384 = vmul.f32 %v1376, %v43
  %v1385 = vmul.f32 %v1377, %v44
  %v1386 = vmul.f32 %v1378, %v43
  %v1387 = vmul.f32 %v1379, %v44
  %v1388 = vadd.f32 %v1380, %v1381
  %1389 = vadd.xlane.f32.xlu0 %v1388
  %v1390 = vpop.xlane.xlu0 %1389
  %v1391 = vadd.f32 %v1382, %v1383
  %1392 = vadd.xlane.f32.xlu0 %v1391
  %v1393 = vpop.xlane.xlu0 %1392
  %v1394 = vadd.f32 %v1384, %v1385
  %1395 = vadd.xlane.f32.xlu0 %v1394
  %v1396 = vpop.xlane.xlu0 %1395
  %v1397 = vadd.f32 %v1386, %v1387
  %1398 = vadd.xlane.f32.xlu0 %v1397
  %v1399 = vpop.xlane.xlu0 %1398
  %v1400 = vmul.f32 %v1390, 0.005
  %v1401 = vmul.f32 %v1393, 0.005
  %v1402 = vmul.f32 %v1396, 0.005
  %v1403 = vmul.f32 %v1399, 0.005
  %v1404 = vsub.f32 %v1380, %v1400
  %v1405 = vsub.f32 %v1381, %v1400
  %v1406 = vsub.f32 %v1382, %v1401
  %v1407 = vsub.f32 %v1383, %v1401
  %v1408 = vsub.f32 %v1384, %v1402
  %v1409 = vsub.f32 %v1385, %v1402
  %v1410 = vsub.f32 %v1386, %v1403
  %v1411 = vsub.f32 %v1387, %v1403
  %v1412 = vmul.f32 %v1404, %v43
  %v1413 = vmul.f32 %v1405, %v44
  %v1414 = vmul.f32 %v1406, %v43
  %v1415 = vmul.f32 %v1407, %v44
  %v1416 = vmul.f32 %v1408, %v43
  %v1417 = vmul.f32 %v1409, %v44
  %v1418 = vmul.f32 %v1410, %v43
  %v1419 = vmul.f32 %v1411, %v44
  %v1420 = vmul.f32 %v1412, %v1412
  %v1421 = vmul.f32 %v1413, %v1413
  %v1422 = vmul.f32 %v1414, %v1414
  %v1423 = vmul.f32 %v1415, %v1415
  %v1424 = vmul.f32 %v1416, %v1416
  %v1425 = vmul.f32 %v1417, %v1417
  %v1426 = vmul.f32 %v1418, %v1418
  %v1427 = vmul.f32 %v1419, %v1419
  %v1428 = vadd.f32 %v1420, %v1421
  %1429 = vadd.xlane.f32.xlu0 %v1428
  %v1430 = vpop.xlane.xlu0 %1429
  %v1431 = vadd.f32 %v1422, %v1423
  %1432 = vadd.xlane.f32.xlu0 %v1431
  %v1433 = vpop.xlane.xlu0 %1432
  %v1434 = vadd.f32 %v1424, %v1425
  %1435 = vadd.xlane.f32.xlu0 %v1434
  %v1436 = vpop.xlane.xlu0 %1435
  %v1437 = vadd.f32 %v1426, %v1427
  %1438 = vadd.xlane.f32.xlu0 %v1437
  %v1439 = vpop.xlane.xlu0 %1438
  %v1440 = vmul.f32 %v1430, 0.005
  %v1441 = vmul.f32 %v1433, 0.005
  %v1442 = vmul.f32 %v1436, 0.005
  %v1443 = vmul.f32 %v1439, 0.005
  %v1444 = vadd.f32 %v1440, 1e-05
  %v1445 = vadd.f32 %v1441, 1e-05
  %v1446 = vadd.f32 %v1442, 1e-05
  %v1447 = vadd.f32 %v1443, 1e-05
  %v1448 = vrsqrt.pop %v1444
  %v1449 = vrsqrt.pop %v1445
  %v1450 = vrsqrt.pop %v1446
  %v1451 = vrsqrt.pop %v1447
  %v1452 = vmul.f32 %v53, %v1448
  %v1453 = vmul.f32 %v54, %v1449
  %v1454 = vmul.f32 %v55, %v1450
  %v1455 = vmul.f32 %v56, %v1451
  %1457 = vset.pattern.permute.xlu0 7
  %1458 = vperm.xlu0 %1457, %v1452
  %v1459 = vpop.permute.xlu0 %1458
  %1462 = vset.pattern.permute.xlu0 7
  %1463 = vperm.xlu0 %1462, %v1453
  %v1464 = vpop.permute.xlu0 %1463
  %1467 = vset.pattern.permute.xlu0 7
  %1468 = vperm.xlu0 %1467, %v1454
  %v1469 = vpop.permute.xlu0 %1468
  %1472 = vset.pattern.permute.xlu0 7
  %1473 = vperm.xlu0 %1472, %v1455
  %v1474 = vpop.permute.xlu0 %1473
  %v1476 = vmul.f32 %v1380, %v1459
  %v1477 = vmul.f32 %v1381, %v1459
  %v1478 = vmul.f32 %v1382, %v1464
  %v1479 = vmul.f32 %v1383, %v1464
  %v1480 = vmul.f32 %v1384, %v1469
  %v1481 = vmul.f32 %v1385, %v1469
  %v1482 = vmul.f32 %v1386, %v1474
  %v1483 = vmul.f32 %v1387, %v1474
  %v1484 = vmul.f32 %v1400, %v1452
  %v1485 = vmul.f32 %v1401, %v1453
  %v1486 = vmul.f32 %v1402, %v1454
  %v1487 = vmul.f32 %v1403, %v1455
  %1492 = vrot.lane.b32.xlu0 %v1484, 1
  %v1493 = vpop.permute.xlu0 %1492
  %1494 = vrot.lane.b32.xlu0 %v1485, 1
  %v1495 = vpop.permute.xlu0 %1494
  %1496 = vrot.lane.b32.xlu0 %v1486, 1
  %v1497 = vpop.permute.xlu0 %1496
  %1498 = vrot.lane.b32.xlu0 %v1487, 1
  %v1499 = vpop.permute.xlu0 %1498
  %v1504 = vsub.f32 %v53, %v1493
  %v1505 = vsub.f32 %v54, %v1495
  %v1506 = vsub.f32 %v55, %v1497
  %v1507 = vsub.f32 %v56, %v1499
  %1509 = vset.pattern.permute.xlu0 8
  %1510 = vperm.xlu0 %1509, %v1504
  %v1511 = vpop.permute.xlu0 %1510
  %1514 = vset.pattern.permute.xlu0 8
  %1515 = vperm.xlu0 %1514, %v1505
  %v1516 = vpop.permute.xlu0 %1515
  %1519 = vset.pattern.permute.xlu0 8
  %1520 = vperm.xlu0 %1519, %v1506
  %v1521 = vpop.permute.xlu0 %1520
  %1524 = vset.pattern.permute.xlu0 8
  %1525 = vperm.xlu0 %1524, %v1507
  %v1526 = vpop.permute.xlu0 %1525
  %v1528 = vadd.f32 %v1476, %v1511
  %v1529 = vadd.f32 %v1477, %v1511
  %v1530 = vadd.f32 %v1478, %v1516
  %v1531 = vadd.f32 %v1479, %v1516
  %v1532 = vadd.f32 %v1480, %v1521
  %v1533 = vadd.f32 %v1481, %v1521
  %v1534 = vadd.f32 %v1482, %v1526
  %v1535 = vadd.f32 %v1483, %v1526
  %v1536 = vld [vmem:[%s3] sm:$0xff]
  %v1537 = vld [vmem:[%s3 + $0x8] sm:$0xff]
  %v1538 = vld [vmem:[%s3 + $0x10] sm:$0xff]
  %v1539 = vld [vmem:[%s3 + $0x18] sm:$0xff]
  %v1540 = vld [vmem:[%s3 + $0x20] sm:$0xff]
  %v1541 = vld [vmem:[%s3 + $0x28] sm:$0xff]
  %v1542 = vld [vmem:[%s3 + $0x30] sm:$0xff]
  %v1543 = vld [vmem:[%s3 + $0x38] sm:$0xff]
  %v1544 = vld [vmem:[%s3 + $0x40] sm:$0xff]
  %v1545 = vld [vmem:[%s3 + $0x48] sm:$0xff]
  %v1546 = vld [vmem:[%s3 + $0x50] sm:$0xff]
  %v1547 = vld [vmem:[%s3 + $0x58] sm:$0xff]
  %v1548 = vld [vmem:[%s3 + $0x60] sm:$0xf]
  %v1549 = vld [vmem:[%s4] sm:$0x1]
  %v1551 = vlaneseq
  %v1552 = vshrl.u32 %v1551, 7
  %v1553 = vsub.s32 0, %v1552
  %v1554 = vrot.slane %v1549, %v1553
  %vm1556 = vcmask 818176
  %v1558 = vsel %vm1556, %v1528, 0
  %v1561 = vsel %vm1556, %v1530, 0
  %v1564 = vsel %vm1556, %v1532, 0
  %v1567 = vsel %vm1556, %v1534, 0
  %vm1569 = vcmask 1043456
  %v1571 = vsel %vm1569, %v1548, 0
  %1573 = vmatprep.subr.mxu0 0.0
  %v1574 = vand.u32 %v1536, 4294901760
  %1575 = vmatpush1.msra.mxu0 %v1574
  %1576 = vmatprep.subr.mxu0 0.0
  %v1577 = vand.u32 %v1537, 4294901760
  %1578 = vmatpush1.msra.mxu0 %v1577
  %1579 = vmatprep.subr.mxu0 0.0
  %v1580 = vand.u32 %v1538, 4294901760
  %1581 = vmatpush1.msra.mxu0 %v1580
  %1582 = vmatprep.subr.mxu0 0.0
  %v1583 = vand.u32 %v1539, 4294901760
  %1584 = vmatpush1.msra.mxu0 %v1583
  %1585 = vmatprep.subr.mxu0 0.0
  %v1586 = vand.u32 %v1540, 4294901760
  %1587 = vmatpush1.msra.mxu0 %v1586
  %1588 = vmatprep.subr.mxu0 0.0
  %v1589 = vand.u32 %v1541, 4294901760
  %1590 = vmatpush1.msra.mxu0 %v1589
  %1591 = vmatprep.subr.mxu0 0.0
  %v1592 = vand.u32 %v1542, 4294901760
  %1593 = vmatpush1.msra.mxu0 %v1592
  %1594 = vmatprep.subr.mxu0 0.0
  %v1595 = vand.u32 %v1543, 4294901760
  %1596 = vmatpush1.msra.mxu0 %v1595
  %1597 = vmatprep.subr.mxu0 0.0
  %v1598 = vand.u32 %v1544, 4294901760
  %1599 = vmatpush1.msra.mxu0 %v1598
  %1600 = vmatprep.subr.mxu0 0.0
  %v1601 = vand.u32 %v1545, 4294901760
  %1602 = vmatpush1.msra.mxu0 %v1601
  %1603 = vmatprep.subr.mxu0 0.0
  %v1604 = vand.u32 %v1546, 4294901760
  %1605 = vmatpush1.msra.mxu0 %v1604
  %1606 = vmatprep.subr.mxu0 0.0
  %v1607 = vand.u32 %v1547, 4294901760
  %1608 = vmatpush1.msra.mxu0 %v1607
  %1609 = vmatprep.subr.mxu0 0.0
  %v1610 = vand.u32 %v1571, 4294901760
  %1611 = vmatpush1.msra.mxu0 %v1610
  %1612 = vmatprep.subr.mxu0 0.0
  %1613 = vmatpush1.msra.mxu0 0.0
  %1614 = vmatprep.subr.mxu0 0.0
  %1615 = vmatpush1.msra.mxu0 0.0
  %1616 = vmatprep.subr.mxu0 0.0
  %1617 = vmatpush1.msra.mxu0 0.0
  %1618 = vmatprep.subr.mxu0 0.0
  %1619 = vmatpush1.msra.mxu0 0.0
  %1620 = vmatprep.subr.mxu0 0.0
  %1621 = vmatpush1.msra.mxu0 0.0
  %1622 = vmatprep.subr.mxu0 0.0
  %1623 = vmatpush1.msra.mxu0 0.0
  %1624 = vmatprep.subr.mxu0 0.0
  %1625 = vmatpush1.msra.mxu0 0.0
  %1626 = vmatprep.subr.mxu0 0.0
  %1627 = vmatpush1.msra.mxu0 0.0
  %1628 = vmatprep.subr.mxu0 0.0
  %1629 = vmatpush1.msra.mxu0 0.0
  %1630 = vmatprep.subr.mxu0 0.0
  %1631 = vmatpush1.msra.mxu0 0.0
  %1632 = vmatprep.subr.mxu0 0.0
  %1633 = vmatpush1.msra.mxu0 0.0
  %1634 = vmatprep.subr.mxu0 0.0
  %1635 = vmatpush1.msra.mxu0 0.0
  %1636 = vmatprep.subr.mxu0 0.0
  %1637 = vmatpush1.msra.mxu0 0.0
  %1638 = vmatprep.subr.mxu0 0.0
  %1639 = vmatpush1.msra.mxu0 0.0
  %1640 = vmatprep.subr.mxu0 0.0
  %1641 = vmatpush1.msra.mxu0 0.0
  %1642 = vmatprep.subr.mxu0 0.0
  %1643 = vmatpush1.msra.mxu0 0.0
  %1644 = vmatprep.subr.mxu0 0.0
  %1645 = vmatpush1.msra.mxu0 0.0
  %1646 = vmatprep.subr.mxu0 0.0
  %1647 = vmatpush1.msra.mxu0 0.0
  %1648 = vmatprep.subr.mxu0 0.0
  %1649 = vmatpush1.msra.mxu0 0.0
  %1650 = vmatprep.mubr.f32.mxu0 0.0
  %v1651 = vand.u32 %v1558, 4294901760
  %v1652 = vsub.f32 %v1558, %v1651
  %v1653 = vand.u32 %v1652, 4294901760
  %v1654 = vsub.f32 %v1652, %v1653
  %v1655 = vand.u32 %v1654, 4294901760
  %1656 = vmatmul.mubr.f32.gmra.mrb[0].mxu0 %v1655
  %v1657 = vpop.f32.mrb[0].mxu0
  %v1658 = vadd.f32 %v1554, %v1657
  %v1659 = vpop.f32.mrb[0].mxu0
  %1660 = vmatprep.mubr.f32.mxu0 0.0
  %v1661 = vand.u32 %v1561, 4294901760
  %v1662 = vsub.f32 %v1561, %v1661
  %v1663 = vand.u32 %v1662, 4294901760
  %v1664 = vsub.f32 %v1662, %v1663
  %v1665 = vand.u32 %v1664, 4294901760
  %1666 = vmatmul.mubr.f32.gmra.mrb[0].mxu0 %v1665
  %v1667 = vpop.f32.mrb[0].mxu0
  %v1668 = vadd.f32 %v1554, %v1667
  %v1669 = vpop.f32.mrb[0].mxu0
  %1670 = vmatprep.mubr.f32.mxu0 0.0
  %v1671 = vand.u32 %v1564, 4294901760
  %v1672 = vsub.f32 %v1564, %v1671
  %v1673 = vand.u32 %v1672, 4294901760
  %v1674 = vsub.f32 %v1672, %v1673
  %v1675 = vand.u32 %v1674, 4294901760
  %1676 = vmatmul.mubr.f32.gmra.mrb[0].mxu0 %v1675
  %v1677 = vpop.f32.mrb[0].mxu0
  %v1678 = vadd.f32 %v1554, %v1677
  %v1679 = vpop.f32.mrb[0].mxu0
  %1680 = vmatprep.mubr.f32.mxu0 0.0
  %v1681 = vand.u32 %v1567, 4294901760
  %v1682 = vsub.f32 %v1567, %v1681
  %v1683 = vand.u32 %v1682, 4294901760
  %v1684 = vsub.f32 %v1682, %v1683
  %v1685 = vand.u32 %v1684, 4294901760
  %1686 = vmatmul.mubr.f32.gmra.mrb[0].mxu0 %v1685
  %v1687 = vpop.f32.mrb[0].mxu0
  %v1688 = vadd.f32 %v1554, %v1687
  %v1689 = vpop.f32.mrb[0].mxu0
  %1690 = vdwg.mxu0
  %1691 = vmatprep.subr.mxu0 0.0
  %v1692 = vand.u32 %v1536, 4294901760
  %v1693 = vsub.f32 %v1536, %v1692
  %v1694 = vand.u32 %v1693, 4294901760
  %v1695 = vsub.f32 %v1693, %v1694
  %v1696 = vand.u32 %v1695, 4294901760
  %1697 = vmatpush1.msra.mxu0 %v1696
  %1698 = vmatprep.subr.mxu0 0.0
  %v1699 = vand.u32 %v1537, 4294901760
  %v1700 = vsub.f32 %v1537, %v1699
  %v1701 = vand.u32 %v1700, 4294901760
  %v1702 = vsub.f32 %v1700, %v1701
  %v1703 = vand.u32 %v1702, 4294901760
  %1704 = vmatpush1.msra.mxu0 %v1703
  %1705 = vmatprep.subr.mxu0 0.0
  %v1706 = vand.u32 %v1538, 4294901760
  %v1707 = vsub.f32 %v1538, %v1706
  %v1708 = vand.u32 %v1707, 4294901760
  %v1709 = vsub.f32 %v1707, %v1708
  %v1710 = vand.u32 %v1709, 4294901760
  %1711 = vmatpush1.msra.mxu0 %v1710
  %1712 = vmatprep.subr.mxu0 0.0
  %v1713 = vand.u32 %v1539, 4294901760
  %v1714 = vsub.f32 %v1539, %v1713
  %v1715 = vand.u32 %v1714, 4294901760
  %v1716 = vsub.f32 %v1714, %v1715
  %v1717 = vand.u32 %v1716, 4294901760
  %1718 = vmatpush1.msra.mxu0 %v1717
  %1719 = vmatprep.subr.mxu0 0.0
  %v1720 = vand.u32 %v1540, 4294901760
  %v1721 = vsub.f32 %v1540, %v1720
  %v1722 = vand.u32 %v1721, 4294901760
  %v1723 = vsub.f32 %v1721, %v1722
  %v1724 = vand.u32 %v1723, 4294901760
  %1725 = vmatpush1.msra.mxu0 %v1724
  %1726 = vmatprep.subr.mxu0 0.0
  %v1727 = vand.u32 %v1541, 4294901760
  %v1728 = vsub.f32 %v1541, %v1727
  %v1729 = vand.u32 %v1728, 4294901760
  %v1730 = vsub.f32 %v1728, %v1729
  %v1731 = vand.u32 %v1730, 4294901760
  %1732 = vmatpush1.msra.mxu0 %v1731
  %1733 = vmatprep.subr.mxu0 0.0
  %v1734 = vand.u32 %v1542, 4294901760
  %v1735 = vsub.f32 %v1542, %v1734
  %v1736 = vand.u32 %v1735, 4294901760
  %v1737 = vsub.f32 %v1735, %v1736
  %v1738 = vand.u32 %v1737, 4294901760
  %1739 = vmatpush1.msra.mxu0 %v1738
  %1740 = vmatprep.subr.mxu0 0.0
  %v1741 = vand.u32 %v1543, 4294901760
  %v1742 = vsub.f32 %v1543, %v1741
  %v1743 = vand.u32 %v1742, 4294901760
  %v1744 = vsub.f32 %v1742, %v1743
  %v1745 = vand.u32 %v1744, 4294901760
  %1746 = vmatpush1.msra.mxu0 %v1745
  %1747 = vmatprep.subr.mxu0 0.0
  %v1748 = vand.u32 %v1544, 4294901760
  %v1749 = vsub.f32 %v1544, %v1748
  %v1750 = vand.u32 %v1749, 4294901760
  %v1751 = vsub.f32 %v1749, %v1750
  %v1752 = vand.u32 %v1751, 4294901760
  %1753 = vmatpush1.msra.mxu0 %v1752
  %1754 = vmatprep.subr.mxu0 0.0
  %v1755 = vand.u32 %v1545, 4294901760
  %v1756 = vsub.f32 %v1545, %v1755
  %v1757 = vand.u32 %v1756, 4294901760
  %v1758 = vsub.f32 %v1756, %v1757
  %v1759 = vand.u32 %v1758, 4294901760
  %1760 = vmatpush1.msra.mxu0 %v1759
  %1761 = vmatprep.subr.mxu0 0.0
  %v1762 = vand.u32 %v1546, 4294901760
  %v1763 = vsub.f32 %v1546, %v1762
  %v1764 = vand.u32 %v1763, 4294901760
  %v1765 = vsub.f32 %v1763, %v1764
  %v1766 = vand.u32 %v1765, 4294901760
  %1767 = vmatpush1.msra.mxu0 %v1766
  %1768 = vmatprep.subr.mxu0 0.0
  %v1769 = vand.u32 %v1547, 4294901760
  %v1770 = vsub.f32 %v1547, %v1769
  %v1771 = vand.u32 %v1770, 4294901760
  %v1772 = vsub.f32 %v1770, %v1771
  %v1773 = vand.u32 %v1772, 4294901760
  %1774 = vmatpush1.msra.mxu0 %v1773
  %1775 = vmatprep.subr.mxu0 0.0
  %v1776 = vand.u32 %v1571, 4294901760
  %v1777 = vsub.f32 %v1571, %v1776
  %v1778 = vand.u32 %v1777, 4294901760
  %v1779 = vsub.f32 %v1777, %v1778
  %v1780 = vand.u32 %v1779, 4294901760
  %1781 = vmatpush1.msra.mxu0 %v1780
  %1782 = vmatprep.subr.mxu0 0.0
  %1783 = vmatpush1.msra.mxu0 0.0
  %1784 = vmatprep.subr.mxu0 0.0
  %1785 = vmatpush1.msra.mxu0 0.0
  %1786 = vmatprep.subr.mxu0 0.0
  %1787 = vmatpush1.msra.mxu0 0.0
  %1788 = vmatprep.subr.mxu0 0.0
  %1789 = vmatpush1.msra.mxu0 0.0
  %1790 = vmatprep.subr.mxu0 0.0
  %1791 = vmatpush1.msra.mxu0 0.0
  %1792 = vmatprep.subr.mxu0 0.0
  %1793 = vmatpush1.msra.mxu0 0.0
  %1794 = vmatprep.subr.mxu0 0.0
  %1795 = vmatpush1.msra.mxu0 0.0
  %1796 = vmatprep.subr.mxu0 0.0
  %1797 = vmatpush1.msra.mxu0 0.0
  %1798 = vmatprep.subr.mxu0 0.0
  %1799 = vmatpush1.msra.mxu0 0.0
  %1800 = vmatprep.subr.mxu0 0.0
  %1801 = vmatpush1.msra.mxu0 0.0
  %1802 = vmatprep.subr.mxu0 0.0
  %1803 = vmatpush1.msra.mxu0 0.0
  %1804 = vmatprep.subr.mxu0 0.0
  %1805 = vmatpush1.msra.mxu0 0.0
  %1806 = vmatprep.subr.mxu0 0.0
  %1807 = vmatpush1.msra.mxu0 0.0
  %1808 = vmatprep.subr.mxu0 0.0
  %1809 = vmatpush1.msra.mxu0 0.0
  %1810 = vmatprep.subr.mxu0 0.0
  %1811 = vmatpush1.msra.mxu0 0.0
  %1812 = vmatprep.subr.mxu0 0.0
  %1813 = vmatpush1.msra.mxu0 0.0
  %1814 = vmatprep.subr.mxu0 0.0
  %1815 = vmatpush1.msra.mxu0 0.0
  %1816 = vmatprep.subr.mxu0 0.0
  %1817 = vmatpush1.msra.mxu0 0.0
  %1818 = vmatprep.subr.mxu0 0.0
  %1819 = vmatpush1.msra.mxu0 0.0
  %1820 = vmatprep.mubr.f32.mxu0 0.0
  %v1821 = vand.u32 %v1558, 4294901760
  %1822 = vmatmul.mubr.f32.gmra.mrb[0].mxu0 %v1821
  %v1823 = vpop.f32.mrb[0].mxu0
  %v1824 = vadd.f32 %v1658, %v1823
  %v1825 = vpop.f32.mrb[0].mxu0
  %1826 = vmatprep.mubr.f32.mxu0 0.0
  %v1827 = vand.u32 %v1561, 4294901760
  %1828 = vmatmul.mubr.f32.gmra.mrb[0].mxu0 %v1827
  %v1829 = vpop.f32.mrb[0].mxu0
  %v1830 = vadd.f32 %v1668, %v1829
  %v1831 = vpop.f32.mrb[0].mxu0
  %1832 = vmatprep.mubr.f32.mxu0 0.0
  %v1833 = vand.u32 %v1564, 4294901760
  %1834 = vmatmul.mubr.f32.gmra.mrb[0].mxu0 %v1833
  %v1835 = vpop.f32.mrb[0].mxu0
  %v1836 = vadd.f32 %v1678, %v1835
  %v1837 = vpop.f32.mrb[0].mxu0
  %1838 = vmatprep.mubr.f32.mxu0 0.0
  %v1839 = vand.u32 %v1567, 4294901760
  %1840 = vmatmul.mubr.f32.gmra.mrb[0].mxu0 %v1839
  %v1841 = vpop.f32.mrb[0].mxu0
  %v1842 = vadd.f32 %v1688, %v1841
  %v1843 = vpop.f32.mrb[0].mxu0
  %1844 = vdwg.mxu0
  %1845 = vmatprep.subr.mxu0 0.0
  %v1846 = vand.u32 %v1536, 4294901760
  %v1847 = vsub.f32 %v1536, %v1846
  %1848 = vmatpush1.msra.mxu0 %v1847
  %1849 = vmatprep.subr.mxu0 0.0
  %v1850 = vand.u32 %v1537, 4294901760
  %v1851 = vsub.f32 %v1537, %v1850
  %1852 = vmatpush1.msra.mxu0 %v1851
  %1853 = vmatprep.subr.mxu0 0.0
  %v1854 = vand.u32 %v1538, 4294901760
  %v1855 = vsub.f32 %v1538, %v1854
  %1856 = vmatpush1.msra.mxu0 %v1855
  %1857 = vmatprep.subr.mxu0 0.0
  %v1858 = vand.u32 %v1539, 4294901760
  %v1859 = vsub.f32 %v1539, %v1858
  %1860 = vmatpush1.msra.mxu0 %v1859
  %1861 = vmatprep.subr.mxu0 0.0
  %v1862 = vand.u32 %v1540, 4294901760
  %v1863 = vsub.f32 %v1540, %v1862
  %1864 = vmatpush1.msra.mxu0 %v1863
  %1865 = vmatprep.subr.mxu0 0.0
  %v1866 = vand.u32 %v1541, 4294901760
  %v1867 = vsub.f32 %v1541, %v1866
  %1868 = vmatpush1.msra.mxu0 %v1867
  %1869 = vmatprep.subr.mxu0 0.0
  %v1870 = vand.u32 %v1542, 4294901760
  %v1871 = vsub.f32 %v1542, %v1870
  %1872 = vmatpush1.msra.mxu0 %v1871
  %1873 = vmatprep.subr.mxu0 0.0
  %v1874 = vand.u32 %v1543, 4294901760
  %v1875 = vsub.f32 %v1543, %v1874
  %1876 = vmatpush1.msra.mxu0 %v1875
  %1877 = vmatprep.subr.mxu0 0.0
  %v1878 = vand.u32 %v1544, 4294901760
  %v1879 = vsub.f32 %v1544, %v1878
  %1880 = vmatpush1.msra.mxu0 %v1879
  %1881 = vmatprep.subr.mxu0 0.0
  %v1882 = vand.u32 %v1545, 4294901760
  %v1883 = vsub.f32 %v1545, %v1882
  %1884 = vmatpush1.msra.mxu0 %v1883
  %1885 = vmatprep.subr.mxu0 0.0
  %v1886 = vand.u32 %v1546, 4294901760
  %v1887 = vsub.f32 %v1546, %v1886
  %1888 = vmatpush1.msra.mxu0 %v1887
  %1889 = vmatprep.subr.mxu0 0.0
  %v1890 = vand.u32 %v1547, 4294901760
  %v1891 = vsub.f32 %v1547, %v1890
  %1892 = vmatpush1.msra.mxu0 %v1891
  %1893 = vmatprep.subr.mxu0 0.0
  %v1894 = vand.u32 %v1571, 4294901760
  %v1895 = vsub.f32 %v1571, %v1894
  %1896 = vmatpush1.msra.mxu0 %v1895
  %1897 = vmatprep.subr.mxu0 0.0
  %1898 = vmatpush1.msra.mxu0 0.0
  %1899 = vmatprep.subr.mxu0 0.0
  %1900 = vmatpush1.msra.mxu0 0.0
  %1901 = vmatprep.subr.mxu0 0.0
  %1902 = vmatpush1.msra.mxu0 0.0
  %1903 = vmatprep.subr.mxu0 0.0
  %1904 = vmatpush1.msra.mxu0 0.0
  %1905 = vmatprep.subr.mxu0 0.0
  %1906 = vmatpush1.msra.mxu0 0.0
  %1907 = vmatprep.subr.mxu0 0.0
  %1908 = vmatpush1.msra.mxu0 0.0
  %1909 = vmatprep.subr.mxu0 0.0
  %1910 = vmatpush1.msra.mxu0 0.0
  %1911 = vmatprep.subr.mxu0 0.0
  %1912 = vmatpush1.msra.mxu0 0.0
  %1913 = vmatprep.subr.mxu0 0.0
  %1914 = vmatpush1.msra.mxu0 0.0
  %1915 = vmatprep.subr.mxu0 0.0
  %1916 = vmatpush1.msra.mxu0 0.0
  %1917 = vmatprep.subr.mxu0 0.0
  %1918 = vmatpush1.msra.mxu0 0.0
  %1919 = vmatprep.subr.mxu0 0.0
  %1920 = vmatpush1.msra.mxu0 0.0
  %1921 = vmatprep.subr.mxu0 0.0
  %1922 = vmatpush1.msra.mxu0 0.0
  %1923 = vmatprep.subr.mxu0 0.0
  %1924 = vmatpush1.msra.mxu0 0.0
  %1925 = vmatprep.subr.mxu0 0.0
  %1926 = vmatpush1.msra.mxu0 0.0
  %1927 = vmatprep.subr.mxu0 0.0
  %1928 = vmatpush1.msra.mxu0 0.0
  %1929 = vmatprep.subr.mxu0 0.0
  %1930 = vmatpush1.msra.mxu0 0.0
  %1931 = vmatprep.subr.mxu0 0.0
  %1932 = vmatpush1.msra.mxu0 0.0
  %1933 = vmatprep.subr.mxu0 0.0
  %1934 = vmatpush1.msra.mxu0 0.0
  %1935 = vmatprep.mubr.f32.mxu0 0.0
  %v1936 = vand.u32 %v1558, 4294901760
  %v1937 = vsub.f32 %v1558, %v1936
  %1938 = vmatmul.mubr.f32.gmra.mrb[0].mxu0 %v1937
  %v1939 = vpop.f32.mrb[0].mxu0
  %v1940 = vadd.f32 %v1824, %v1939
  %v1941 = vpop.f32.mrb[0].mxu0
  %1942 = vmatprep.mubr.f32.mxu0 0.0
  %v1943 = vand.u32 %v1561, 4294901760
  %v1944 = vsub.f32 %v1561, %v1943
  %1945 = vmatmul.mubr.f32.gmra.mrb[0].mxu0 %v1944
  %v1946 = vpop.f32.mrb[0].mxu0
  %v1947 = vadd.f32 %v1830, %v1946
  %v1948 = vpop.f32.mrb[0].mxu0
  %1949 = vmatprep.mubr.f32.mxu0 0.0
  %v1950 = vand.u32 %v1564, 4294901760
  %v1951 = vsub.f32 %v1564, %v1950
  %1952 = vmatmul.mubr.f32.gmra.mrb[0].mxu0 %v1951
  %v1953 = vpop.f32.mrb[0].mxu0
  %v1954 = vadd.f32 %v1836, %v1953
  %v1955 = vpop.f32.mrb[0].mxu0
  %1956 = vmatprep.mubr.f32.mxu0 0.0
  %v1957 = vand.u32 %v1567, 4294901760
  %v1958 = vsub.f32 %v1567, %v1957
  %1959 = vmatmul.mubr.f32.gmra.mrb[0].mxu0 %v1958
  %v1960 = vpop.f32.mrb[0].mxu0
  %v1961 = vadd.f32 %v1842, %v1960
  %v1962 = vpop.f32.mrb[0].mxu0
  %1963 = vdwg.mxu0
  %1964 = vmatprep.subr.mxu0 0.0
  %v1965 = vand.u32 %v1536, 4294901760
  %1966 = vmatpush1.msra.mxu0 %v1965
  %1967 = vmatprep.subr.mxu0 0.0
  %v1968 = vand.u32 %v1537, 4294901760
  %1969 = vmatpush1.msra.mxu0 %v1968
  %1970 = vmatprep.subr.mxu0 0.0
  %v1971 = vand.u32 %v1538, 4294901760
  %1972 = vmatpush1.msra.mxu0 %v1971
  %1973 = vmatprep.subr.mxu0 0.0
  %v1974 = vand.u32 %v1539, 4294901760
  %1975 = vmatpush1.msra.mxu0 %v1974
  %1976 = vmatprep.subr.mxu0 0.0
  %v1977 = vand.u32 %v1540, 4294901760
  %1978 = vmatpush1.msra.mxu0 %v1977
  %1979 = vmatprep.subr.mxu0 0.0
  %v1980 = vand.u32 %v1541, 4294901760
  %1981 = vmatpush1.msra.mxu0 %v1980
  %1982 = vmatprep.subr.mxu0 0.0
  %v1983 = vand.u32 %v1542, 4294901760
  %1984 = vmatpush1.msra.mxu0 %v1983
  %1985 = vmatprep.subr.mxu0 0.0
  %v1986 = vand.u32 %v1543, 4294901760
  %1987 = vmatpush1.msra.mxu0 %v1986
  %1988 = vmatprep.subr.mxu0 0.0
  %v1989 = vand.u32 %v1544, 4294901760
  %1990 = vmatpush1.msra.mxu0 %v1989
  %1991 = vmatprep.subr.mxu0 0.0
  %v1992 = vand.u32 %v1545, 4294901760
  %1993 = vmatpush1.msra.mxu0 %v1992
  %1994 = vmatprep.subr.mxu0 0.0
  %v1995 = vand.u32 %v1546, 4294901760
  %1996 = vmatpush1.msra.mxu0 %v1995
  %1997 = vmatprep.subr.mxu0 0.0
  %v1998 = vand.u32 %v1547, 4294901760
  %1999 = vmatpush1.msra.mxu0 %v1998
  %2000 = vmatprep.subr.mxu0 0.0
  %v2001 = vand.u32 %v1571, 4294901760
  %2002 = vmatpush1.msra.mxu0 %v2001
  %2003 = vmatprep.subr.mxu0 0.0
  %2004 = vmatpush1.msra.mxu0 0.0
  %2005 = vmatprep.subr.mxu0 0.0
  %2006 = vmatpush1.msra.mxu0 0.0
  %2007 = vmatprep.subr.mxu0 0.0
  %2008 = vmatpush1.msra.mxu0 0.0
  %2009 = vmatprep.subr.mxu0 0.0
  %2010 = vmatpush1.msra.mxu0 0.0
  %2011 = vmatprep.subr.mxu0 0.0
  %2012 = vmatpush1.msra.mxu0 0.0
  %2013 = vmatprep.subr.mxu0 0.0
  %2014 = vmatpush1.msra.mxu0 0.0
  %2015 = vmatprep.subr.mxu0 0.0
  %2016 = vmatpush1.msra.mxu0 0.0
  %2017 = vmatprep.subr.mxu0 0.0
  %2018 = vmatpush1.msra.mxu0 0.0
  %2019 = vmatprep.subr.mxu0 0.0
  %2020 = vmatpush1.msra.mxu0 0.0
  %2021 = vmatprep.subr.mxu0 0.0
  %2022 = vmatpush1.msra.mxu0 0.0
  %2023 = vmatprep.subr.mxu0 0.0
  %2024 = vmatpush1.msra.mxu0 0.0
  %2025 = vmatprep.subr.mxu0 0.0
  %2026 = vmatpush1.msra.mxu0 0.0
  %2027 = vmatprep.subr.mxu0 0.0
  %2028 = vmatpush1.msra.mxu0 0.0
  %2029 = vmatprep.subr.mxu0 0.0
  %2030 = vmatpush1.msra.mxu0 0.0
  %2031 = vmatprep.subr.mxu0 0.0
  %2032 = vmatpush1.msra.mxu0 0.0
  %2033 = vmatprep.subr.mxu0 0.0
  %2034 = vmatpush1.msra.mxu0 0.0
  %2035 = vmatprep.subr.mxu0 0.0
  %2036 = vmatpush1.msra.mxu0 0.0
  %2037 = vmatprep.subr.mxu0 0.0
  %2038 = vmatpush1.msra.mxu0 0.0
  %2039 = vmatprep.subr.mxu0 0.0
  %2040 = vmatpush1.msra.mxu0 0.0
  %2041 = vmatprep.mubr.f32.mxu0 0.0
  %v2042 = vand.u32 %v1558, 4294901760
  %v2043 = vsub.f32 %v1558, %v2042
  %v2044 = vand.u32 %v2043, 4294901760
  %2045 = vmatmul.mubr.f32.gmra.mrb[0].mxu0 %v2044
  %v2046 = vpop.f32.mrb[0].mxu0
  %v2047 = vadd.f32 %v1940, %v2046
  %v2048 = vpop.f32.mrb[0].mxu0
  %2049 = vmatprep.mubr.f32.mxu0 0.0
  %v2050 = vand.u32 %v1561, 4294901760
  %v2051 = vsub.f32 %v1561, %v2050
  %v2052 = vand.u32 %v2051, 4294901760
  %2053 = vmatmul.mubr.f32.gmra.mrb[0].mxu0 %v2052
  %v2054 = vpop.f32.mrb[0].mxu0
  %v2055 = vadd.f32 %v1947, %v2054
  %v2056 = vpop.f32.mrb[0].mxu0
  %2057 = vmatprep.mubr.f32.mxu0 0.0
  %v2058 = vand.u32 %v1564, 4294901760
  %v2059 = vsub.f32 %v1564, %v2058
  %v2060 = vand.u32 %v2059, 4294901760
  %2061 = vmatmul.mubr.f32.gmra.mrb[0].mxu0 %v2060
  %v2062 = vpop.f32.mrb[0].mxu0
  %v2063 = vadd.f32 %v1954, %v2062
  %v2064 = vpop.f32.mrb[0].mxu0
  %2065 = vmatprep.mubr.f32.mxu0 0.0
  %v2066 = vand.u32 %v1567, 4294901760
  %v2067 = vsub.f32 %v1567, %v2066
  %v2068 = vand.u32 %v2067, 4294901760
  %2069 = vmatmul.mubr.f32.gmra.mrb[0].mxu0 %v2068
  %v2070 = vpop.f32.mrb[0].mxu0
  %v2071 = vadd.f32 %v1961, %v2070
  %v2072 = vpop.f32.mrb[0].mxu0
  %2073 = vdwg.mxu0
  %2074 = vmatprep.subr.mxu0 0.0
  %v2075 = vand.u32 %v1536, 4294901760
  %v2076 = vsub.f32 %v1536, %v2075
  %v2077 = vand.u32 %v2076, 4294901760
  %2078 = vmatpush1.msra.mxu0 %v2077
  %2079 = vmatprep.subr.mxu0 0.0
  %v2080 = vand.u32 %v1537, 4294901760
  %v2081 = vsub.f32 %v1537, %v2080
  %v2082 = vand.u32 %v2081, 4294901760
  %2083 = vmatpush1.msra.mxu0 %v2082
  %2084 = vmatprep.subr.mxu0 0.0
  %v2085 = vand.u32 %v1538, 4294901760
  %v2086 = vsub.f32 %v1538, %v2085
  %v2087 = vand.u32 %v2086, 4294901760
  %2088 = vmatpush1.msra.mxu0 %v2087
  %2089 = vmatprep.subr.mxu0 0.0
  %v2090 = vand.u32 %v1539, 4294901760
  %v2091 = vsub.f32 %v1539, %v2090
  %v2092 = vand.u32 %v2091, 4294901760
  %2093 = vmatpush1.msra.mxu0 %v2092
  %2094 = vmatprep.subr.mxu0 0.0
  %v2095 = vand.u32 %v1540, 4294901760
  %v2096 = vsub.f32 %v1540, %v2095
  %v2097 = vand.u32 %v2096, 4294901760
  %2098 = vmatpush1.msra.mxu0 %v2097
  %2099 = vmatprep.subr.mxu0 0.0
  %v2100 = vand.u32 %v1541, 4294901760
  %v2101 = vsub.f32 %v1541, %v2100
  %v2102 = vand.u32 %v2101, 4294901760
  %2103 = vmatpush1.msra.mxu0 %v2102
  %2104 = vmatprep.subr.mxu0 0.0
  %v2105 = vand.u32 %v1542, 4294901760
  %v2106 = vsub.f32 %v1542, %v2105
  %v2107 = vand.u32 %v2106, 4294901760
  %2108 = vmatpush1.msra.mxu0 %v2107
  %2109 = vmatprep.subr.mxu0 0.0
  %v2110 = vand.u32 %v1543, 4294901760
  %v2111 = vsub.f32 %v1543, %v2110
  %v2112 = vand.u32 %v2111, 4294901760
  %2113 = vmatpush1.msra.mxu0 %v2112
  %2114 = vmatprep.subr.mxu0 0.0
  %v2115 = vand.u32 %v1544, 4294901760
  %v2116 = vsub.f32 %v1544, %v2115
  %v2117 = vand.u32 %v2116, 4294901760
  %2118 = vmatpush1.msra.mxu0 %v2117
  %2119 = vmatprep.subr.mxu0 0.0
  %v2120 = vand.u32 %v1545, 4294901760
  %v2121 = vsub.f32 %v1545, %v2120
  %v2122 = vand.u32 %v2121, 4294901760
  %2123 = vmatpush1.msra.mxu0 %v2122
  %2124 = vmatprep.subr.mxu0 0.0
  %v2125 = vand.u32 %v1546, 4294901760
  %v2126 = vsub.f32 %v1546, %v2125
  %v2127 = vand.u32 %v2126, 4294901760
  %2128 = vmatpush1.msra.mxu0 %v2127
  %2129 = vmatprep.subr.mxu0 0.0
  %v2130 = vand.u32 %v1547, 4294901760
  %v2131 = vsub.f32 %v1547, %v2130
  %v2132 = vand.u32 %v2131, 4294901760
  %2133 = vmatpush1.msra.mxu0 %v2132
  %2134 = vmatprep.subr.mxu0 0.0
  %v2135 = vand.u32 %v1571, 4294901760
  %v2136 = vsub.f32 %v1571, %v2135
  %v2137 = vand.u32 %v2136, 4294901760
  %2138 = vmatpush1.msra.mxu0 %v2137
  %2139 = vmatprep.subr.mxu0 0.0
  %2140 = vmatpush1.msra.mxu0 0.0
  %2141 = vmatprep.subr.mxu0 0.0
  %2142 = vmatpush1.msra.mxu0 0.0
  %2143 = vmatprep.subr.mxu0 0.0
  %2144 = vmatpush1.msra.mxu0 0.0
  %2145 = vmatprep.subr.mxu0 0.0
  %2146 = vmatpush1.msra.mxu0 0.0
  %2147 = vmatprep.subr.mxu0 0.0
  %2148 = vmatpush1.msra.mxu0 0.0
  %2149 = vmatprep.subr.mxu0 0.0
  %2150 = vmatpush1.msra.mxu0 0.0
  %2151 = vmatprep.subr.mxu0 0.0
  %2152 = vmatpush1.msra.mxu0 0.0
  %2153 = vmatprep.subr.mxu0 0.0
  %2154 = vmatpush1.msra.mxu0 0.0
  %2155 = vmatprep.subr.mxu0 0.0
  %2156 = vmatpush1.msra.mxu0 0.0
  %2157 = vmatprep.subr.mxu0 0.0
  %2158 = vmatpush1.msra.mxu0 0.0
  %2159 = vmatprep.subr.mxu0 0.0
  %2160 = vmatpush1.msra.mxu0 0.0
  %2161 = vmatprep.subr.mxu0 0.0
  %2162 = vmatpush1.msra.mxu0 0.0
  %2163 = vmatprep.subr.mxu0 0.0
  %2164 = vmatpush1.msra.mxu0 0.0
  %2165 = vmatprep.subr.mxu0 0.0
  %2166 = vmatpush1.msra.mxu0 0.0
  %2167 = vmatprep.subr.mxu0 0.0
  %2168 = vmatpush1.msra.mxu0 0.0
  %2169 = vmatprep.subr.mxu0 0.0
  %2170 = vmatpush1.msra.mxu0 0.0
  %2171 = vmatprep.subr.mxu0 0.0
  %2172 = vmatpush1.msra.mxu0 0.0
  %2173 = vmatprep.subr.mxu0 0.0
  %2174 = vmatpush1.msra.mxu0 0.0
  %2175 = vmatprep.subr.mxu0 0.0
  %2176 = vmatpush1.msra.mxu0 0.0
  %2177 = vmatprep.mubr.f32.mxu0 0.0
  %v2178 = vand.u32 %v1558, 4294901760
  %2179 = vmatmul.mubr.f32.gmra.mrb[0].mxu0 %v2178
  %v2180 = vpop.f32.mrb[0].mxu0
  %v2181 = vadd.f32 %v2047, %v2180
  %v2182 = vpop.f32.mrb[0].mxu0
  %2183 = vmatprep.mubr.f32.mxu0 0.0
  %v2184 = vand.u32 %v1561, 4294901760
  %2185 = vmatmul.mubr.f32.gmra.mrb[0].mxu0 %v2184
  %v2186 = vpop.f32.mrb[0].mxu0
  %v2187 = vadd.f32 %v2055, %v2186
  %v2188 = vpop.f32.mrb[0].mxu0
  %2189 = vmatprep.mubr.f32.mxu0 0.0
  %v2190 = vand.u32 %v1564, 4294901760
  %2191 = vmatmul.mubr.f32.gmra.mrb[0].mxu0 %v2190
  %v2192 = vpop.f32.mrb[0].mxu0
  %v2193 = vadd.f32 %v2063, %v2192
  %v2194 = vpop.f32.mrb[0].mxu0
  %2195 = vmatprep.mubr.f32.mxu0 0.0
  %v2196 = vand.u32 %v1567, 4294901760
  %2197 = vmatmul.mubr.f32.gmra.mrb[0].mxu0 %v2196
  %v2198 = vpop.f32.mrb[0].mxu0
  %v2199 = vadd.f32 %v2071, %v2198
  %v2200 = vpop.f32.mrb[0].mxu0
  %2201 = vdwg.mxu0
  %2202 = vmatprep.subr.mxu0 0.0
  %v2203 = vand.u32 %v1536, 4294901760
  %2204 = vmatpush1.msra.mxu0 %v2203
  %2205 = vmatprep.subr.mxu0 0.0
  %v2206 = vand.u32 %v1537, 4294901760
  %2207 = vmatpush1.msra.mxu0 %v2206
  %2208 = vmatprep.subr.mxu0 0.0
  %v2209 = vand.u32 %v1538, 4294901760
  %2210 = vmatpush1.msra.mxu0 %v2209
  %2211 = vmatprep.subr.mxu0 0.0
  %v2212 = vand.u32 %v1539, 4294901760
  %2213 = vmatpush1.msra.mxu0 %v2212
  %2214 = vmatprep.subr.mxu0 0.0
  %v2215 = vand.u32 %v1540, 4294901760
  %2216 = vmatpush1.msra.mxu0 %v2215
  %2217 = vmatprep.subr.mxu0 0.0
  %v2218 = vand.u32 %v1541, 4294901760
  %2219 = vmatpush1.msra.mxu0 %v2218
  %2220 = vmatprep.subr.mxu0 0.0
  %v2221 = vand.u32 %v1542, 4294901760
  %2222 = vmatpush1.msra.mxu0 %v2221
  %2223 = vmatprep.subr.mxu0 0.0
  %v2224 = vand.u32 %v1543, 4294901760
  %2225 = vmatpush1.msra.mxu0 %v2224
  %2226 = vmatprep.subr.mxu0 0.0
  %v2227 = vand.u32 %v1544, 4294901760
  %2228 = vmatpush1.msra.mxu0 %v2227
  %2229 = vmatprep.subr.mxu0 0.0
  %v2230 = vand.u32 %v1545, 4294901760
  %2231 = vmatpush1.msra.mxu0 %v2230
  %2232 = vmatprep.subr.mxu0 0.0
  %v2233 = vand.u32 %v1546, 4294901760
  %2234 = vmatpush1.msra.mxu0 %v2233
  %2235 = vmatprep.subr.mxu0 0.0
  %v2236 = vand.u32 %v1547, 4294901760
  %2237 = vmatpush1.msra.mxu0 %v2236
  %2238 = vmatprep.subr.mxu0 0.0
  %v2239 = vand.u32 %v1571, 4294901760
  %2240 = vmatpush1.msra.mxu0 %v2239
  %2241 = vmatprep.subr.mxu0 0.0
  %2242 = vmatpush1.msra.mxu0 0.0
  %2243 = vmatprep.subr.mxu0 0.0
  %2244 = vmatpush1.msra.mxu0 0.0
  %2245 = vmatprep.subr.mxu0 0.0
  %2246 = vmatpush1.msra.mxu0 0.0
  %2247 = vmatprep.subr.mxu0 0.0
  %2248 = vmatpush1.msra.mxu0 0.0
  %2249 = vmatprep.subr.mxu0 0.0
  %2250 = vmatpush1.msra.mxu0 0.0
  %2251 = vmatprep.subr.mxu0 0.0
  %2252 = vmatpush1.msra.mxu0 0.0
  %2253 = vmatprep.subr.mxu0 0.0
  %2254 = vmatpush1.msra.mxu0 0.0
  %2255 = vmatprep.subr.mxu0 0.0
  %2256 = vmatpush1.msra.mxu0 0.0
  %2257 = vmatprep.subr.mxu0 0.0
  %2258 = vmatpush1.msra.mxu0 0.0
  %2259 = vmatprep.subr.mxu0 0.0
  %2260 = vmatpush1.msra.mxu0 0.0
  %2261 = vmatprep.subr.mxu0 0.0
  %2262 = vmatpush1.msra.mxu0 0.0
  %2263 = vmatprep.subr.mxu0 0.0
  %2264 = vmatpush1.msra.mxu0 0.0
  %2265 = vmatprep.subr.mxu0 0.0
  %2266 = vmatpush1.msra.mxu0 0.0
  %2267 = vmatprep.subr.mxu0 0.0
  %2268 = vmatpush1.msra.mxu0 0.0
  %2269 = vmatprep.subr.mxu0 0.0
  %2270 = vmatpush1.msra.mxu0 0.0
  %2271 = vmatprep.subr.mxu0 0.0
  %2272 = vmatpush1.msra.mxu0 0.0
  %2273 = vmatprep.subr.mxu0 0.0
  %2274 = vmatpush1.msra.mxu0 0.0
  %2275 = vmatprep.subr.mxu0 0.0
  %2276 = vmatpush1.msra.mxu0 0.0
  %2277 = vmatprep.subr.mxu0 0.0
  %2278 = vmatpush1.msra.mxu0 0.0
  %2279 = vmatprep.mubr.f32.mxu0 0.0
  %v2280 = vand.u32 %v1558, 4294901760
  %2281 = vmatmul.mubr.f32.gmra.mrb[0].mxu0 %v2280
  %v2282 = vpop.f32.mrb[0].mxu0
  %v2283 = vadd.f32 %v2181, %v2282
  %v2284 = vpop.f32.mrb[0].mxu0
  %2285 = vmatprep.mubr.f32.mxu0 0.0
  %v2286 = vand.u32 %v1561, 4294901760
  %2287 = vmatmul.mubr.f32.gmra.mrb[0].mxu0 %v2286
  %v2288 = vpop.f32.mrb[0].mxu0
  %v2289 = vadd.f32 %v2187, %v2288
  %v2290 = vpop.f32.mrb[0].mxu0
  %2291 = vmatprep.mubr.f32.mxu0 0.0
  %v2292 = vand.u32 %v1564, 4294901760
  %2293 = vmatmul.mubr.f32.gmra.mrb[0].mxu0 %v2292
  %v2294 = vpop.f32.mrb[0].mxu0
  %v2295 = vadd.f32 %v2193, %v2294
  %v2296 = vpop.f32.mrb[0].mxu0
  %2297 = vmatprep.mubr.f32.mxu0 0.0
  %v2298 = vand.u32 %v1567, 4294901760
  %2299 = vmatmul.mubr.f32.gmra.mrb[0].mxu0 %v2298
  %v2300 = vpop.f32.mrb[0].mxu0
  %v2301 = vadd.f32 %v2199, %v2300
  %v2302 = vpop.f32.mrb[0].mxu0
  %2303 = vdwg.mxu0
  %2308 = vrot.lane.b32.xlu0 %v1528, 28
  %v2309 = vpop.permute.xlu0 %2308
  %2310 = vrot.lane.b32.xlu0 %v1529, 28
  %v2311 = vpop.permute.xlu0 %2310
  %2312 = vrot.lane.b32.xlu0 %v1530, 28
  %v2313 = vpop.permute.xlu0 %2312
  %2314 = vrot.lane.b32.xlu0 %v1531, 28
  %v2315 = vpop.permute.xlu0 %2314
  %2316 = vrot.lane.b32.xlu0 %v1532, 28
  %v2317 = vpop.permute.xlu0 %2316
  %2318 = vrot.lane.b32.xlu0 %v1533, 28
  %v2319 = vpop.permute.xlu0 %2318
  %2320 = vrot.lane.b32.xlu0 %v1534, 28
  %v2321 = vpop.permute.xlu0 %2320
  %2322 = vrot.lane.b32.xlu0 %v1535, 28
  %v2323 = vpop.permute.xlu0 %2322
  %vm2324 = vcmask 228352
  %v2325 = vsel %vm2324, %v2309, %v2311
  %v2326 = vsel %vm2324, %v2313, %v2315
  %v2327 = vsel %vm2324, %v2317, %v2319
  %v2328 = vsel %vm2324, %v2321, %v2323
  %v2329 = vsel %vm1556, %v2325, 0
  %v2331 = vsel %vm1556, %v2326, 0
  %v2333 = vsel %vm1556, %v2327, 0
  %v2335 = vsel %vm1556, %v2328, 0
  %2337 = vmatprep.subr.mxu0 0.0
  %v2338 = vand.u32 %v1536, 4294901760
  %2339 = vmatpush1.msra.mxu0 %v2338
  %2340 = vmatprep.subr.mxu0 0.0
  %v2341 = vand.u32 %v1537, 4294901760
  %2342 = vmatpush1.msra.mxu0 %v2341
  %2343 = vmatprep.subr.mxu0 0.0
  %v2344 = vand.u32 %v1538, 4294901760
  %2345 = vmatpush1.msra.mxu0 %v2344
  %2346 = vmatprep.subr.mxu0 0.0
  %v2347 = vand.u32 %v1539, 4294901760
  %2348 = vmatpush1.msra.mxu0 %v2347
  %2349 = vmatprep.subr.mxu0 0.0
  %v2350 = vand.u32 %v1540, 4294901760
  %2351 = vmatpush1.msra.mxu0 %v2350
  %2352 = vmatprep.subr.mxu0 0.0
  %v2353 = vand.u32 %v1541, 4294901760
  %2354 = vmatpush1.msra.mxu0 %v2353
  %2355 = vmatprep.subr.mxu0 0.0
  %v2356 = vand.u32 %v1542, 4294901760
  %2357 = vmatpush1.msra.mxu0 %v2356
  %2358 = vmatprep.subr.mxu0 0.0
  %v2359 = vand.u32 %v1543, 4294901760
  %2360 = vmatpush1.msra.mxu0 %v2359
  %2361 = vmatprep.subr.mxu0 0.0
  %v2362 = vand.u32 %v1544, 4294901760
  %2363 = vmatpush1.msra.mxu0 %v2362
  %2364 = vmatprep.subr.mxu0 0.0
  %v2365 = vand.u32 %v1545, 4294901760
  %2366 = vmatpush1.msra.mxu0 %v2365
  %2367 = vmatprep.subr.mxu0 0.0
  %v2368 = vand.u32 %v1546, 4294901760
  %2369 = vmatpush1.msra.mxu0 %v2368
  %2370 = vmatprep.subr.mxu0 0.0
  %v2371 = vand.u32 %v1547, 4294901760
  %2372 = vmatpush1.msra.mxu0 %v2371
  %2373 = vmatprep.subr.mxu0 0.0
  %v2374 = vand.u32 %v1571, 4294901760
  %2375 = vmatpush1.msra.mxu0 %v2374
  %2376 = vmatprep.subr.mxu0 0.0
  %2377 = vmatpush1.msra.mxu0 0.0
  %2378 = vmatprep.subr.mxu0 0.0
  %2379 = vmatpush1.msra.mxu0 0.0
  %2380 = vmatprep.subr.mxu0 0.0
  %2381 = vmatpush1.msra.mxu0 0.0
  %2382 = vmatprep.subr.mxu0 0.0
  %2383 = vmatpush1.msra.mxu0 0.0
  %2384 = vmatprep.subr.mxu0 0.0
  %2385 = vmatpush1.msra.mxu0 0.0
  %2386 = vmatprep.subr.mxu0 0.0
  %2387 = vmatpush1.msra.mxu0 0.0
  %2388 = vmatprep.subr.mxu0 0.0
  %2389 = vmatpush1.msra.mxu0 0.0
  %2390 = vmatprep.subr.mxu0 0.0
  %2391 = vmatpush1.msra.mxu0 0.0
  %2392 = vmatprep.subr.mxu0 0.0
  %2393 = vmatpush1.msra.mxu0 0.0
  %2394 = vmatprep.subr.mxu0 0.0
  %2395 = vmatpush1.msra.mxu0 0.0
  %2396 = vmatprep.subr.mxu0 0.0
  %2397 = vmatpush1.msra.mxu0 0.0
  %2398 = vmatprep.subr.mxu0 0.0
  %2399 = vmatpush1.msra.mxu0 0.0
  %2400 = vmatprep.subr.mxu0 0.0
  %2401 = vmatpush1.msra.mxu0 0.0
  %2402 = vmatprep.subr.mxu0 0.0
  %2403 = vmatpush1.msra.mxu0 0.0
  %2404 = vmatprep.subr.mxu0 0.0
  %2405 = vmatpush1.msra.mxu0 0.0
  %2406 = vmatprep.subr.mxu0 0.0
  %2407 = vmatpush1.msra.mxu0 0.0
  %2408 = vmatprep.subr.mxu0 0.0
  %2409 = vmatpush1.msra.mxu0 0.0
  %2410 = vmatprep.subr.mxu0 0.0
  %2411 = vmatpush1.msra.mxu0 0.0
  %2412 = vmatprep.subr.mxu0 0.0
  %2413 = vmatpush1.msra.mxu0 0.0
  %2414 = vmatprep.mubr.f32.mxu0 0.0
  %v2415 = vand.u32 %v2329, 4294901760
  %v2416 = vsub.f32 %v2329, %v2415
  %v2417 = vand.u32 %v2416, 4294901760
  %v2418 = vsub.f32 %v2416, %v2417
  %v2419 = vand.u32 %v2418, 4294901760
  %2420 = vmatmul.mubr.f32.gmra.mrb[0].mxu0 %v2419
  %v2421 = vpop.f32.mrb[0].mxu0
  %v2422 = vadd.f32 %v1554, %v2421
  %v2423 = vpop.f32.mrb[0].mxu0
  %2424 = vmatprep.mubr.f32.mxu0 0.0
  %v2425 = vand.u32 %v2331, 4294901760
  %v2426 = vsub.f32 %v2331, %v2425
  %v2427 = vand.u32 %v2426, 4294901760
  %v2428 = vsub.f32 %v2426, %v2427
  %v2429 = vand.u32 %v2428, 4294901760
  %2430 = vmatmul.mubr.f32.gmra.mrb[0].mxu0 %v2429
  %v2431 = vpop.f32.mrb[0].mxu0
  %v2432 = vadd.f32 %v1554, %v2431
  %v2433 = vpop.f32.mrb[0].mxu0
  %2434 = vmatprep.mubr.f32.mxu0 0.0
  %v2435 = vand.u32 %v2333, 4294901760
  %v2436 = vsub.f32 %v2333, %v2435
  %v2437 = vand.u32 %v2436, 4294901760
  %v2438 = vsub.f32 %v2436, %v2437
  %v2439 = vand.u32 %v2438, 4294901760
  %2440 = vmatmul.mubr.f32.gmra.mrb[0].mxu0 %v2439
  %v2441 = vpop.f32.mrb[0].mxu0
  %v2442 = vadd.f32 %v1554, %v2441
  %v2443 = vpop.f32.mrb[0].mxu0
  %2444 = vmatprep.mubr.f32.mxu0 0.0
  %v2445 = vand.u32 %v2335, 4294901760
  %v2446 = vsub.f32 %v2335, %v2445
  %v2447 = vand.u32 %v2446, 4294901760
  %v2448 = vsub.f32 %v2446, %v2447
  %v2449 = vand.u32 %v2448, 4294901760
  %2450 = vmatmul.mubr.f32.gmra.mrb[0].mxu0 %v2449
  %v2451 = vpop.f32.mrb[0].mxu0
  %v2452 = vadd.f32 %v1554, %v2451
  %v2453 = vpop.f32.mrb[0].mxu0
  %2454 = vdwg.mxu0
  %2455 = vmatprep.subr.mxu0 0.0
  %v2456 = vand.u32 %v1536, 4294901760
  %v2457 = vsub.f32 %v1536, %v2456
  %v2458 = vand.u32 %v2457, 4294901760
  %v2459 = vsub.f32 %v2457, %v2458
  %v2460 = vand.u32 %v2459, 4294901760
  %2461 = vmatpush1.msra.mxu0 %v2460
  %2462 = vmatprep.subr.mxu0 0.0
  %v2463 = vand.u32 %v1537, 4294901760
  %v2464 = vsub.f32 %v1537, %v2463
  %v2465 = vand.u32 %v2464, 4294901760
  %v2466 = vsub.f32 %v2464, %v2465
  %v2467 = vand.u32 %v2466, 4294901760
  %2468 = vmatpush1.msra.mxu0 %v2467
  %2469 = vmatprep.subr.mxu0 0.0
  %v2470 = vand.u32 %v1538, 4294901760
  %v2471 = vsub.f32 %v1538, %v2470
  %v2472 = vand.u32 %v2471, 4294901760
  %v2473 = vsub.f32 %v2471, %v2472
  %v2474 = vand.u32 %v2473, 4294901760
  %2475 = vmatpush1.msra.mxu0 %v2474
  %2476 = vmatprep.subr.mxu0 0.0
  %v2477 = vand.u32 %v1539, 4294901760
  %v2478 = vsub.f32 %v1539, %v2477
  %v2479 = vand.u32 %v2478, 4294901760
  %v2480 = vsub.f32 %v2478, %v2479
  %v2481 = vand.u32 %v2480, 4294901760
  %2482 = vmatpush1.msra.mxu0 %v2481
  %2483 = vmatprep.subr.mxu0 0.0
  %v2484 = vand.u32 %v1540, 4294901760
  %v2485 = vsub.f32 %v1540, %v2484
  %v2486 = vand.u32 %v2485, 4294901760
  %v2487 = vsub.f32 %v2485, %v2486
  %v2488 = vand.u32 %v2487, 4294901760
  %2489 = vmatpush1.msra.mxu0 %v2488
  %2490 = vmatprep.subr.mxu0 0.0
  %v2491 = vand.u32 %v1541, 4294901760
  %v2492 = vsub.f32 %v1541, %v2491
  %v2493 = vand.u32 %v2492, 4294901760
  %v2494 = vsub.f32 %v2492, %v2493
  %v2495 = vand.u32 %v2494, 4294901760
  %2496 = vmatpush1.msra.mxu0 %v2495
  %2497 = vmatprep.subr.mxu0 0.0
  %v2498 = vand.u32 %v1542, 4294901760
  %v2499 = vsub.f32 %v1542, %v2498
  %v2500 = vand.u32 %v2499, 4294901760
  %v2501 = vsub.f32 %v2499, %v2500
  %v2502 = vand.u32 %v2501, 4294901760
  %2503 = vmatpush1.msra.mxu0 %v2502
  %2504 = vmatprep.subr.mxu0 0.0
  %v2505 = vand.u32 %v1543, 4294901760
  %v2506 = vsub.f32 %v1543, %v2505
  %v2507 = vand.u32 %v2506, 4294901760
  %v2508 = vsub.f32 %v2506, %v2507
  %v2509 = vand.u32 %v2508, 4294901760
  %2510 = vmatpush1.msra.mxu0 %v2509
  %2511 = vmatprep.subr.mxu0 0.0
  %v2512 = vand.u32 %v1544, 4294901760
  %v2513 = vsub.f32 %v1544, %v2512
  %v2514 = vand.u32 %v2513, 4294901760
  %v2515 = vsub.f32 %v2513, %v2514
  %v2516 = vand.u32 %v2515, 4294901760
  %2517 = vmatpush1.msra.mxu0 %v2516
  %2518 = vmatprep.subr.mxu0 0.0
  %v2519 = vand.u32 %v1545, 4294901760
  %v2520 = vsub.f32 %v1545, %v2519
  %v2521 = vand.u32 %v2520, 4294901760
  %v2522 = vsub.f32 %v2520, %v2521
  %v2523 = vand.u32 %v2522, 4294901760
  %2524 = vmatpush1.msra.mxu0 %v2523
  %2525 = vmatprep.subr.mxu0 0.0
  %v2526 = vand.u32 %v1546, 4294901760
  %v2527 = vsub.f32 %v1546, %v2526
  %v2528 = vand.u32 %v2527, 4294901760
  %v2529 = vsub.f32 %v2527, %v2528
  %v2530 = vand.u32 %v2529, 4294901760
  %2531 = vmatpush1.msra.mxu0 %v2530
  %2532 = vmatprep.subr.mxu0 0.0
  %v2533 = vand.u32 %v1547, 4294901760
  %v2534 = vsub.f32 %v1547, %v2533
  %v2535 = vand.u32 %v2534, 4294901760
  %v2536 = vsub.f32 %v2534, %v2535
  %v2537 = vand.u32 %v2536, 4294901760
  %2538 = vmatpush1.msra.mxu0 %v2537
  %2539 = vmatprep.subr.mxu0 0.0
  %v2540 = vand.u32 %v1571, 4294901760
  %v2541 = vsub.f32 %v1571, %v2540
  %v2542 = vand.u32 %v2541, 4294901760
  %v2543 = vsub.f32 %v2541, %v2542
  %v2544 = vand.u32 %v2543, 4294901760
  %2545 = vmatpush1.msra.mxu0 %v2544
  %2546 = vmatprep.subr.mxu0 0.0
  %2547 = vmatpush1.msra.mxu0 0.0
  %2548 = vmatprep.subr.mxu0 0.0
  %2549 = vmatpush1.msra.mxu0 0.0
  %2550 = vmatprep.subr.mxu0 0.0
  %2551 = vmatpush1.msra.mxu0 0.0
  %2552 = vmatprep.subr.mxu0 0.0
  %2553 = vmatpush1.msra.mxu0 0.0
  %2554 = vmatprep.subr.mxu0 0.0
  %2555 = vmatpush1.msra.mxu0 0.0
  %2556 = vmatprep.subr.mxu0 0.0
  %2557 = vmatpush1.msra.mxu0 0.0
  %2558 = vmatprep.subr.mxu0 0.0
  %2559 = vmatpush1.msra.mxu0 0.0
  %2560 = vmatprep.subr.mxu0 0.0
  %2561 = vmatpush1.msra.mxu0 0.0
  %2562 = vmatprep.subr.mxu0 0.0
  %2563 = vmatpush1.msra.mxu0 0.0
  %2564 = vmatprep.subr.mxu0 0.0
  %2565 = vmatpush1.msra.mxu0 0.0
  %2566 = vmatprep.subr.mxu0 0.0
  %2567 = vmatpush1.msra.mxu0 0.0
  %2568 = vmatprep.subr.mxu0 0.0
  %2569 = vmatpush1.msra.mxu0 0.0
  %2570 = vmatprep.subr.mxu0 0.0
  %2571 = vmatpush1.msra.mxu0 0.0
  %2572 = vmatprep.subr.mxu0 0.0
  %2573 = vmatpush1.msra.mxu0 0.0
  %2574 = vmatprep.subr.mxu0 0.0
  %2575 = vmatpush1.msra.mxu0 0.0
  %2576 = vmatprep.subr.mxu0 0.0
  %2577 = vmatpush1.msra.mxu0 0.0
  %2578 = vmatprep.subr.mxu0 0.0
  %2579 = vmatpush1.msra.mxu0 0.0
  %2580 = vmatprep.subr.mxu0 0.0
  %2581 = vmatpush1.msra.mxu0 0.0
  %2582 = vmatprep.subr.mxu0 0.0
  %2583 = vmatpush1.msra.mxu0 0.0
  %2584 = vmatprep.mubr.f32.mxu0 0.0
  %v2585 = vand.u32 %v2329, 4294901760
  %2586 = vmatmul.mubr.f32.gmra.mrb[0].mxu0 %v2585
  %v2587 = vpop.f32.mrb[0].mxu0
  %v2588 = vadd.f32 %v2422, %v2587
  %v2589 = vpop.f32.mrb[0].mxu0
  %2590 = vmatprep.mubr.f32.mxu0 0.0
  %v2591 = vand.u32 %v2331, 4294901760
  %2592 = vmatmul.mubr.f32.gmra.mrb[0].mxu0 %v2591
  %v2593 = vpop.f32.mrb[0].mxu0
  %v2594 = vadd.f32 %v2432, %v2593
  %v2595 = vpop.f32.mrb[0].mxu0
  %2596 = vmatprep.mubr.f32.mxu0 0.0
  %v2597 = vand.u32 %v2333, 4294901760
  %2598 = vmatmul.mubr.f32.gmra.mrb[0].mxu0 %v2597
  %v2599 = vpop.f32.mrb[0].mxu0
  %v2600 = vadd.f32 %v2442, %v2599
  %v2601 = vpop.f32.mrb[0].mxu0
  %2602 = vmatprep.mubr.f32.mxu0 0.0
  %v2603 = vand.u32 %v2335, 4294901760
  %2604 = vmatmul.mubr.f32.gmra.mrb[0].mxu0 %v2603
  %v2605 = vpop.f32.mrb[0].mxu0
  %v2606 = vadd.f32 %v2452, %v2605
  %v2607 = vpop.f32.mrb[0].mxu0
  %2608 = vdwg.mxu0
  %2609 = vmatprep.subr.mxu0 0.0
  %v2610 = vand.u32 %v1536, 4294901760
  %v2611 = vsub.f32 %v1536, %v2610
  %2612 = vmatpush1.msra.mxu0 %v2611
  %2613 = vmatprep.subr.mxu0 0.0
  %v2614 = vand.u32 %v1537, 4294901760
  %v2615 = vsub.f32 %v1537, %v2614
  %2616 = vmatpush1.msra.mxu0 %v2615
  %2617 = vmatprep.subr.mxu0 0.0
  %v2618 = vand.u32 %v1538, 4294901760
  %v2619 = vsub.f32 %v1538, %v2618
  %2620 = vmatpush1.msra.mxu0 %v2619
  %2621 = vmatprep.subr.mxu0 0.0
  %v2622 = vand.u32 %v1539, 4294901760
  %v2623 = vsub.f32 %v1539, %v2622
  %2624 = vmatpush1.msra.mxu0 %v2623
  %2625 = vmatprep.subr.mxu0 0.0
  %v2626 = vand.u32 %v1540, 4294901760
  %v2627 = vsub.f32 %v1540, %v2626
  %2628 = vmatpush1.msra.mxu0 %v2627
  %2629 = vmatprep.subr.mxu0 0.0
  %v2630 = vand.u32 %v1541, 4294901760
  %v2631 = vsub.f32 %v1541, %v2630
  %2632 = vmatpush1.msra.mxu0 %v2631
  %2633 = vmatprep.subr.mxu0 0.0
  %v2634 = vand.u32 %v1542, 4294901760
  %v2635 = vsub.f32 %v1542, %v2634
  %2636 = vmatpush1.msra.mxu0 %v2635
  %2637 = vmatprep.subr.mxu0 0.0
  %v2638 = vand.u32 %v1543, 4294901760
  %v2639 = vsub.f32 %v1543, %v2638
  %2640 = vmatpush1.msra.mxu0 %v2639
  %2641 = vmatprep.subr.mxu0 0.0
  %v2642 = vand.u32 %v1544, 4294901760
  %v2643 = vsub.f32 %v1544, %v2642
  %2644 = vmatpush1.msra.mxu0 %v2643
  %2645 = vmatprep.subr.mxu0 0.0
  %v2646 = vand.u32 %v1545, 4294901760
  %v2647 = vsub.f32 %v1545, %v2646
  %2648 = vmatpush1.msra.mxu0 %v2647
  %2649 = vmatprep.subr.mxu0 0.0
  %v2650 = vand.u32 %v1546, 4294901760
  %v2651 = vsub.f32 %v1546, %v2650
  %2652 = vmatpush1.msra.mxu0 %v2651
  %2653 = vmatprep.subr.mxu0 0.0
  %v2654 = vand.u32 %v1547, 4294901760
  %v2655 = vsub.f32 %v1547, %v2654
  %2656 = vmatpush1.msra.mxu0 %v2655
  %2657 = vmatprep.subr.mxu0 0.0
  %v2658 = vand.u32 %v1571, 4294901760
  %v2659 = vsub.f32 %v1571, %v2658
  %2660 = vmatpush1.msra.mxu0 %v2659
  %2661 = vmatprep.subr.mxu0 0.0
  %2662 = vmatpush1.msra.mxu0 0.0
  %2663 = vmatprep.subr.mxu0 0.0
  %2664 = vmatpush1.msra.mxu0 0.0
  %2665 = vmatprep.subr.mxu0 0.0
  %2666 = vmatpush1.msra.mxu0 0.0
  %2667 = vmatprep.subr.mxu0 0.0
  %2668 = vmatpush1.msra.mxu0 0.0
  %2669 = vmatprep.subr.mxu0 0.0
  %2670 = vmatpush1.msra.mxu0 0.0
  %2671 = vmatprep.subr.mxu0 0.0
  %2672 = vmatpush1.msra.mxu0 0.0
  %2673 = vmatprep.subr.mxu0 0.0
  %2674 = vmatpush1.msra.mxu0 0.0
  %2675 = vmatprep.subr.mxu0 0.0
  %2676 = vmatpush1.msra.mxu0 0.0
  %2677 = vmatprep.subr.mxu0 0.0
  %2678 = vmatpush1.msra.mxu0 0.0
  %2679 = vmatprep.subr.mxu0 0.0
  %2680 = vmatpush1.msra.mxu0 0.0
  %2681 = vmatprep.subr.mxu0 0.0
  %2682 = vmatpush1.msra.mxu0 0.0
  %2683 = vmatprep.subr.mxu0 0.0
  %2684 = vmatpush1.msra.mxu0 0.0
  %2685 = vmatprep.subr.mxu0 0.0
  %2686 = vmatpush1.msra.mxu0 0.0
  %2687 = vmatprep.subr.mxu0 0.0
  %2688 = vmatpush1.msra.mxu0 0.0
  %2689 = vmatprep.subr.mxu0 0.0
  %2690 = vmatpush1.msra.mxu0 0.0
  %2691 = vmatprep.subr.mxu0 0.0
  %2692 = vmatpush1.msra.mxu0 0.0
  %2693 = vmatprep.subr.mxu0 0.0
  %2694 = vmatpush1.msra.mxu0 0.0
  %2695 = vmatprep.subr.mxu0 0.0
  %2696 = vmatpush1.msra.mxu0 0.0
  %2697 = vmatprep.subr.mxu0 0.0
  %2698 = vmatpush1.msra.mxu0 0.0
  %2699 = vmatprep.mubr.f32.mxu0 0.0
  %v2700 = vand.u32 %v2329, 4294901760
  %v2701 = vsub.f32 %v2329, %v2700
  %2702 = vmatmul.mubr.f32.gmra.mrb[0].mxu0 %v2701
  %v2703 = vpop.f32.mrb[0].mxu0
  %v2704 = vadd.f32 %v2588, %v2703
  %v2705 = vpop.f32.mrb[0].mxu0
  %2706 = vmatprep.mubr.f32.mxu0 0.0
  %v2707 = vand.u32 %v2331, 4294901760
  %v2708 = vsub.f32 %v2331, %v2707
  %2709 = vmatmul.mubr.f32.gmra.mrb[0].mxu0 %v2708
  %v2710 = vpop.f32.mrb[0].mxu0
  %v2711 = vadd.f32 %v2594, %v2710
  %v2712 = vpop.f32.mrb[0].mxu0
  %2713 = vmatprep.mubr.f32.mxu0 0.0
  %v2714 = vand.u32 %v2333, 4294901760
  %v2715 = vsub.f32 %v2333, %v2714
  %2716 = vmatmul.mubr.f32.gmra.mrb[0].mxu0 %v2715
  %v2717 = vpop.f32.mrb[0].mxu0
  %v2718 = vadd.f32 %v2600, %v2717
  %v2719 = vpop.f32.mrb[0].mxu0
  %2720 = vmatprep.mubr.f32.mxu0 0.0
  %v2721 = vand.u32 %v2335, 4294901760
  %v2722 = vsub.f32 %v2335, %v2721
  %2723 = vmatmul.mubr.f32.gmra.mrb[0].mxu0 %v2722
  %v2724 = vpop.f32.mrb[0].mxu0
  %v2725 = vadd.f32 %v2606, %v2724
  %v2726 = vpop.f32.mrb[0].mxu0
  %2727 = vdwg.mxu0
  %2728 = vmatprep.subr.mxu0 0.0
  %v2729 = vand.u32 %v1536, 4294901760
  %2730 = vmatpush1.msra.mxu0 %v2729
  %2731 = vmatprep.subr.mxu0 0.0
  %v2732 = vand.u32 %v1537, 4294901760
  %2733 = vmatpush1.msra.mxu0 %v2732
  %2734 = vmatprep.subr.mxu0 0.0
  %v2735 = vand.u32 %v1538, 4294901760
  %2736 = vmatpush1.msra.mxu0 %v2735
  %2737 = vmatprep.subr.mxu0 0.0
  %v2738 = vand.u32 %v1539, 4294901760
  %2739 = vmatpush1.msra.mxu0 %v2738
  %2740 = vmatprep.subr.mxu0 0.0
  %v2741 = vand.u32 %v1540, 4294901760
  %2742 = vmatpush1.msra.mxu0 %v2741
  %2743 = vmatprep.subr.mxu0 0.0
  %v2744 = vand.u32 %v1541, 4294901760
  %2745 = vmatpush1.msra.mxu0 %v2744
  %2746 = vmatprep.subr.mxu0 0.0
  %v2747 = vand.u32 %v1542, 4294901760
  %2748 = vmatpush1.msra.mxu0 %v2747
  %2749 = vmatprep.subr.mxu0 0.0
  %v2750 = vand.u32 %v1543, 4294901760
  %2751 = vmatpush1.msra.mxu0 %v2750
  %2752 = vmatprep.subr.mxu0 0.0
  %v2753 = vand.u32 %v1544, 4294901760
  %2754 = vmatpush1.msra.mxu0 %v2753
  %2755 = vmatprep.subr.mxu0 0.0
  %v2756 = vand.u32 %v1545, 4294901760
  %2757 = vmatpush1.msra.mxu0 %v2756
  %2758 = vmatprep.subr.mxu0 0.0
  %v2759 = vand.u32 %v1546, 4294901760
  %2760 = vmatpush1.msra.mxu0 %v2759
  %2761 = vmatprep.subr.mxu0 0.0
  %v2762 = vand.u32 %v1547, 4294901760
  %2763 = vmatpush1.msra.mxu0 %v2762
  %2764 = vmatprep.subr.mxu0 0.0
  %v2765 = vand.u32 %v1571, 4294901760
  %2766 = vmatpush1.msra.mxu0 %v2765
  %2767 = vmatprep.subr.mxu0 0.0
  %2768 = vmatpush1.msra.mxu0 0.0
  %2769 = vmatprep.subr.mxu0 0.0
  %2770 = vmatpush1.msra.mxu0 0.0
  %2771 = vmatprep.subr.mxu0 0.0
  %2772 = vmatpush1.msra.mxu0 0.0
  %2773 = vmatprep.subr.mxu0 0.0
  %2774 = vmatpush1.msra.mxu0 0.0
  %2775 = vmatprep.subr.mxu0 0.0
  %2776 = vmatpush1.msra.mxu0 0.0
  %2777 = vmatprep.subr.mxu0 0.0
  %2778 = vmatpush1.msra.mxu0 0.0
  %2779 = vmatprep.subr.mxu0 0.0
  %2780 = vmatpush1.msra.mxu0 0.0
  %2781 = vmatprep.subr.mxu0 0.0
  %2782 = vmatpush1.msra.mxu0 0.0
  %2783 = vmatprep.subr.mxu0 0.0
  %2784 = vmatpush1.msra.mxu0 0.0
  %2785 = vmatprep.subr.mxu0 0.0
  %2786 = vmatpush1.msra.mxu0 0.0
  %2787 = vmatprep.subr.mxu0 0.0
  %2788 = vmatpush1.msra.mxu0 0.0
  %2789 = vmatprep.subr.mxu0 0.0
  %2790 = vmatpush1.msra.mxu0 0.0
  %2791 = vmatprep.subr.mxu0 0.0
  %2792 = vmatpush1.msra.mxu0 0.0
  %2793 = vmatprep.subr.mxu0 0.0
  %2794 = vmatpush1.msra.mxu0 0.0
  %2795 = vmatprep.subr.mxu0 0.0
  %2796 = vmatpush1.msra.mxu0 0.0
  %2797 = vmatprep.subr.mxu0 0.0
  %2798 = vmatpush1.msra.mxu0 0.0
  %2799 = vmatprep.subr.mxu0 0.0
  %2800 = vmatpush1.msra.mxu0 0.0
  %2801 = vmatprep.subr.mxu0 0.0
  %2802 = vmatpush1.msra.mxu0 0.0
  %2803 = vmatprep.subr.mxu0 0.0
  %2804 = vmatpush1.msra.mxu0 0.0
  %2805 = vmatprep.mubr.f32.mxu0 0.0
  %v2806 = vand.u32 %v2329, 4294901760
  %v2807 = vsub.f32 %v2329, %v2806
  %v2808 = vand.u32 %v2807, 4294901760
  %2809 = vmatmul.mubr.f32.gmra.mrb[0].mxu0 %v2808
  %v2810 = vpop.f32.mrb[0].mxu0
  %v2811 = vadd.f32 %v2704, %v2810
  %v2812 = vpop.f32.mrb[0].mxu0
  %2813 = vmatprep.mubr.f32.mxu0 0.0
  %v2814 = vand.u32 %v2331, 4294901760
  %v2815 = vsub.f32 %v2331, %v2814
  %v2816 = vand.u32 %v2815, 4294901760
  %2817 = vmatmul.mubr.f32.gmra.mrb[0].mxu0 %v2816
  %v2818 = vpop.f32.mrb[0].mxu0
  %v2819 = vadd.f32 %v2711, %v2818
  %v2820 = vpop.f32.mrb[0].mxu0
  %2821 = vmatprep.mubr.f32.mxu0 0.0
  %v2822 = vand.u32 %v2333, 4294901760
  %v2823 = vsub.f32 %v2333, %v2822
  %v2824 = vand.u32 %v2823, 4294901760
  %2825 = vmatmul.mubr.f32.gmra.mrb[0].mxu0 %v2824
  %v2826 = vpop.f32.mrb[0].mxu0
  %v2827 = vadd.f32 %v2718, %v2826
  %v2828 = vpop.f32.mrb[0].mxu0
  %2829 = vmatprep.mubr.f32.mxu0 0.0
  %v2830 = vand.u32 %v2335, 4294901760
  %v2831 = vsub.f32 %v2335, %v2830
  %v2832 = vand.u32 %v2831, 4294901760
  %2833 = vmatmul.mubr.f32.gmra.mrb[0].mxu0 %v2832
  %v2834 = vpop.f32.mrb[0].mxu0
  %v2835 = vadd.f32 %v2725, %v2834
  %v2836 = vpop.f32.mrb[0].mxu0
  %2837 = vdwg.mxu0
  %2838 = vmatprep.subr.mxu0 0.0
  %v2839 = vand.u32 %v1536, 4294901760
  %v2840 = vsub.f32 %v1536, %v2839
  %v2841 = vand.u32 %v2840, 4294901760
  %2842 = vmatpush1.msra.mxu0 %v2841
  %2843 = vmatprep.subr.mxu0 0.0
  %v2844 = vand.u32 %v1537, 4294901760
  %v2845 = vsub.f32 %v1537, %v2844
  %v2846 = vand.u32 %v2845, 4294901760
  %2847 = vmatpush1.msra.mxu0 %v2846
  %2848 = vmatprep.subr.mxu0 0.0
  %v2849 = vand.u32 %v1538, 4294901760
  %v2850 = vsub.f32 %v1538, %v2849
  %v2851 = vand.u32 %v2850, 4294901760
  %2852 = vmatpush1.msra.mxu0 %v2851
  %2853 = vmatprep.subr.mxu0 0.0
  %v2854 = vand.u32 %v1539, 4294901760
  %v2855 = vsub.f32 %v1539, %v2854
  %v2856 = vand.u32 %v2855, 4294901760
  %2857 = vmatpush1.msra.mxu0 %v2856
  %2858 = vmatprep.subr.mxu0 0.0
  %v2859 = vand.u32 %v1540, 4294901760
  %v2860 = vsub.f32 %v1540, %v2859
  %v2861 = vand.u32 %v2860, 4294901760
  %2862 = vmatpush1.msra.mxu0 %v2861
  %2863 = vmatprep.subr.mxu0 0.0
  %v2864 = vand.u32 %v1541, 4294901760
  %v2865 = vsub.f32 %v1541, %v2864
  %v2866 = vand.u32 %v2865, 4294901760
  %2867 = vmatpush1.msra.mxu0 %v2866
  %2868 = vmatprep.subr.mxu0 0.0
  %v2869 = vand.u32 %v1542, 4294901760
  %v2870 = vsub.f32 %v1542, %v2869
  %v2871 = vand.u32 %v2870, 4294901760
  %2872 = vmatpush1.msra.mxu0 %v2871
  %2873 = vmatprep.subr.mxu0 0.0
  %v2874 = vand.u32 %v1543, 4294901760
  %v2875 = vsub.f32 %v1543, %v2874
  %v2876 = vand.u32 %v2875, 4294901760
  %2877 = vmatpush1.msra.mxu0 %v2876
  %2878 = vmatprep.subr.mxu0 0.0
  %v2879 = vand.u32 %v1544, 4294901760
  %v2880 = vsub.f32 %v1544, %v2879
  %v2881 = vand.u32 %v2880, 4294901760
  %2882 = vmatpush1.msra.mxu0 %v2881
  %2883 = vmatprep.subr.mxu0 0.0
  %v2884 = vand.u32 %v1545, 4294901760
  %v2885 = vsub.f32 %v1545, %v2884
  %v2886 = vand.u32 %v2885, 4294901760
  %2887 = vmatpush1.msra.mxu0 %v2886
  %2888 = vmatprep.subr.mxu0 0.0
  %v2889 = vand.u32 %v1546, 4294901760
  %v2890 = vsub.f32 %v1546, %v2889
  %v2891 = vand.u32 %v2890, 4294901760
  %2892 = vmatpush1.msra.mxu0 %v2891
  %2893 = vmatprep.subr.mxu0 0.0
  %v2894 = vand.u32 %v1547, 4294901760
  %v2895 = vsub.f32 %v1547, %v2894
  %v2896 = vand.u32 %v2895, 4294901760
  %2897 = vmatpush1.msra.mxu0 %v2896
  %2898 = vmatprep.subr.mxu0 0.0
  %v2899 = vand.u32 %v1571, 4294901760
  %v2900 = vsub.f32 %v1571, %v2899
  %v2901 = vand.u32 %v2900, 4294901760
  %2902 = vmatpush1.msra.mxu0 %v2901
  %2903 = vmatprep.subr.mxu0 0.0
  %2904 = vmatpush1.msra.mxu0 0.0
  %2905 = vmatprep.subr.mxu0 0.0
  %2906 = vmatpush1.msra.mxu0 0.0
  %2907 = vmatprep.subr.mxu0 0.0
  %2908 = vmatpush1.msra.mxu0 0.0
  %2909 = vmatprep.subr.mxu0 0.0
  %2910 = vmatpush1.msra.mxu0 0.0
  %2911 = vmatprep.subr.mxu0 0.0
  %2912 = vmatpush1.msra.mxu0 0.0
  %2913 = vmatprep.subr.mxu0 0.0
  %2914 = vmatpush1.msra.mxu0 0.0
  %2915 = vmatprep.subr.mxu0 0.0
  %2916 = vmatpush1.msra.mxu0 0.0
  %2917 = vmatprep.subr.mxu0 0.0
  %2918 = vmatpush1.msra.mxu0 0.0
  %2919 = vmatprep.subr.mxu0 0.0
  %2920 = vmatpush1.msra.mxu0 0.0
  %2921 = vmatprep.subr.mxu0 0.0
  %2922 = vmatpush1.msra.mxu0 0.0
  %2923 = vmatprep.subr.mxu0 0.0
  %2924 = vmatpush1.msra.mxu0 0.0
  %2925 = vmatprep.subr.mxu0 0.0
  %2926 = vmatpush1.msra.mxu0 0.0
  %2927 = vmatprep.subr.mxu0 0.0
  %2928 = vmatpush1.msra.mxu0 0.0
  %2929 = vmatprep.subr.mxu0 0.0
  %2930 = vmatpush1.msra.mxu0 0.0
  %2931 = vmatprep.subr.mxu0 0.0
  %2932 = vmatpush1.msra.mxu0 0.0
  %2933 = vmatprep.subr.mxu0 0.0
  %2934 = vmatpush1.msra.mxu0 0.0
  %2935 = vmatprep.subr.mxu0 0.0
  %2936 = vmatpush1.msra.mxu0 0.0
  %2937 = vmatprep.subr.mxu0 0.0
  %2938 = vmatpush1.msra.mxu0 0.0
  %2939 = vmatprep.subr.mxu0 0.0
  %2940 = vmatpush1.msra.mxu0 0.0
  %2941 = vmatprep.mubr.f32.mxu0 0.0
  %v2942 = vand.u32 %v2329, 4294901760
  %2943 = vmatmul.mubr.f32.gmra.mrb[0].mxu0 %v2942
  %v2944 = vpop.f32.mrb[0].mxu0
  %v2945 = vadd.f32 %v2811, %v2944
  %v2946 = vpop.f32.mrb[0].mxu0
  %2947 = vmatprep.mubr.f32.mxu0 0.0
  %v2948 = vand.u32 %v2331, 4294901760
  %2949 = vmatmul.mubr.f32.gmra.mrb[0].mxu0 %v2948
  %v2950 = vpop.f32.mrb[0].mxu0
  %v2951 = vadd.f32 %v2819, %v2950
  %v2952 = vpop.f32.mrb[0].mxu0
  %2953 = vmatprep.mubr.f32.mxu0 0.0
  %v2954 = vand.u32 %v2333, 4294901760
  %2955 = vmatmul.mubr.f32.gmra.mrb[0].mxu0 %v2954
  %v2956 = vpop.f32.mrb[0].mxu0
  %v2957 = vadd.f32 %v2827, %v2956
  %v2958 = vpop.f32.mrb[0].mxu0
  %2959 = vmatprep.mubr.f32.mxu0 0.0
  %v2960 = vand.u32 %v2335, 4294901760
  %2961 = vmatmul.mubr.f32.gmra.mrb[0].mxu0 %v2960
  %v2962 = vpop.f32.mrb[0].mxu0
  %v2963 = vadd.f32 %v2835, %v2962
  %v2964 = vpop.f32.mrb[0].mxu0
  %2965 = vdwg.mxu0
  %2966 = vmatprep.subr.mxu0 0.0
  %v2967 = vand.u32 %v1536, 4294901760
  %2968 = vmatpush1.msra.mxu0 %v2967
  %2969 = vmatprep.subr.mxu0 0.0
  %v2970 = vand.u32 %v1537, 4294901760
  %2971 = vmatpush1.msra.mxu0 %v2970
  %2972 = vmatprep.subr.mxu0 0.0
  %v2973 = vand.u32 %v1538, 4294901760
  %2974 = vmatpush1.msra.mxu0 %v2973
  %2975 = vmatprep.subr.mxu0 0.0
  %v2976 = vand.u32 %v1539, 4294901760
  %2977 = vmatpush1.msra.mxu0 %v2976
  %2978 = vmatprep.subr.mxu0 0.0
  %v2979 = vand.u32 %v1540, 4294901760
  %2980 = vmatpush1.msra.mxu0 %v2979
  %2981 = vmatprep.subr.mxu0 0.0
  %v2982 = vand.u32 %v1541, 4294901760
  %2983 = vmatpush1.msra.mxu0 %v2982
  %2984 = vmatprep.subr.mxu0 0.0
  %v2985 = vand.u32 %v1542, 4294901760
  %2986 = vmatpush1.msra.mxu0 %v2985
  %2987 = vmatprep.subr.mxu0 0.0
  %v2988 = vand.u32 %v1543, 4294901760
  %2989 = vmatpush1.msra.mxu0 %v2988
  %2990 = vmatprep.subr.mxu0 0.0
  %v2991 = vand.u32 %v1544, 4294901760
  %2992 = vmatpush1.msra.mxu0 %v2991
  %2993 = vmatprep.subr.mxu0 0.0
  %v2994 = vand.u32 %v1545, 4294901760
  %2995 = vmatpush1.msra.mxu0 %v2994
  %2996 = vmatprep.subr.mxu0 0.0
  %v2997 = vand.u32 %v1546, 4294901760
  %2998 = vmatpush1.msra.mxu0 %v2997
  %2999 = vmatprep.subr.mxu0 0.0
  %v3000 = vand.u32 %v1547, 4294901760
  %3001 = vmatpush1.msra.mxu0 %v3000
  %3002 = vmatprep.subr.mxu0 0.0
  %v3003 = vand.u32 %v1571, 4294901760
  %3004 = vmatpush1.msra.mxu0 %v3003
  %3005 = vmatprep.subr.mxu0 0.0
  %3006 = vmatpush1.msra.mxu0 0.0
  %3007 = vmatprep.subr.mxu0 0.0
  %3008 = vmatpush1.msra.mxu0 0.0
  %3009 = vmatprep.subr.mxu0 0.0
  %3010 = vmatpush1.msra.mxu0 0.0
  %3011 = vmatprep.subr.mxu0 0.0
  %3012 = vmatpush1.msra.mxu0 0.0
  %3013 = vmatprep.subr.mxu0 0.0
  %3014 = vmatpush1.msra.mxu0 0.0
  %3015 = vmatprep.subr.mxu0 0.0
  %3016 = vmatpush1.msra.mxu0 0.0
  %3017 = vmatprep.subr.mxu0 0.0
  %3018 = vmatpush1.msra.mxu0 0.0
  %3019 = vmatprep.subr.mxu0 0.0
  %3020 = vmatpush1.msra.mxu0 0.0
  %3021 = vmatprep.subr.mxu0 0.0
  %3022 = vmatpush1.msra.mxu0 0.0
  %3023 = vmatprep.subr.mxu0 0.0
  %3024 = vmatpush1.msra.mxu0 0.0
  %3025 = vmatprep.subr.mxu0 0.0
  %3026 = vmatpush1.msra.mxu0 0.0
  %3027 = vmatprep.subr.mxu0 0.0
  %3028 = vmatpush1.msra.mxu0 0.0
  %3029 = vmatprep.subr.mxu0 0.0
  %3030 = vmatpush1.msra.mxu0 0.0
  %3031 = vmatprep.subr.mxu0 0.0
  %3032 = vmatpush1.msra.mxu0 0.0
  %3033 = vmatprep.subr.mxu0 0.0
  %3034 = vmatpush1.msra.mxu0 0.0
  %3035 = vmatprep.subr.mxu0 0.0
  %3036 = vmatpush1.msra.mxu0 0.0
  %3037 = vmatprep.subr.mxu0 0.0
  %3038 = vmatpush1.msra.mxu0 0.0
  %3039 = vmatprep.subr.mxu0 0.0
  %3040 = vmatpush1.msra.mxu0 0.0
  %3041 = vmatprep.subr.mxu0 0.0
  %3042 = vmatpush1.msra.mxu0 0.0
  %3043 = vmatprep.mubr.f32.mxu0 0.0
  %v3044 = vand.u32 %v2329, 4294901760
  %3045 = vmatmul.mubr.f32.gmra.mrb[0].mxu0 %v3044
  %v3046 = vpop.f32.mrb[0].mxu0
  %v3047 = vadd.f32 %v2945, %v3046
  %v3048 = vpop.f32.mrb[0].mxu0
  %3049 = vmatprep.mubr.f32.mxu0 0.0
  %v3050 = vand.u32 %v2331, 4294901760
  %3051 = vmatmul.mubr.f32.gmra.mrb[0].mxu0 %v3050
  %v3052 = vpop.f32.mrb[0].mxu0
  %v3053 = vadd.f32 %v2951, %v3052
  %v3054 = vpop.f32.mrb[0].mxu0
  %3055 = vmatprep.mubr.f32.mxu0 0.0
  %v3056 = vand.u32 %v2333, 4294901760
  %3057 = vmatmul.mubr.f32.gmra.mrb[0].mxu0 %v3056
  %v3058 = vpop.f32.mrb[0].mxu0
  %v3059 = vadd.f32 %v2957, %v3058
  %v3060 = vpop.f32.mrb[0].mxu0
  %3061 = vmatprep.mubr.f32.mxu0 0.0
  %v3062 = vand.u32 %v2335, 4294901760
  %3063 = vmatmul.mubr.f32.gmra.mrb[0].mxu0 %v3062
  %v3064 = vpop.f32.mrb[0].mxu0
  %v3065 = vadd.f32 %v2963, %v3064
  %v3066 = vpop.f32.mrb[0].mxu0
  %3067 = vdwg.mxu0
  %3072 = vrot.lane.b32.xlu0 %v3047, 25
  %v3073 = vpop.permute.xlu0 %3072
  %3074 = vrot.lane.b32.xlu0 %v3053, 25
  %v3075 = vpop.permute.xlu0 %3074
  %3076 = vrot.lane.b32.xlu0 %v3059, 25
  %v3077 = vpop.permute.xlu0 %3076
  %3078 = vrot.lane.b32.xlu0 %v3065, 25
  %v3079 = vpop.permute.xlu0 %3078
  %vm3084 = vcmask 203776
  %v3085 = vsel %vm3084, %v2283, %v3073
  %v3086 = vsel %vm3084, %v2289, %v3075
  %v3087 = vsel %vm3084, %v2295, %v3077
  %v3088 = vsel %vm3084, %v2301, %v3079
  %vm3089 = vcmask 408576
  %v3090 = vsel %vm3089, %v3085, 0.0
  %v3091 = vsel %vm3089, %v3086, 0.0
  %v3092 = vsel %vm3089, %v3087, 0.0
  %v3093 = vsel %vm3089, %v3088, 0.0
  %3094 = vst [vmem:[%s5] sm:$0xff] %v3090
  %3095 = vst [vmem:[%s5 + $0x8] sm:$0xff] %v3091
  %3096 = vst [vmem:[%s5 + $0x10] sm:$0xff] %v3092
  %3097 = vst [vmem:[%s5 + $0x18] sm:$0xff] %v3093
  // Predicated region
  $region22: #{encoder_forward.1} parent=0 // pred_check
    _
  $region23: #{encoder_forward.1} parent=0 // pred_check_branch
    %3099 = sbr.rel (0) target = $region25
  $region24: #{encoder_forward.1} parent=0 // pred_region
    _
  $region25: #{encoder_forward.1} parent=0 // pred_fallthru
    _
  // Predicated region
  $region26: #{encoder_forward.1} parent=0 // pred_check
    _
  $region27: #{encoder_forward.1} parent=0 // pred_check_branch
    %3101 = sbr.rel (0) target = $region29
  $region28: #{encoder_forward.1} parent=0 // pred_region
    _
  $region29: #{encoder_forward.1} parent=0 // pred_fallthru
    _

</llo_original>
